<compile_context>
chip_gen: v7x
topology: tpu7x:2x2x1
jax: 0.10.0
libtpu: 0.0.40
codegen_flags: <defaults>
</compile_context>

<pallas_src>
import jax
import jax.numpy as jnp
from jax.experimental import pallas as pl
from jax.experimental.pallas import tpu as pltpu

_LANE = 128


def _round_up(v, m):
    return ((v + m - 1) // m) * m


def _parsing_head_kernel(
    xq_ref, xf_ref, mask_ref,
    wad_ref, bad_ref, wah_ref, bah_ref,
    wrd_ref, brd_ref, wrh_ref, brh_ref,
    warc_ref, wrel_ref,
    sarc_ref, srel_ref,
    karc_sc, krel_sc,
):
    qi = pl.program_id(1)
    S = xf_ref.shape[1]
    L = wrel_ref.shape[0]

    def mlp(x_bf16, w_ref, b_ref):
        # supar MLP: Linear -> LeakyReLU(0.1) -> SharedDropout (identity in eval).
        y = jnp.dot(x_bf16, w_ref[...], preferred_element_type=jnp.float32) + b_ref[...]
        return jnp.where(y > 0, y, 0.1 * y)

    # ---- head ("h") side: compute once per batch element, cache in VMEM scratch.
    @pl.when(qi == 0)
    def _build_head_side():
        xf = xf_ref[0]                                               # [S, H] bf16
        arc_h = mlp(xf, wah_ref, bah_ref)                            # [S, Ap]  f32
        rel_h1 = mlp(xf, wrh_ref, brh_ref)                           # [S, R1p] f32 (incl. ones col)
        arc_h_t = arc_h.T.astype(jnp.bfloat16)                       # [Ap, S]
        rel_h1_t = rel_h1.T.astype(jnp.bfloat16)                     # [R1p, S]  (transpose hoisted, done once)
        # K_arc = W_arc @ arc_h.T
        karc_sc[...] = jnp.dot(
            warc_ref[...], arc_h_t,
            preferred_element_type=jnp.float32).astype(jnp.bfloat16)
        # K_rel[:, l*S:(l+1)*S] = W_rel[l] @ rel_h1.T
        # (static loop, one matmul + one dense static-offset store per label; the
        #  per-query-tile work below is batched over labels into a single matmul)
        for l in range(L):
            krel_sc[:, l * S:(l + 1) * S] = jnp.dot(
                wrel_ref[l], rel_h1_t,
                preferred_element_type=jnp.float32).astype(jnp.bfloat16)

    # ---- dependent ("d") side for this query tile.
    xq = xq_ref[0]                                                   # [TQ, H] bf16
    arc_d1 = mlp(xq, wad_ref, bad_ref).astype(jnp.bfloat16)          # [TQ, A1p] (incl. ones col)
    rel_d1 = mlp(xq, wrd_ref, brd_ref).astype(jnp.bfloat16)          # [TQ, R1p] (incl. ones col)

    # arc scores + masked_fill_(~mask.unsqueeze(1), -inf)
    s_arc = jnp.dot(arc_d1, karc_sc[...], preferred_element_type=jnp.float32)     # [TQ, S]
    m = mask_ref[0]                                                  # [1, S]
    sarc_ref[0] = jnp.where(m > 0, s_arc, -jnp.inf)

    # rel scores, label-major flattened last dim: out[x, l*S + y] = rd1[x] @ W_l @ rh1[y]
    srel_ref[0] = jnp.dot(rel_d1, krel_sc[...], preferred_element_type=jnp.float32)  # [TQ, L*S]


def biaffine_parsing_head_forward(sequence_output, mask_bool, params, *, rel_layout="bssl"):
    """Returns (s_arc [B,S,S], s_rel) matching the PyTorch forward.

    rel_layout: "bssl" (default; matches PyTorch .permute(0, 2, 3, 1)) or "bsls"
    to skip the final last-two-dim swap and return s_rel as [B, S, L, S].
    """
    B, S, H = sequence_output.shape
    A = params["w_arc_d"].shape[0]      # arc_space
    R = params["w_rel_d"].shape[0]      # label_space
    L = params["w_rel_attn"].shape[0]   # num_ud_labels

    A1p = _round_up(A + 1, _LANE)       # arc dep side incl. bias column
    Ap = _round_up(A, _LANE)            # arc head side (bias_y=False)
    R1p = _round_up(R + 1, _LANE)       # rel dep/head side incl. bias column

    bf16, f32 = jnp.bfloat16, jnp.float32

    def pad_linear(w, b, width, bias_col=None):
        # PyTorch Linear stores [out, in]; transpose so the kernel does x @ W, pad
        # the output dim to `width`, and optionally fold the biaffine "ones" column
        # in as (zero weight column, bias 1.0) -- LeakyReLU(1) == 1, exact.
        out = w.shape[0]
        wp = jnp.zeros((H, width), bf16).at[:, :out].set(w.T.astype(bf16))
        bp = jnp.zeros((1, width), f32).at[0, :out].set(b.astype(f32))
        if bias_col is not None:
            bp = bp.at[0, bias_col].set(1.0)
        return wp, bp

    w_ad1, b_ad1 = pad_linear(params["w_arc_d"], params["b_arc_d"], A1p, bias_col=A)
    w_ah, b_ah = pad_linear(params["w_arc_h"], params["b_arc_h"], Ap)
    w_rd1, b_rd1 = pad_linear(params["w_rel_d"], params["b_rel_d"], R1p, bias_col=R)
    w_rh1, b_rh1 = pad_linear(params["w_rel_h"], params["b_rel_h"], R1p, bias_col=R)

    w_arc = jnp.zeros((A1p, Ap), bf16).at[:A + 1, :A].set(
        params["w_arc_attn"][0].astype(bf16))                         # n_out == 1, squeezed
    w_rel = jnp.zeros((L, R1p, R1p), bf16).at[:, :R + 1, :R + 1].set(
        params["w_rel_attn"].astype(bf16))

    x_bf = sequence_output.astype(bf16)
    mask_f = mask_bool.astype(f32).reshape(B, 1, S)

    TQ = 256 if (S > 256 and S % 256 == 0) else S
    num_q = S // TQ

    const2 = lambda shape: pl.BlockSpec(shape, lambda b, q: (0, 0))
    const3 = lambda shape: pl.BlockSpec(shape, lambda b, q: (0, 0, 0))

    grid_spec = pltpu.PrefetchScalarGridSpec(
        num_scalar_prefetch=0,
        grid=(B, num_q),
        in_specs=[
            pl.BlockSpec((1, TQ, H), lambda b, q: (b, q, 0)),    # x (query tile)
            pl.BlockSpec((1, S, H), lambda b, q: (b, 0, 0)),     # x (full slab; re-fetched only when b changes)
            pl.BlockSpec((1, 1, S), lambda b, q: (b, 0, 0)),     # mask
            const2((H, A1p)), const2((1, A1p)),                  # arc_d MLP (+ bias col)
            const2((H, Ap)), const2((1, Ap)),                    # arc_h MLP
            const2((H, R1p)), const2((1, R1p)),                  # rel_d MLP (+ bias col)
            const2((H, R1p)), const2((1, R1p)),                  # rel_h MLP (+ bias col)
            const2((A1p, Ap)),                                   # arc biaffine weight (padded)
            const3((L, R1p, R1p)),                               # rel biaffine weight (padded)
        ],
        out_specs=[
            pl.BlockSpec((1, TQ, S), lambda b, q: (b, q, 0)),        # s_arc
            pl.BlockSpec((1, TQ, L * S), lambda b, q: (b, q, 0)),    # s_rel, label-major, lane-dense
        ],
        scratch_shapes=[
            pltpu.VMEM((A1p, S), bf16),        # K_arc = W_arc @ arc_h.T
            pltpu.VMEM((R1p, L * S), bf16),    # K_rel (all labels)
        ],
    )

    flops = 2 * B * S * H * (A1p + Ap + 2 * R1p)            # four MLPs
    flops += 2 * B * S * (A1p * Ap + L * R1p * R1p)         # head-side K builds
    flops += 2 * B * S * S * (A1p + L * R1p)                # query-side biaffine matmuls
    bytes_accessed = (
        x_bf.size * 2 + mask_f.size * 4
        + (w_ad1.size + w_ah.size + w_rd1.size + w_rh1.size + w_arc.size + w_rel.size) * 2
        + (b_ad1.size + b_ah.size + b_rd1.size + b_rh1.size) * 4
        + B * S * S * 4 + B * S * L * S * 4)

    s_arc, s_rel_flat = pl.pallas_call(
        _parsing_head_kernel,
        out_shape=(
            jax.ShapeDtypeStruct((B, S, S), f32),
            jax.ShapeDtypeStruct((B, S, L * S), f32),
        ),
        grid_spec=grid_spec,
        compiler_params=pltpu.CompilerParams(
            dimension_semantics=("parallel", "arbitrary"),
            vmem_limit_bytes=48 * 1024 * 1024,
        ),
        cost_estimate=pl.CostEstimate(
            flops=int(flops), transcendentals=0, bytes_accessed=int(bytes_accessed)),
    )(x_bf, x_bf, mask_f,
      w_ad1, b_ad1, w_ah, b_ah, w_rd1, b_rd1, w_rh1, b_rh1, w_arc, w_rel)

    s_rel = s_rel_flat.reshape(B, S, L, S)     # free: contiguous split of the last dim
    if rel_layout == "bsls":
        return s_arc, s_rel                    # consumer folds the permute downstream
    # PyTorch layout [B, S, S, L]: only a cheap last-two-dim swap remains.
    return s_arc, jnp.swapaxes(s_rel, 2, 3)


def _reference_forward(x, mask_bool, params):
    """Pure-JAX f32 reference mirroring the PyTorch forward."""
    x = x.astype(jnp.float32)

    def mlp(w, b):
        y = jnp.einsum("bsh,oh->bso", x, w) + b
        return jnp.where(y > 0, y, 0.1 * y)

    arc_d = mlp(params["w_arc_d"], params["b_arc_d"])
    arc_h = mlp(params["w_arc_h"], params["b_arc_h"])
    rel_d = mlp(params["w_rel_d"], params["b_rel_d"])
    rel_h = mlp(params["w_rel_h"], params["b_rel_h"])

    ones = jnp.ones(arc_d.shape[:-1] + (1,), jnp.float32)
    d1 = jnp.concatenate([arc_d, ones], -1)
    s_arc = jnp.einsum("bxi,oij,byj->boxy", d1, params["w_arc_attn"], arc_h)[:, 0]
    s_arc = jnp.where(mask_bool[:, None, :], s_arc, -jnp.inf)

    rd1 = jnp.concatenate([rel_d, ones], -1)
    rh1 = jnp.concatenate([rel_h, ones], -1)
    s_rel = jnp.einsum("bxi,oij,byj->boxy", rd1, params["w_rel_attn"], rh1)
    s_rel = jnp.transpose(s_rel, (0, 2, 3, 1))
    return s_arc, s_rel


def _quantize_inputs_like_kernel(x, params):
    """Apply the same bf16 input/weight quantization the kernel uses (biases stay f32)."""
    q = lambda a: a.astype(jnp.bfloat16).astype(jnp.float32)
    qparams = {k: (q(v) if k.startswith("w_") else v) for k, v in params.items()}
    return q(x), qparams


def _init_params(key, hidden_size, arc_space, label_space, num_ud_labels):
    ks = jax.random.split(key, 10)
    n = lambda k, shape, scale=0.1: (scale * jax.random.normal(k, shape)).astype(jnp.float32)
    return {
        "w_arc_d": n(ks[0], (arc_space, hidden_size)),
        "b_arc_d": n(ks[1], (arc_space,)),
        "w_arc_h": n(ks[2], (arc_space, hidden_size)),
        "b_arc_h": n(ks[3], (arc_space,)),
        "w_rel_d": n(ks[4], (label_space, hidden_size)),
        "b_rel_d": n(ks[5], (label_space,)),
        "w_rel_h": n(ks[6], (label_space, hidden_size)),
        "b_rel_h": n(ks[7], (label_space,)),
        "w_arc_attn": n(ks[8], (1, arc_space + 1, arc_space)),
        "w_rel_attn": n(ks[9], (num_ud_labels, label_space + 1, label_space + 1)),
    }
    # TODO(synk): structural_attn / ud_repr_fusion are only used by ud_repr(), not
    # by forward(); they are intentionally not implemented here.


if __name__ == "__main__":
    B, S, H = 2, 8, 32
    arc_space, label_space, num_ud_labels = 16, 16, 8

    key = jax.random.PRNGKey(0)
    k_x, k_p = jax.random.split(key)
    sequence_output = jax.random.normal(k_x, (B, S, H), dtype=jnp.float32)
    # lengths 8 and 6 -> some padded positions get -inf columns in s_arc
    mask_bool = jnp.arange(S)[None, :] < jnp.array([[8], [6]])
    params = _init_params(k_p, H, arc_space, label_space, num_ud_labels)

    s_arc, s_rel = biaffine_parsing_head_forward(sequence_output, mask_bool, params)
    jax.block_until_ready((s_arc, s_rel))
    assert s_arc.shape == (B, S, S) and s_rel.shape == (B, S, S, num_ud_labels)

    # Tight numerics check against a reference fed the same bf16-quantized inputs
    # (remaining delta = in-kernel bf16 intermediates, well under 3e-2 here).
    qx, qparams = _quantize_inputs_like_kernel(sequence_output, params)
    s_arc_q, s_rel_q = _reference_forward(qx, mask_bool, qparams)
    assert jnp.allclose(s_arc, s_arc_q, atol=3e-2, rtol=3e-2)
    assert jnp.allclose(s_rel, s_rel_q, atol=3e-2, rtol=3e-2)

    # Semantics check against the plain f32 reference (difference = bf16 input
    # quantization noise); mask -inf pattern must match exactly.
    s_arc_ref, s_rel_ref = _reference_forward(sequence_output, mask_bool, params)
    assert jnp.array_equal(jnp.isneginf(s_arc), jnp.isneginf(s_arc_ref))
    assert jnp.allclose(s_arc, s_arc_ref, atol=1e-1, rtol=1e-1)
    assert jnp.allclose(s_rel, s_rel_ref, atol=1e-1, rtol=1e-1)

    print("KERNEL_OK")
</pallas_src>

<mosaic_0001>
module attributes {stable_mosaic.version = 11 : i64} {
  func.func @_parsing_head_kernel(%arg0: i32, %arg1: i32, %arg2: memref<1x8x32xbf16, #tpu.memory_space<vmem>>, %arg3: memref<1x8x32xbf16, #tpu.memory_space<vmem>>, %arg4: memref<1x1x8xf32, #tpu.memory_space<vmem>>, %arg5: memref<32x128xbf16, #tpu.memory_space<vmem>>, %arg6: memref<1x128xf32, #tpu.memory_space<vmem>>, %arg7: memref<32x128xbf16, #tpu.memory_space<vmem>>, %arg8: memref<1x128xf32, #tpu.memory_space<vmem>>, %arg9: memref<32x128xbf16, #tpu.memory_space<vmem>>, %arg10: memref<1x128xf32, #tpu.memory_space<vmem>>, %arg11: memref<32x128xbf16, #tpu.memory_space<vmem>>, %arg12: memref<1x128xf32, #tpu.memory_space<vmem>>, %arg13: memref<128x128xbf16, #tpu.memory_space<vmem>>, %arg14: memref<8x128x128xbf16, #tpu.memory_space<vmem>>, %arg15: memref<1x8x8xf32, #tpu.memory_space<vmem>>, %arg16: memref<1x8x64xf32, #tpu.memory_space<vmem>>, %arg17: memref<128x8xbf16, #tpu.memory_space<vmem>>, %arg18: memref<128x64xbf16, #tpu.memory_space<vmem>>) attributes {dimension_semantics = [#tpu.dimension_semantics<parallel>, #tpu.dimension_semantics<arbitrary>], iteration_bounds = array<i64: 2, 1>, scalar_prefetch = 0 : i64, scratch_operands = 2 : i64, tpu.core_type = #tpu.core_type<tc>, window_params = [{transform_indices = @transform_0, window_bounds = array<i64: 1, 8, 32>}, {transform_indices = @transform_1, window_bounds = array<i64: 1, 8, 32>}, {transform_indices = @transform_2, window_bounds = array<i64: 1, 1, 8>}, {pipeline_mode = #tpu.pipeline_mode<synchronous>, transform_indices = @transform_3, window_bounds = array<i64: 32, 128>}, {pipeline_mode = #tpu.pipeline_mode<synchronous>, transform_indices = @transform_4, window_bounds = array<i64: 1, 128>}, {pipeline_mode = #tpu.pipeline_mode<synchronous>, transform_indices = @transform_5, window_bounds = array<i64: 32, 128>}, {pipeline_mode = #tpu.pipeline_mode<synchronous>, transform_indices = @transform_6, window_bounds = array<i64: 1, 128>}, {pipeline_mode = #tpu.pipeline_mode<synchronous>, transform_indices = @transform_7, window_bounds = array<i64: 32, 128>}, {pipeline_mode = #tpu.pipeline_mode<synchronous>, transform_indices = @transform_8, window_bounds = array<i64: 1, 128>}, {pipeline_mode = #tpu.pipeline_mode<synchronous>, transform_indices = @transform_9, window_bounds = array<i64: 32, 128>}, {pipeline_mode = #tpu.pipeline_mode<synchronous>, transform_indices = @transform_10, window_bounds = array<i64: 1, 128>}, {pipeline_mode = #tpu.pipeline_mode<synchronous>, transform_indices = @transform_11, window_bounds = array<i64: 128, 128>}, {pipeline_mode = #tpu.pipeline_mode<synchronous>, transform_indices = @transform_12, window_bounds = array<i64: 8, 128, 128>}, {transform_indices = @transform_13, window_bounds = array<i64: 1, 8, 8>}, {transform_indices = @transform_14, window_bounds = array<i64: 1, 8, 64>}]} {
    %c0_i32 = arith.constant 0 : i32
    %0 = arith.cmpi eq, %arg1, %c0_i32 : i32
    %1 = arith.extui %0 : i1 to i32
    %c0_i32_0 = arith.constant 0 : i32
    %2 = arith.cmpi ne, %1, %c0_i32_0 : i32
    scf.if %2 {
      %c0_33 = arith.constant 0 : index
      %c0_34 = arith.constant 0 : index
      %c0_35 = arith.constant 0 : index
      %45 = vector.load %arg3[%c0_33, %c0_34, %c0_35] : memref<1x8x32xbf16, #tpu.memory_space<vmem>>, vector<1x8x32xbf16>
      %46 = vector.shape_cast %45 : vector<1x8x32xbf16> to vector<8x32xbf16>
      %c0_36 = arith.constant 0 : index
      %c0_37 = arith.constant 0 : index
      %47 = vector.load %arg7[%c0_36, %c0_37] : memref<32x128xbf16, #tpu.memory_space<vmem>>, vector<32x128xbf16>
      %cst_38 = arith.constant dense<0.000000e+00> : vector<8x128xf32>
      %48 = tpu.matmul %46, %47, %cst_38 {dimension_numbers = #tpu.dot_dimension_numbers<[1], [0], [0], [1], [0, 0, 1, 1], [], []>} : vector<8x32xbf16>, vector<32x128xbf16>, vector<8x128xf32> -> vector<8x128xf32>
      %c0_39 = arith.constant 0 : index
      %c0_40 = arith.constant 0 : index
      %49 = vector.load %arg8[%c0_39, %c0_40] : memref<1x128xf32, #tpu.memory_space<vmem>>, vector<1x128xf32>
      %50 = vector.broadcast %49 : vector<1x128xf32> to vector<8x128xf32>
      %51 = arith.addf %48, %50 : vector<8x128xf32>
      %cst_41 = arith.constant 0.000000e+00 : f32
      %52 = vector.broadcast %cst_41 : f32 to vector<8x128xf32>
      %53 = arith.cmpf ogt, %51, %52 : vector<8x128xf32>
      %cst_42 = arith.constant 1.000000e-01 : f32
      %54 = vector.broadcast %cst_42 : f32 to vector<8x128xf32>
      %55 = arith.mulf %54, %51 : vector<8x128xf32>
      %56 = arith.select %53, %51, %55 : vector<8x128xi1>, vector<8x128xf32>
      %c0_43 = arith.constant 0 : index
      %c0_44 = arith.constant 0 : index
      %57 = vector.load %arg11[%c0_43, %c0_44] : memref<32x128xbf16, #tpu.memory_space<vmem>>, vector<32x128xbf16>
      %cst_45 = arith.constant dense<0.000000e+00> : vector<8x128xf32>
      %58 = tpu.matmul %46, %57, %cst_45 {dimension_numbers = #tpu.dot_dimension_numbers<[1], [0], [0], [1], [0, 0, 1, 1], [], []>} : vector<8x32xbf16>, vector<32x128xbf16>, vector<8x128xf32> -> vector<8x128xf32>
      %c0_46 = arith.constant 0 : index
      %c0_47 = arith.constant 0 : index
      %59 = vector.load %arg12[%c0_46, %c0_47] : memref<1x128xf32, #tpu.memory_space<vmem>>, vector<1x128xf32>
      %60 = vector.broadcast %59 : vector<1x128xf32> to vector<8x128xf32>
      %61 = arith.addf %58, %60 : vector<8x128xf32>
      %cst_48 = arith.constant 0.000000e+00 : f32
      %62 = vector.broadcast %cst_48 : f32 to vector<8x128xf32>
      %63 = arith.cmpf ogt, %61, %62 : vector<8x128xf32>
      %cst_49 = arith.constant 1.000000e-01 : f32
      %64 = vector.broadcast %cst_49 : f32 to vector<8x128xf32>
      %65 = arith.mulf %64, %61 : vector<8x128xf32>
      %66 = arith.select %63, %61, %65 : vector<8x128xi1>, vector<8x128xf32>
      %67 = tpu.transpose %56, [1, 0] : vector<8x128xf32> -> vector<128x8xf32>
      %68 = arith.truncf %67 : vector<128x8xf32> to vector<128x8xbf16>
      %69 = tpu.transpose %66, [1, 0] : vector<8x128xf32> -> vector<128x8xf32>
      %70 = arith.truncf %69 : vector<128x8xf32> to vector<128x8xbf16>
      %c0_50 = arith.constant 0 : index
      %c0_51 = arith.constant 0 : index
      %71 = vector.load %arg13[%c0_50, %c0_51] : memref<128x128xbf16, #tpu.memory_space<vmem>>, vector<128x128xbf16>
      %cst_52 = arith.constant dense<0.000000e+00> : vector<128x8xf32>
      %72 = tpu.matmul %71, %68, %cst_52 {dimension_numbers = #tpu.dot_dimension_numbers<[1], [0], [0], [1], [0, 0, 1, 1], [], []>} : vector<128x128xbf16>, vector<128x8xbf16>, vector<128x8xf32> -> vector<128x8xf32>
      %73 = arith.truncf %72 : vector<128x8xf32> to vector<128x8xbf16>
      %c0_53 = arith.constant 0 : index
      %c0_54 = arith.constant 0 : index
      %74 = vector.load %arg17[%c0_53, %c0_54] : memref<128x8xbf16, #tpu.memory_space<vmem>>, vector<128x8xbf16>
      tpu.vector_store %arg17[%c0_53, %c0_54], %73 {strides = array<i32>} : memref<128x8xbf16, #tpu.memory_space<vmem>>, vector<128x8xbf16>,
      %c0_55 = arith.constant 0 : index
      %c0_56 = arith.constant 0 : index
      %c0_57 = arith.constant 0 : index
      %75 = vector.load %arg14[%c0_55, %c0_56, %c0_57] : memref<8x128x128xbf16, #tpu.memory_space<vmem>>, vector<1x128x128xbf16>
      %76 = vector.shape_cast %75 : vector<1x128x128xbf16> to vector<128x128xbf16>
      %cst_58 = arith.constant dense<0.000000e+00> : vector<128x8xf32>
      %77 = tpu.matmul %76, %70, %cst_58 {dimension_numbers = #tpu.dot_dimension_numbers<[1], [0], [0], [1], [0, 0, 1, 1], [], []>} : vector<128x128xbf16>, vector<128x8xbf16>, vector<128x8xf32> -> vector<128x8xf32>
      %78 = arith.truncf %77 : vector<128x8xf32> to vector<128x8xbf16>
      %c0_59 = arith.constant 0 : index
      %c0_60 = arith.constant 0 : index
      %79 = vector.load %arg18[%c0_59, %c0_60] : memref<128x64xbf16, #tpu.memory_space<vmem>>, vector<128x8xbf16>
      tpu.vector_store %arg18[%c0_59, %c0_60], %78 {strides = array<i32>} : memref<128x64xbf16, #tpu.memory_space<vmem>>, vector<128x8xbf16>,
      %c1 = arith.constant 1 : index
      %c0_61 = arith.constant 0 : index
      %c0_62 = arith.constant 0 : index
      %80 = vector.load %arg14[%c1, %c0_61, %c0_62] : memref<8x128x128xbf16, #tpu.memory_space<vmem>>, vector<1x128x128xbf16>
      %81 = vector.shape_cast %80 : vector<1x128x128xbf16> to vector<128x128xbf16>
      %cst_63 = arith.constant dense<0.000000e+00> : vector<128x8xf32>
      %82 = tpu.matmul %81, %70, %cst_63 {dimension_numbers = #tpu.dot_dimension_numbers<[1], [0], [0], [1], [0, 0, 1, 1], [], []>} : vector<128x128xbf16>, vector<128x8xbf16>, vector<128x8xf32> -> vector<128x8xf32>
      %83 = arith.truncf %82 : vector<128x8xf32> to vector<128x8xbf16>
      %c0_64 = arith.constant 0 : index
      %c8 = arith.constant 8 : index
      %84 = vector.load %arg18[%c0_64, %c8] : memref<128x64xbf16, #tpu.memory_space<vmem>>, vector<128x8xbf16>
      tpu.vector_store %arg18[%c0_64, %c8], %83 {strides = array<i32>} : memref<128x64xbf16, #tpu.memory_space<vmem>>, vector<128x8xbf16>,
      %c2 = arith.constant 2 : index
      %c0_65 = arith.constant 0 : index
      %c0_66 = arith.constant 0 : index
      %85 = vector.load %arg14[%c2, %c0_65, %c0_66] : memref<8x128x128xbf16, #tpu.memory_space<vmem>>, vector<1x128x128xbf16>
      %86 = vector.shape_cast %85 : vector<1x128x128xbf16> to vector<128x128xbf16>
      %cst_67 = arith.constant dense<0.000000e+00> : vector<128x8xf32>
      %87 = tpu.matmul %86, %70, %cst_67 {dimension_numbers = #tpu.dot_dimension_numbers<[1], [0], [0], [1], [0, 0, 1, 1], [], []>} : vector<128x128xbf16>, vector<128x8xbf16>, vector<128x8xf32> -> vector<128x8xf32>
      %88 = arith.truncf %87 : vector<128x8xf32> to vector<128x8xbf16>
      %c0_68 = arith.constant 0 : index
      %c16 = arith.constant 16 : index
      %89 = vector.load %arg18[%c0_68, %c16] : memref<128x64xbf16, #tpu.memory_space<vmem>>, vector<128x8xbf16>
      tpu.vector_store %arg18[%c0_68, %c16], %88 {strides = array<i32>} : memref<128x64xbf16, #tpu.memory_space<vmem>>, vector<128x8xbf16>,
      %c3 = arith.constant 3 : index
      %c0_69 = arith.constant 0 : index
      %c0_70 = arith.constant 0 : index
      %90 = vector.load %arg14[%c3, %c0_69, %c0_70] : memref<8x128x128xbf16, #tpu.memory_space<vmem>>, vector<1x128x128xbf16>
      %91 = vector.shape_cast %90 : vector<1x128x128xbf16> to vector<128x128xbf16>
      %cst_71 = arith.constant dense<0.000000e+00> : vector<128x8xf32>
      %92 = tpu.matmul %91, %70, %cst_71 {dimension_numbers = #tpu.dot_dimension_numbers<[1], [0], [0], [1], [0, 0, 1, 1], [], []>} : vector<128x128xbf16>, vector<128x8xbf16>, vector<128x8xf32> -> vector<128x8xf32>
      %93 = arith.truncf %92 : vector<128x8xf32> to vector<128x8xbf16>
      %c0_72 = arith.constant 0 : index
      %c24 = arith.constant 24 : index
      %94 = vector.load %arg18[%c0_72, %c24] : memref<128x64xbf16, #tpu.memory_space<vmem>>, vector<128x8xbf16>
      tpu.vector_store %arg18[%c0_72, %c24], %93 {strides = array<i32>} : memref<128x64xbf16, #tpu.memory_space<vmem>>, vector<128x8xbf16>,
      %c4 = arith.constant 4 : index
      %c0_73 = arith.constant 0 : index
      %c0_74 = arith.constant 0 : index
      %95 = vector.load %arg14[%c4, %c0_73, %c0_74] : memref<8x128x128xbf16, #tpu.memory_space<vmem>>, vector<1x128x128xbf16>
      %96 = vector.shape_cast %95 : vector<1x128x128xbf16> to vector<128x128xbf16>
      %cst_75 = arith.constant dense<0.000000e+00> : vector<128x8xf32>
      %97 = tpu.matmul %96, %70, %cst_75 {dimension_numbers = #tpu.dot_dimension_numbers<[1], [0], [0], [1], [0, 0, 1, 1], [], []>} : vector<128x128xbf16>, vector<128x8xbf16>, vector<128x8xf32> -> vector<128x8xf32>
      %98 = arith.truncf %97 : vector<128x8xf32> to vector<128x8xbf16>
      %c0_76 = arith.constant 0 : index
      %c32 = arith.constant 32 : index
      %99 = vector.load %arg18[%c0_76, %c32] : memref<128x64xbf16, #tpu.memory_space<vmem>>, vector<128x8xbf16>
      tpu.vector_store %arg18[%c0_76, %c32], %98 {strides = array<i32>} : memref<128x64xbf16, #tpu.memory_space<vmem>>, vector<128x8xbf16>,
      %c5 = arith.constant 5 : index
      %c0_77 = arith.constant 0 : index
      %c0_78 = arith.constant 0 : index
      %100 = vector.load %arg14[%c5, %c0_77, %c0_78] : memref<8x128x128xbf16, #tpu.memory_space<vmem>>, vector<1x128x128xbf16>
      %101 = vector.shape_cast %100 : vector<1x128x128xbf16> to vector<128x128xbf16>
      %cst_79 = arith.constant dense<0.000000e+00> : vector<128x8xf32>
      %102 = tpu.matmul %101, %70, %cst_79 {dimension_numbers = #tpu.dot_dimension_numbers<[1], [0], [0], [1], [0, 0, 1, 1], [], []>} : vector<128x128xbf16>, vector<128x8xbf16>, vector<128x8xf32> -> vector<128x8xf32>
      %103 = arith.truncf %102 : vector<128x8xf32> to vector<128x8xbf16>
      %c0_80 = arith.constant 0 : index
      %c40 = arith.constant 40 : index
      %104 = vector.load %arg18[%c0_80, %c40] : memref<128x64xbf16, #tpu.memory_space<vmem>>, vector<128x8xbf16>
      tpu.vector_store %arg18[%c0_80, %c40], %103 {strides = array<i32>} : memref<128x64xbf16, #tpu.memory_space<vmem>>, vector<128x8xbf16>,
      %c6 = arith.constant 6 : index
      %c0_81 = arith.constant 0 : index
      %c0_82 = arith.constant 0 : index
      %105 = vector.load %arg14[%c6, %c0_81, %c0_82] : memref<8x128x128xbf16, #tpu.memory_space<vmem>>, vector<1x128x128xbf16>
      %106 = vector.shape_cast %105 : vector<1x128x128xbf16> to vector<128x128xbf16>
      %cst_83 = arith.constant dense<0.000000e+00> : vector<128x8xf32>
      %107 = tpu.matmul %106, %70, %cst_83 {dimension_numbers = #tpu.dot_dimension_numbers<[1], [0], [0], [1], [0, 0, 1, 1], [], []>} : vector<128x128xbf16>, vector<128x8xbf16>, vector<128x8xf32> -> vector<128x8xf32>
      %108 = arith.truncf %107 : vector<128x8xf32> to vector<128x8xbf16>
      %c0_84 = arith.constant 0 : index
      %c48 = arith.constant 48 : index
      %109 = vector.load %arg18[%c0_84, %c48] : memref<128x64xbf16, #tpu.memory_space<vmem>>, vector<128x8xbf16>
      tpu.vector_store %arg18[%c0_84, %c48], %108 {strides = array<i32>} : memref<128x64xbf16, #tpu.memory_space<vmem>>, vector<128x8xbf16>,
      %c7 = arith.constant 7 : index
      %c0_85 = arith.constant 0 : index
      %c0_86 = arith.constant 0 : index
      %110 = vector.load %arg14[%c7, %c0_85, %c0_86] : memref<8x128x128xbf16, #tpu.memory_space<vmem>>, vector<1x128x128xbf16>
      %111 = vector.shape_cast %110 : vector<1x128x128xbf16> to vector<128x128xbf16>
      %cst_87 = arith.constant dense<0.000000e+00> : vector<128x8xf32>
      %112 = tpu.matmul %111, %70, %cst_87 {dimension_numbers = #tpu.dot_dimension_numbers<[1], [0], [0], [1], [0, 0, 1, 1], [], []>} : vector<128x128xbf16>, vector<128x8xbf16>, vector<128x8xf32> -> vector<128x8xf32>
      %113 = arith.truncf %112 : vector<128x8xf32> to vector<128x8xbf16>
      %c0_88 = arith.constant 0 : index
      %c56 = arith.constant 56 : index
      %114 = vector.load %arg18[%c0_88, %c56] : memref<128x64xbf16, #tpu.memory_space<vmem>>, vector<128x8xbf16>
      tpu.vector_store %arg18[%c0_88, %c56], %113 {strides = array<i32>} : memref<128x64xbf16, #tpu.memory_space<vmem>>, vector<128x8xbf16>,
    } else {
    }
    %c0 = arith.constant 0 : index
    %c0_1 = arith.constant 0 : index
    %c0_2 = arith.constant 0 : index
    %3 = vector.load %arg2[%c0, %c0_1, %c0_2] : memref<1x8x32xbf16, #tpu.memory_space<vmem>>, vector<1x8x32xbf16>
    %4 = vector.shape_cast %3 : vector<1x8x32xbf16> to vector<8x32xbf16>
    %c0_3 = arith.constant 0 : index
    %c0_4 = arith.constant 0 : index
    %5 = vector.load %arg5[%c0_3, %c0_4] : memref<32x128xbf16, #tpu.memory_space<vmem>>, vector<32x128xbf16>
    %cst = arith.constant dense<0.000000e+00> : vector<8x128xf32>
    %6 = tpu.matmul %4, %5, %cst {dimension_numbers = #tpu.dot_dimension_numbers<[1], [0], [0], [1], [0, 0, 1, 1], [], []>} : vector<8x32xbf16>, vector<32x128xbf16>, vector<8x128xf32> -> vector<8x128xf32>
    %c0_5 = arith.constant 0 : index
    %c0_6 = arith.constant 0 : index
    %7 = vector.load %arg6[%c0_5, %c0_6] : memref<1x128xf32, #tpu.memory_space<vmem>>, vector<1x128xf32>
    %8 = vector.broadcast %7 : vector<1x128xf32> to vector<8x128xf32>
    %9 = arith.addf %6, %8 : vector<8x128xf32>
    %cst_7 = arith.constant 0.000000e+00 : f32
    %10 = vector.broadcast %cst_7 : f32 to vector<8x128xf32>
    %11 = arith.cmpf ogt, %9, %10 : vector<8x128xf32>
    %cst_8 = arith.constant 1.000000e-01 : f32
    %12 = vector.broadcast %cst_8 : f32 to vector<8x128xf32>
    %13 = arith.mulf %12, %9 : vector<8x128xf32>
    %14 = arith.select %11, %9, %13 : vector<8x128xi1>, vector<8x128xf32>
    %15 = arith.truncf %14 : vector<8x128xf32> to vector<8x128xbf16>
    %c0_9 = arith.constant 0 : index
    %c0_10 = arith.constant 0 : index
    %16 = vector.load %arg9[%c0_9, %c0_10] : memref<32x128xbf16, #tpu.memory_space<vmem>>, vector<32x128xbf16>
    %cst_11 = arith.constant dense<0.000000e+00> : vector<8x128xf32>
    %17 = tpu.matmul %4, %16, %cst_11 {dimension_numbers = #tpu.dot_dimension_numbers<[1], [0], [0], [1], [0, 0, 1, 1], [], []>} : vector<8x32xbf16>, vector<32x128xbf16>, vector<8x128xf32> -> vector<8x128xf32>
    %c0_12 = arith.constant 0 : index
    %c0_13 = arith.constant 0 : index
    %18 = vector.load %arg10[%c0_12, %c0_13] : memref<1x128xf32, #tpu.memory_space<vmem>>, vector<1x128xf32>
    %19 = vector.broadcast %18 : vector<1x128xf32> to vector<8x128xf32>
    %20 = arith.addf %17, %19 : vector<8x128xf32>
    %cst_14 = arith.constant 0.000000e+00 : f32
    %21 = vector.broadcast %cst_14 : f32 to vector<8x128xf32>
    %22 = arith.cmpf ogt, %20, %21 : vector<8x128xf32>
    %cst_15 = arith.constant 1.000000e-01 : f32
    %23 = vector.broadcast %cst_15 : f32 to vector<8x128xf32>
    %24 = arith.mulf %23, %20 : vector<8x128xf32>
    %25 = arith.select %22, %20, %24 : vector<8x128xi1>, vector<8x128xf32>
    %26 = arith.truncf %25 : vector<8x128xf32> to vector<8x128xbf16>
    %c0_16 = arith.constant 0 : index
    %c0_17 = arith.constant 0 : index
    %27 = vector.load %arg17[%c0_16, %c0_17] : memref<128x8xbf16, #tpu.memory_space<vmem>>, vector<128x8xbf16>
    %cst_18 = arith.constant dense<0.000000e+00> : vector<8x8xf32>
    %28 = tpu.matmul %15, %27, %cst_18 {dimension_numbers = #tpu.dot_dimension_numbers<[1], [0], [0], [1], [0, 0, 1, 1], [], []>} : vector<8x128xbf16>, vector<128x8xbf16>, vector<8x8xf32> -> vector<8x8xf32>
    %c0_19 = arith.constant 0 : index
    %c0_20 = arith.constant 0 : index
    %c0_21 = arith.constant 0 : index
    %29 = vector.load %arg4[%c0_19, %c0_20, %c0_21] : memref<1x1x8xf32, #tpu.memory_space<vmem>>, vector<1x1x8xf32>
    %30 = vector.shape_cast %29 : vector<1x1x8xf32> to vector<1x8xf32>
    %cst_22 = arith.constant 0.000000e+00 : f32
    %31 = vector.broadcast %cst_22 : f32 to vector<1x8xf32>
    %32 = arith.cmpf ogt, %30, %31 : vector<1x8xf32>
    %cst_23 = arith.constant 0xFF800000 : f32
    %33 = vector.shape_cast %32 : vector<1x8xi1> to vector<1x8xi1>
    %34 = vector.broadcast %33 : vector<1x8xi1> to vector<8x8xi1>
    %35 = vector.broadcast %cst_23 : f32 to vector<8x8xf32>
    %36 = arith.select %34, %28, %35 : vector<8x8xi1>, vector<8x8xf32>
    %c0_24 = arith.constant 0 : index
    %c0_25 = arith.constant 0 : index
    %c0_26 = arith.constant 0 : index
    %37 = vector.load %arg15[%c0_24, %c0_25, %c0_26] : memref<1x8x8xf32, #tpu.memory_space<vmem>>, vector<1x8x8xf32>
    %38 = vector.shape_cast %37 : vector<1x8x8xf32> to vector<8x8xf32>
    %39 = vector.shape_cast %36 : vector<8x8xf32> to vector<1x8x8xf32>
    tpu.vector_store %arg15[%c0_24, %c0_25, %c0_26], %39 {strides = array<i32>} : memref<1x8x8xf32, #tpu.memory_space<vmem>>, vector<1x8x8xf32>,
    %c0_27 = arith.constant 0 : index
    %c0_28 = arith.constant 0 : index
    %40 = vector.load %arg18[%c0_27, %c0_28] : memref<128x64xbf16, #tpu.memory_space<vmem>>, vector<128x64xbf16>
    %cst_29 = arith.constant dense<0.000000e+00> : vector<8x64xf32>
    %41 = tpu.matmul %26, %40, %cst_29 {dimension_numbers = #tpu.dot_dimension_numbers<[1], [0], [0], [1], [0, 0, 1, 1], [], []>} : vector<8x128xbf16>, vector<128x64xbf16>, vector<8x64xf32> -> vector<8x64xf32>
    %c0_30 = arith.constant 0 : index
    %c0_31 = arith.constant 0 : index
    %c0_32 = arith.constant 0 : index
    %42 = vector.load %arg16[%c0_30, %c0_31, %c0_32] : memref<1x8x64xf32, #tpu.memory_space<vmem>>, vector<1x8x64xf32>
    %43 = vector.shape_cast %42 : vector<1x8x64xf32> to vector<8x64xf32>
    %44 = vector.shape_cast %41 : vector<8x64xf32> to vector<1x8x64xf32>
    tpu.vector_store %arg16[%c0_30, %c0_31, %c0_32], %44 {strides = array<i32>} : memref<1x8x64xf32, #tpu.memory_space<vmem>>, vector<1x8x64xf32>,
    return
  }
  func.func @transform_0(%arg0: i32, %arg1: i32) -> (i32, i32, i32) {
    %c0_i32 = arith.constant 0 : i32
    %c0_i32_0 = arith.constant 0 : i32
    return %arg0, %arg1, %c0_i32 : i32, i32, i32
  }
  func.func @transform_1(%arg0: i32, %arg1: i32) -> (i32, i32, i32) {
    %c0_i32 = arith.constant 0 : i32
    %c0_i32_0 = arith.constant 0 : i32
    %c0_i32_1 = arith.constant 0 : i32
    return %arg0, %c0_i32, %c0_i32_0 : i32, i32, i32
  }
  func.func @transform_2(%arg0: i32, %arg1: i32) -> (i32, i32, i32) {
    %c0_i32 = arith.constant 0 : i32
    %c0_i32_0 = arith.constant 0 : i32
    %c0_i32_1 = arith.constant 0 : i32
    return %arg0, %c0_i32, %c0_i32_0 : i32, i32, i32
  }
  func.func @transform_3(%arg0: i32, %arg1: i32) -> (i32, i32) {
    %c0_i32 = arith.constant 0 : i32
    %c0_i32_0 = arith.constant 0 : i32
    %c0_i32_1 = arith.constant 0 : i32
    return %c0_i32, %c0_i32_0 : i32, i32
  }
  func.func @transform_4(%arg0: i32, %arg1: i32) -> (i32, i32) {
    %c0_i32 = arith.constant 0 : i32
    %c0_i32_0 = arith.constant 0 : i32
    %c0_i32_1 = arith.constant 0 : i32
    return %c0_i32, %c0_i32_0 : i32, i32
  }
  func.func @transform_5(%arg0: i32, %arg1: i32) -> (i32, i32) {
    %c0_i32 = arith.constant 0 : i32
    %c0_i32_0 = arith.constant 0 : i32
    %c0_i32_1 = arith.constant 0 : i32
    return %c0_i32, %c0_i32_0 : i32, i32
  }
  func.func @transform_6(%arg0: i32, %arg1: i32) -> (i32, i32) {
    %c0_i32 = arith.constant 0 : i32
    %c0_i32_0 = arith.constant 0 : i32
    %c0_i32_1 = arith.constant 0 : i32
    return %c0_i32, %c0_i32_0 : i32, i32
  }
  func.func @transform_7(%arg0: i32, %arg1: i32) -> (i32, i32) {
    %c0_i32 = arith.constant 0 : i32
    %c0_i32_0 = arith.constant 0 : i32
    %c0_i32_1 = arith.constant 0 : i32
    return %c0_i32, %c0_i32_0 : i32, i32
  }
  func.func @transform_8(%arg0: i32, %arg1: i32) -> (i32, i32) {
    %c0_i32 = arith.constant 0 : i32
    %c0_i32_0 = arith.constant 0 : i32
    %c0_i32_1 = arith.constant 0 : i32
    return %c0_i32, %c0_i32_0 : i32, i32
  }
  func.func @transform_9(%arg0: i32, %arg1: i32) -> (i32, i32) {
    %c0_i32 = arith.constant 0 : i32
    %c0_i32_0 = arith.constant 0 : i32
    %c0_i32_1 = arith.constant 0 : i32
    return %c0_i32, %c0_i32_0 : i32, i32
  }
  func.func @transform_10(%arg0: i32, %arg1: i32) -> (i32, i32) {
    %c0_i32 = arith.constant 0 : i32
    %c0_i32_0 = arith.constant 0 : i32
    %c0_i32_1 = arith.constant 0 : i32
    return %c0_i32, %c0_i32_0 : i32, i32
  }
  func.func @transform_11(%arg0: i32, %arg1: i32) -> (i32, i32) {
    %c0_i32 = arith.constant 0 : i32
    %c0_i32_0 = arith.constant 0 : i32
    %c0_i32_1 = arith.constant 0 : i32
    return %c0_i32, %c0_i32_0 : i32, i32
  }
  func.func @transform_12(%arg0: i32, %arg1: i32) -> (i32, i32, i32) {
    %c0_i32 = arith.constant 0 : i32
    %c0_i32_0 = arith.constant 0 : i32
    %c0_i32_1 = arith.constant 0 : i32
    %c0_i32_2 = arith.constant 0 : i32
    return %c0_i32, %c0_i32_0, %c0_i32_1 : i32, i32, i32
  }
  func.func @transform_13(%arg0: i32, %arg1: i32) -> (i32, i32, i32) {
    %c0_i32 = arith.constant 0 : i32
    %c0_i32_0 = arith.constant 0 : i32
    return %arg0, %arg1, %c0_i32 : i32, i32, i32
  }
  func.func @transform_14(%arg0: i32, %arg1: i32) -> (i32, i32, i32) {
    %c0_i32 = arith.constant 0 : i32
    %c0_i32_0 = arith.constant 0 : i32
    return %arg0, %arg1, %c0_i32 : i32, i32, i32
  }
}

</mosaic_0001>

<llo_original>
// kernel: tpu_custom_call.1
$region0: #{tpu_custom_call.1}
  #allocation0 [shape = 'u32[]', space=smem, size = 0x4, offset = 0x4, fixed_abs, tag = 'smem constant byte address 0x4 - core index']
  #allocation1 [shape = 'u32[144,128]{1,0:T(1,128)}', space=vmem, size = 0x12000, scoped, tag = 'internal scratch']
  #allocation2 [shape = 'bf16[128,8]{1,0:T(16,128)(2,1)}', space=vmem, size = 0x8000, scoped, tag = 'scratch operand']
  #allocation3 [shape = 'bf16[128,64]{1,0:T(16,128)(2,1)}', space=vmem, size = 0x8000, scoped, tag = 'scratch operand']
  %s0 = inlined_call_operand.hbm [shape: bf16[2,8,32], index: 0, kind: input, shape index: {}]
  %s1 = inlined_call_operand.hbm [shape: bf16[2,8,32], index: 1, kind: input, shape index: {}]
  %s2 = inlined_call_operand.vmem [shape: f32[2,1,8], index: 2, kind: input, shape index: {}]
  %s3 = inlined_call_operand.hbm [shape: bf16[32,128], index: 3, kind: input, shape index: {}]
  %s4 = inlined_call_operand.hbm [shape: f32[1,128], index: 4, kind: input, shape index: {}]
  %s5 = inlined_call_operand.vmem [shape: bf16[32,128], index: 5, kind: input, shape index: {}]
  %s6 = inlined_call_operand.hbm [shape: f32[1,128], index: 6, kind: input, shape index: {}]
  %s7 = inlined_call_operand.hbm [shape: bf16[32,128], index: 7, kind: input, shape index: {}]
  %s8 = inlined_call_operand.hbm [shape: f32[1,128], index: 8, kind: input, shape index: {}]
  %s9 = inlined_call_operand.vmem [shape: bf16[32,128], index: 9, kind: input, shape index: {}]
  %s10 = inlined_call_operand.vmem [shape: f32[1,128], index: 10, kind: input, shape index: {}]
  %s11 = inlined_call_operand.hbm [shape: bf16[128,128], index: 11, kind: input, shape index: {}]
  %s12 = inlined_call_operand.hbm [shape: bf16[8,128,128], index: 12, kind: input, shape index: {}]
  %s13 = inlined_call_operand.hbm [shape: f32[2,8,8], index: 13, kind: output, shape index: {0}]
  %s14 = inlined_call_operand.hbm [shape: f32[2,8,64], index: 14, kind: output, shape index: {1}]
  %15 = xla_tuple %s13, %s14
  %s16 = sld [smem:[#allocation0]]
  $region133: #{tpu_custom_call.1} parent=0
    _
  %s18 = ssub.s32 1, %s16
  %s19 = scalar_select 0, %s18, %s16
  $region1: #{tpu_custom_call.1} parent=0
    #allocation4 [shape = 'u8[4096]{0}', space=vmem, size = 0x1000, scoped, tag = 'input window, operand 0']
    #allocation5 [shape = 's32[2]{0}', space=sflag, size = 0x8, scoped, tag = 'scoped memory for tpu_custom_call.1']
    #allocation6 [shape = 's32[2]{0}', space=sflag, size = 0x8, scoped, tag = 'scoped memory for tpu_custom_call.1']
    #allocation7 [shape = 'u8[4096]{0}', space=vmem, size = 0x1000, scoped, tag = 'input window, operand 1']
    #allocation8 [shape = 's32[2]{0}', space=sflag, size = 0x8, scoped, tag = 'scoped memory for tpu_custom_call.1']
    #allocation9 [shape = 'u8[8192]{0}', space=vmem, size = 0x2000, scoped, tag = 'input window, operand 3, single buffered']
    #allocation10 [shape = 'u8[512]{0}', space=vmem, size = 0x400, scoped, tag = 'input window, operand 4, single buffered']
    #allocation11 [shape = 's32[1]{0}', space=sflag, size = 0x4, scoped, tag = 'scoped memory for tpu_custom_call.1']
    #allocation12 [shape = 'u8[512]{0}', space=vmem, size = 0x400, scoped, tag = 'input window, operand 6, single buffered']
    #allocation13 [shape = 'u8[8192]{0}', space=vmem, size = 0x2000, scoped, tag = 'input window, operand 7, single buffered']
    #allocation14 [shape = 's32[1]{0}', space=sflag, size = 0x4, scoped, tag = 'scoped memory for tpu_custom_call.1']
    #allocation15 [shape = 'u8[512]{0}', space=vmem, size = 0x400, scoped, tag = 'input window, operand 8, single buffered']
    #allocation16 [shape = 'u8[32768]{0}', space=vmem, size = 0x8000, scoped, tag = 'input window, operand 11, single buffered']
    #allocation17 [shape = 's32[1]{0}', space=sflag, size = 0x4, scoped, tag = 'scoped memory for tpu_custom_call.1']
    #allocation18 [shape = 'u8[262144]{0}', space=vmem, size = 0x40000, scoped, tag = 'input window, operand 12, single buffered']
    #allocation19 [shape = 'u8[8192]{0}', space=vmem, size = 0x2000, scoped, tag = 'output window, operand 0']
    #allocation20 [shape = 'u8[8192]{0}', space=vmem, size = 0x2000, scoped, tag = 'output window, operand 1']
    #allocation21 [shape = 's32[2]{0}', space=sflag, size = 0x8, scoped, tag = 'scoped memory for tpu_custom_call.1']
    %20 = vsyncpa [#allocation5], 0
    %s21 = scalar_lea.sflag [#allocation5], 1
    %22 = vsyncpa %s21, 0
    %23 = vsyncpa [#allocation8], 0
    %s24 = scalar_lea.sflag [#allocation8], 1
    %25 = vsyncpa %s24, 0
    %26 = vsyncpa [#allocation11], 0
    %27 = vsyncpa [#allocation14], 0
    %28 = vsyncpa [#allocation17], 0
    %29 = vsyncpa [#allocation6], 0
    %s30 = scalar_lea.sflag [#allocation6], 1
    %31 = vsyncpa %s30, 0
    %32 = vsyncpa [#allocation21], 0
    %s33 = scalar_lea.sflag [#allocation21], 1
    %34 = vsyncpa %s33, 0
    loop: start=0, step=1, limit=4
    $region2: #{tpu_custom_call.1} parent=1 // loop_pre_header
      _
    $region3: #{tpu_custom_call.1} parent=1 // loop_header
      %s36 = sphi 0, %s40
      %p37 = scmp.ge.s32.totalorder %s36, 4
      %s43 = sphi 0, %s55
      %s44 = sphi 0, %s51
      %s45 = sphi 0, %s43
      %s46 = sphi 0, %s44
      %s47 = sphi 0, %s45
      %s48 = sphi 0, %s46
      %s60 = sphi 0, %s62
      %s63 = sphi 0, %s60
      %s64 = sphi 0, %s63
      %s80 = sphi 0, %s64
      %s86 = sphi 0, %s88
      %s89 = sphi 0, %s86
      %s90 = sphi 0, %s89
      %s106 = sphi 0, %s90
      %s112 = sphi 0, %s114
      %s115 = sphi 0, %s112
      %s116 = sphi 0, %s115
      %s132 = sphi 0, %s116
      %s136 = sphi 0, %s136
      %s138 = sphi 0, %s136
      %s139 = sphi 0, %s138
      %s153 = sphi 0, %s139
      %s157 = sphi 0, %s157
      %s159 = sphi 0, %s157
      %s160 = sphi 0, %s159
      %s174 = sphi 0, %s160
      %s178 = sphi 0, %s178
      %s180 = sphi 0, %s178
      %s181 = sphi 0, %s180
      %s195 = sphi 0, %s181
      %s199 = sphi 0, %s199
      %s201 = sphi 0, %s199
      %s202 = sphi 0, %s201
      %s216 = sphi 0, %s202
      %s220 = sphi 0, %s220
      %s222 = sphi 0, %s220
      %s223 = sphi 0, %s222
      %s237 = sphi 0, %s223
      %s241 = sphi 0, %s241
      %s243 = sphi 0, %s241
      %s244 = sphi 0, %s243
      %s258 = sphi 0, %s244
      %s262 = sphi 0, %s262
      %s264 = sphi 0, %s262
      %s265 = sphi 0, %s264
      %s279 = sphi 0, %s265
      %s283 = sphi 0, %s283
      %s285 = sphi 0, %s283
      %s286 = sphi 0, %s285
      %s300 = sphi 0, %s286
      %s304 = sphi 0, %s304
      %s306 = sphi 0, %s304
      %s307 = sphi 0, %s306
      %s321 = sphi 0, %s307
      %s325 = sphi 0, %s325
      %s327 = sphi 0, %s325
      %s328 = sphi 0, %s327
      %s342 = sphi 0, %s328
      %s350 = sphi 0, %s352
      %s353 = sphi 0, %s350
      %s354 = sphi 0, %s353
      %s370 = sphi 0, %s354
      %s378 = sphi 0, %s380
      %s381 = sphi 0, %s378
      %s382 = sphi 0, %s381
      %s398 = sphi 0, %s382
    $region4: #{tpu_custom_call.1} parent=1 // loop_header_branch
      %39 = sbr.rel (%p37) target = $region8
    $region5: #{tpu_custom_call.1} parent=1 // loop_body
      %s41 = ssub.s32 %s36, 1
      %s42 = ssub.s32 %s36, 2
      %s49 = sadd.s32 1, %s44
      %p50 = scmp.ge.s32.totalorder %s49, 1
      %s51 = scalar_select %p50, 0, %s49
      %s52 = sadd.s32 1, %s43
      %s53 = scalar_select %p50, %s52, %s43
      %p54 = scmp.ge.s32.totalorder %s53, 2
      %s55 = scalar_select %p54, 0, %s53
      %s56 = ssub.s32 %s43, %s55
      %s57 = ssub.s32 %s44, %s51
      %s58 = sor.u32 %s56, %s57
      %p59 = scmp.eq.s32.totalorder %s58, 0
      %s61 = sadd.s32 %s60, 1
      %s62 = scalar_select %p59, %s60, %s61
      %p65 = pneg %p59
      %p66 = scmp.eq.s32.totalorder %s36, 1
      %p67 = por %p65, %p66
      %p68 = scmp.ne.s32.totalorder %s60, %s63
      %p69 = scmp.eq.s32.totalorder %s36, 0
      %p70 = por %p68, %p69
      %p71 = scmp.ne.s32.totalorder %s60, %s63
      %p72 = scmp.eq.s32.totalorder %s41, 1
      %p73 = por %p71, %p72
      %p74 = scmp.ne.s32.totalorder %s63, %s64
      %p75 = scmp.eq.s32.totalorder %s41, 0
      %p76 = por %p74, %p75
      %p77 = scmp.ne.s32.totalorder %s63, %s64
      %p78 = scmp.eq.s32.totalorder %s42, 1
      %p79 = por %p77, %p78
      %p81 = scmp.ne.s32.totalorder %s64, %s80
      %p82 = scmp.eq.s32.totalorder %s42, 0
      %p83 = por %p81, %p82
      %s84 = ssub.s32 %s43, %s55
      %p85 = scmp.eq.s32.totalorder %s84, 0
      %s87 = sadd.s32 %s86, 1
      %s88 = scalar_select %p85, %s86, %s87
      %p91 = pneg %p85
      %p92 = scmp.eq.s32.totalorder %s36, 1
      %p93 = por %p91, %p92
      %p94 = scmp.ne.s32.totalorder %s86, %s89
      %p95 = scmp.eq.s32.totalorder %s36, 0
      %p96 = por %p94, %p95
      %p97 = scmp.ne.s32.totalorder %s86, %s89
      %p98 = scmp.eq.s32.totalorder %s41, 1
      %p99 = por %p97, %p98
      %p100 = scmp.ne.s32.totalorder %s89, %s90
      %p101 = scmp.eq.s32.totalorder %s41, 0
      %p102 = por %p100, %p101
      %p103 = scmp.ne.s32.totalorder %s89, %s90
      %p104 = scmp.eq.s32.totalorder %s42, 1
      %p105 = por %p103, %p104
      %p107 = scmp.ne.s32.totalorder %s90, %s106
      %p108 = scmp.eq.s32.totalorder %s42, 0
      %p109 = por %p107, %p108
      %s110 = ssub.s32 %s43, %s55
      %p111 = scmp.eq.s32.totalorder %s110, 0
      %s113 = sadd.s32 %s112, 1
      %s114 = scalar_select %p111, %s112, %s113
      %p117 = pneg %p111
      %p118 = scmp.eq.s32.totalorder %s36, 1
      %p119 = por %p117, %p118
      %p120 = scmp.ne.s32.totalorder %s112, %s115
      %p121 = scmp.eq.s32.totalorder %s36, 0
      %p122 = por %p120, %p121
      %p123 = scmp.ne.s32.totalorder %s112, %s115
      %p124 = scmp.eq.s32.totalorder %s41, 1
      %p125 = por %p123, %p124
      %p126 = scmp.ne.s32.totalorder %s115, %s116
      %p127 = scmp.eq.s32.totalorder %s41, 0
      %p128 = por %p126, %p127
      %p129 = scmp.ne.s32.totalorder %s115, %s116
      %p130 = scmp.eq.s32.totalorder %s42, 1
      %p131 = por %p129, %p130
      %p133 = scmp.ne.s32.totalorder %s116, %s132
      %p134 = scmp.eq.s32.totalorder %s42, 0
      %p135 = por %p133, %p134
      %s137 = sadd.s32 %s136, 1
      %p140 = scmp.eq.s32.totalorder %s36, 1
      %p141 = scmp.ne.s32.totalorder %s136, %s138
      %p142 = scmp.eq.s32.totalorder %s36, 0
      %p143 = por %p141, %p142
      %p144 = scmp.ne.s32.totalorder %s136, %s138
      %p145 = scmp.eq.s32.totalorder %s41, 1
      %p146 = por %p144, %p145
      %p147 = scmp.ne.s32.totalorder %s138, %s139
      %p148 = scmp.eq.s32.totalorder %s41, 0
      %p149 = por %p147, %p148
      %p150 = scmp.ne.s32.totalorder %s138, %s139
      %p151 = scmp.eq.s32.totalorder %s42, 1
      %p152 = por %p150, %p151
      %p154 = scmp.ne.s32.totalorder %s139, %s153
      %p155 = scmp.eq.s32.totalorder %s42, 0
      %p156 = por %p154, %p155
      %s158 = sadd.s32 %s157, 1
      %p161 = scmp.eq.s32.totalorder %s36, 1
      %p162 = scmp.ne.s32.totalorder %s157, %s159
      %p163 = scmp.eq.s32.totalorder %s36, 0
      %p164 = por %p162, %p163
      %p165 = scmp.ne.s32.totalorder %s157, %s159
      %p166 = scmp.eq.s32.totalorder %s41, 1
      %p167 = por %p165, %p166
      %p168 = scmp.ne.s32.totalorder %s159, %s160
      %p169 = scmp.eq.s32.totalorder %s41, 0
      %p170 = por %p168, %p169
      %p171 = scmp.ne.s32.totalorder %s159, %s160
      %p172 = scmp.eq.s32.totalorder %s42, 1
      %p173 = por %p171, %p172
      %p175 = scmp.ne.s32.totalorder %s160, %s174
      %p176 = scmp.eq.s32.totalorder %s42, 0
      %p177 = por %p175, %p176
      %s179 = sadd.s32 %s178, 1
      %p182 = scmp.eq.s32.totalorder %s36, 1
      %p183 = scmp.ne.s32.totalorder %s178, %s180
      %p184 = scmp.eq.s32.totalorder %s36, 0
      %p185 = por %p183, %p184
      %p186 = scmp.ne.s32.totalorder %s178, %s180
      %p187 = scmp.eq.s32.totalorder %s41, 1
      %p188 = por %p186, %p187
      %p189 = scmp.ne.s32.totalorder %s180, %s181
      %p190 = scmp.eq.s32.totalorder %s41, 0
      %p191 = por %p189, %p190
      %p192 = scmp.ne.s32.totalorder %s180, %s181
      %p193 = scmp.eq.s32.totalorder %s42, 1
      %p194 = por %p192, %p193
      %p196 = scmp.ne.s32.totalorder %s181, %s195
      %p197 = scmp.eq.s32.totalorder %s42, 0
      %p198 = por %p196, %p197
      %s200 = sadd.s32 %s199, 1
      %p203 = scmp.eq.s32.totalorder %s36, 1
      %p204 = scmp.ne.s32.totalorder %s199, %s201
      %p205 = scmp.eq.s32.totalorder %s36, 0
      %p206 = por %p204, %p205
      %p207 = scmp.ne.s32.totalorder %s199, %s201
      %p208 = scmp.eq.s32.totalorder %s41, 1
      %p209 = por %p207, %p208
      %p210 = scmp.ne.s32.totalorder %s201, %s202
      %p211 = scmp.eq.s32.totalorder %s41, 0
      %p212 = por %p210, %p211
      %p213 = scmp.ne.s32.totalorder %s201, %s202
      %p214 = scmp.eq.s32.totalorder %s42, 1
      %p215 = por %p213, %p214
      %p217 = scmp.ne.s32.totalorder %s202, %s216
      %p218 = scmp.eq.s32.totalorder %s42, 0
      %p219 = por %p217, %p218
      %s221 = sadd.s32 %s220, 1
      %p224 = scmp.eq.s32.totalorder %s36, 1
      %p225 = scmp.ne.s32.totalorder %s220, %s222
      %p226 = scmp.eq.s32.totalorder %s36, 0
      %p227 = por %p225, %p226
      %p228 = scmp.ne.s32.totalorder %s220, %s222
      %p229 = scmp.eq.s32.totalorder %s41, 1
      %p230 = por %p228, %p229
      %p231 = scmp.ne.s32.totalorder %s222, %s223
      %p232 = scmp.eq.s32.totalorder %s41, 0
      %p233 = por %p231, %p232
      %p234 = scmp.ne.s32.totalorder %s222, %s223
      %p235 = scmp.eq.s32.totalorder %s42, 1
      %p236 = por %p234, %p235
      %p238 = scmp.ne.s32.totalorder %s223, %s237
      %p239 = scmp.eq.s32.totalorder %s42, 0
      %p240 = por %p238, %p239
      %s242 = sadd.s32 %s241, 1
      %p245 = scmp.eq.s32.totalorder %s36, 1
      %p246 = scmp.ne.s32.totalorder %s241, %s243
      %p247 = scmp.eq.s32.totalorder %s36, 0
      %p248 = por %p246, %p247
      %p249 = scmp.ne.s32.totalorder %s241, %s243
      %p250 = scmp.eq.s32.totalorder %s41, 1
      %p251 = por %p249, %p250
      %p252 = scmp.ne.s32.totalorder %s243, %s244
      %p253 = scmp.eq.s32.totalorder %s41, 0
      %p254 = por %p252, %p253
      %p255 = scmp.ne.s32.totalorder %s243, %s244
      %p256 = scmp.eq.s32.totalorder %s42, 1
      %p257 = por %p255, %p256
      %p259 = scmp.ne.s32.totalorder %s244, %s258
      %p260 = scmp.eq.s32.totalorder %s42, 0
      %p261 = por %p259, %p260
      %s263 = sadd.s32 %s262, 1
      %p266 = scmp.eq.s32.totalorder %s36, 1
      %p267 = scmp.ne.s32.totalorder %s262, %s264
      %p268 = scmp.eq.s32.totalorder %s36, 0
      %p269 = por %p267, %p268
      %p270 = scmp.ne.s32.totalorder %s262, %s264
      %p271 = scmp.eq.s32.totalorder %s41, 1
      %p272 = por %p270, %p271
      %p273 = scmp.ne.s32.totalorder %s264, %s265
      %p274 = scmp.eq.s32.totalorder %s41, 0
      %p275 = por %p273, %p274
      %p276 = scmp.ne.s32.totalorder %s264, %s265
      %p277 = scmp.eq.s32.totalorder %s42, 1
      %p278 = por %p276, %p277
      %p280 = scmp.ne.s32.totalorder %s265, %s279
      %p281 = scmp.eq.s32.totalorder %s42, 0
      %p282 = por %p280, %p281
      %s284 = sadd.s32 %s283, 1
      %p287 = scmp.eq.s32.totalorder %s36, 1
      %p288 = scmp.ne.s32.totalorder %s283, %s285
      %p289 = scmp.eq.s32.totalorder %s36, 0
      %p290 = por %p288, %p289
      %p291 = scmp.ne.s32.totalorder %s283, %s285
      %p292 = scmp.eq.s32.totalorder %s41, 1
      %p293 = por %p291, %p292
      %p294 = scmp.ne.s32.totalorder %s285, %s286
      %p295 = scmp.eq.s32.totalorder %s41, 0
      %p296 = por %p294, %p295
      %p297 = scmp.ne.s32.totalorder %s285, %s286
      %p298 = scmp.eq.s32.totalorder %s42, 1
      %p299 = por %p297, %p298
      %p301 = scmp.ne.s32.totalorder %s286, %s300
      %p302 = scmp.eq.s32.totalorder %s42, 0
      %p303 = por %p301, %p302
      %s305 = sadd.s32 %s304, 1
      %p308 = scmp.eq.s32.totalorder %s36, 1
      %p309 = scmp.ne.s32.totalorder %s304, %s306
      %p310 = scmp.eq.s32.totalorder %s36, 0
      %p311 = por %p309, %p310
      %p312 = scmp.ne.s32.totalorder %s304, %s306
      %p313 = scmp.eq.s32.totalorder %s41, 1
      %p314 = por %p312, %p313
      %p315 = scmp.ne.s32.totalorder %s306, %s307
      %p316 = scmp.eq.s32.totalorder %s41, 0
      %p317 = por %p315, %p316
      %p318 = scmp.ne.s32.totalorder %s306, %s307
      %p319 = scmp.eq.s32.totalorder %s42, 1
      %p320 = por %p318, %p319
      %p322 = scmp.ne.s32.totalorder %s307, %s321
      %p323 = scmp.eq.s32.totalorder %s42, 0
      %p324 = por %p322, %p323
      %s326 = sadd.s32 %s325, 1
      %p329 = scmp.eq.s32.totalorder %s36, 1
      %p330 = scmp.ne.s32.totalorder %s325, %s327
      %p331 = scmp.eq.s32.totalorder %s36, 0
      %p332 = por %p330, %p331
      %p333 = scmp.ne.s32.totalorder %s325, %s327
      %p334 = scmp.eq.s32.totalorder %s41, 1
      %p335 = por %p333, %p334
      %p336 = scmp.ne.s32.totalorder %s327, %s328
      %p337 = scmp.eq.s32.totalorder %s41, 0
      %p338 = por %p336, %p337
      %p339 = scmp.ne.s32.totalorder %s327, %s328
      %p340 = scmp.eq.s32.totalorder %s42, 1
      %p341 = por %p339, %p340
      %p343 = scmp.ne.s32.totalorder %s328, %s342
      %p344 = scmp.eq.s32.totalorder %s42, 0
      %p345 = por %p343, %p344
      %s346 = ssub.s32 %s43, %s55
      %s347 = ssub.s32 %s44, %s51
      %s348 = sor.u32 %s346, %s347
      %p349 = scmp.eq.s32.totalorder %s348, 0
      %s351 = sadd.s32 %s350, 1
      %s352 = scalar_select %p349, %s350, %s351
      %p355 = pneg %p349
      %p356 = scmp.eq.s32.totalorder %s36, 1
      %p357 = por %p355, %p356
      %p358 = scmp.ne.s32.totalorder %s350, %s353
      %p359 = scmp.eq.s32.totalorder %s36, 0
      %p360 = por %p358, %p359
      %p361 = scmp.ne.s32.totalorder %s350, %s353
      %p362 = scmp.eq.s32.totalorder %s41, 1
      %p363 = por %p361, %p362
      %p364 = scmp.ne.s32.totalorder %s353, %s354
      %p365 = scmp.eq.s32.totalorder %s41, 0
      %p366 = por %p364, %p365
      %p367 = scmp.ne.s32.totalorder %s353, %s354
      %p368 = scmp.eq.s32.totalorder %s42, 1
      %p369 = por %p367, %p368
      %p371 = scmp.ne.s32.totalorder %s354, %s370
      %p372 = scmp.eq.s32.totalorder %s42, 0
      %p373 = por %p371, %p372
      %s374 = ssub.s32 %s43, %s55
      %s375 = ssub.s32 %s44, %s51
      %s376 = sor.u32 %s374, %s375
      %p377 = scmp.eq.s32.totalorder %s376, 0
      %s379 = sadd.s32 %s378, 1
      %s380 = scalar_select %p377, %s378, %s379
      %p383 = pneg %p377
      %p384 = scmp.eq.s32.totalorder %s36, 1
      %p385 = por %p383, %p384
      %p386 = scmp.ne.s32.totalorder %s378, %s381
      %p387 = scmp.eq.s32.totalorder %s36, 0
      %p388 = por %p386, %p387
      %p389 = scmp.ne.s32.totalorder %s378, %s381
      %p390 = scmp.eq.s32.totalorder %s41, 1
      %p391 = por %p389, %p390
      %p392 = scmp.ne.s32.totalorder %s381, %s382
      %p393 = scmp.eq.s32.totalorder %s41, 0
      %p394 = por %p392, %p393
      %p395 = scmp.ne.s32.totalorder %s381, %s382
      %p396 = scmp.eq.s32.totalorder %s42, 1
      %p397 = por %p395, %p396
      %p399 = scmp.ne.s32.totalorder %s382, %s398
      %p400 = scmp.eq.s32.totalorder %s42, 0
      %p401 = por %p399, %p400
      %p402 = scmp.le.s32.totalorder 1, %s36
      %p403 = scmp.lt.s32.totalorder %s36, 3
      %p404 = pnand %p402, %p403
      %p405 = pneg %p404
      // Predicated region
      $region9: #{tpu_custom_call.1} parent=5 // pred_check
        _
      $region10: #{tpu_custom_call.1} parent=5 // pred_check_branch
        %407 = sbr.rel (%p404) target = $region12
      $region11: #{tpu_custom_call.1} parent=5 // pred_region
        %s408 = ssub.s32 %s36, 1
        // Predicated region
        $region13: #{tpu_custom_call.1} parent=11 // pred_check
          %p409 = pneg %p149
        $region14: #{tpu_custom_call.1} parent=11 // pred_check_branch
          %411 = sbr.rel (%p409) target = $region16
        $region15: #{tpu_custom_call.1} parent=11 // pred_region
          %s413 = ssub.s32 256, 256
          %414 = vsyncadd [#allocation8], %s413
          %s415 = sshll.u32 [#allocation9], 4
          %s416 = int_to_ptr.vmem [resolvable:$true] %s415
          %421 = dma.hbm_to_vmem [thread:$0]  %s3, 256, %s416, [#allocation8], 64, 64, 4
        $region16: #{tpu_custom_call.1} parent=11 // pred_fallthru
          _
        // Predicated region
        $region17: #{tpu_custom_call.1} parent=11 // pred_check
          %p422 = pneg %p170
        $region18: #{tpu_custom_call.1} parent=11 // pred_check_branch
          %424 = sbr.rel (%p422) target = $region20
        $region19: #{tpu_custom_call.1} parent=11 // pred_region
          %s426 = ssub.s32 16, 16
          %427 = vsyncadd [#allocation11], %s426
          %s429 = sshll.u32 [#allocation10], 4
          %s430 = int_to_ptr.vmem [resolvable:$true] %s429
          %432 = dma.hbm_to_vmem [thread:$0]  %s4, 16, %s430, [#allocation11]
        $region20: #{tpu_custom_call.1} parent=11 // pred_fallthru
          _
        // Predicated region
        $region21: #{tpu_custom_call.1} parent=11 // pred_check
          %p433 = pneg %p191
        $region22: #{tpu_custom_call.1} parent=11 // pred_check_branch
          %435 = sbr.rel (%p433) target = $region24
        $region23: #{tpu_custom_call.1} parent=11 // pred_region
          _
        $region24: #{tpu_custom_call.1} parent=11 // pred_fallthru
          _
        // Predicated region
        $region25: #{tpu_custom_call.1} parent=11 // pred_check
          %p436 = pneg %p212
        $region26: #{tpu_custom_call.1} parent=11 // pred_check_branch
          %438 = sbr.rel (%p436) target = $region28
        $region27: #{tpu_custom_call.1} parent=11 // pred_region
          %s440 = ssub.s32 16, 16
          %441 = vsyncadd [#allocation11], %s440
          %s443 = sshll.u32 [#allocation12], 4
          %s444 = int_to_ptr.vmem [resolvable:$true] %s443
          %446 = dma.hbm_to_vmem [thread:$0]  %s6, 16, %s444, [#allocation11]
        $region28: #{tpu_custom_call.1} parent=11 // pred_fallthru
          _
        // Predicated region
        $region29: #{tpu_custom_call.1} parent=11 // pred_check
          %p447 = pneg %p233
        $region30: #{tpu_custom_call.1} parent=11 // pred_check_branch
          %449 = sbr.rel (%p447) target = $region32
        $region31: #{tpu_custom_call.1} parent=11 // pred_region
          %s451 = ssub.s32 256, 256
          %452 = vsyncadd [#allocation14], %s451
          %s453 = sshll.u32 [#allocation13], 4
          %s454 = int_to_ptr.vmem [resolvable:$true] %s453
          %459 = dma.hbm_to_vmem [thread:$0]  %s7, 256, %s454, [#allocation14], 64, 64, 4
        $region32: #{tpu_custom_call.1} parent=11 // pred_fallthru
          _
        // Predicated region
        $region33: #{tpu_custom_call.1} parent=11 // pred_check
          %p460 = pneg %p254
        $region34: #{tpu_custom_call.1} parent=11 // pred_check_branch
          %462 = sbr.rel (%p460) target = $region36
        $region35: #{tpu_custom_call.1} parent=11 // pred_region
          %s464 = ssub.s32 16, 16
          %465 = vsyncadd [#allocation14], %s464
          %s467 = sshll.u32 [#allocation15], 4
          %s468 = int_to_ptr.vmem [resolvable:$true] %s467
          %470 = dma.hbm_to_vmem [thread:$0]  %s8, 16, %s468, [#allocation14]
        $region36: #{tpu_custom_call.1} parent=11 // pred_fallthru
          _
        // Predicated region
        $region37: #{tpu_custom_call.1} parent=11 // pred_check
          %p471 = pneg %p275
        $region38: #{tpu_custom_call.1} parent=11 // pred_check_branch
          %473 = sbr.rel (%p471) target = $region40
        $region39: #{tpu_custom_call.1} parent=11 // pred_region
          _
        $region40: #{tpu_custom_call.1} parent=11 // pred_fallthru
          _
        // Predicated region
        $region41: #{tpu_custom_call.1} parent=11 // pred_check
          %p474 = pneg %p296
        $region42: #{tpu_custom_call.1} parent=11 // pred_check_branch
          %476 = sbr.rel (%p474) target = $region44
        $region43: #{tpu_custom_call.1} parent=11 // pred_region
          _
        $region44: #{tpu_custom_call.1} parent=11 // pred_fallthru
          _
        // Predicated region
        $region45: #{tpu_custom_call.1} parent=11 // pred_check
          %p477 = pneg %p317
        $region46: #{tpu_custom_call.1} parent=11 // pred_check_branch
          %479 = sbr.rel (%p477) target = $region48
        $region47: #{tpu_custom_call.1} parent=11 // pred_region
          %s481 = ssub.s32 1024, 1024
          %482 = vsyncadd [#allocation17], %s481
          %s483 = sshll.u32 [#allocation16], 4
          %s484 = int_to_ptr.vmem [resolvable:$true] %s483
          %489 = dma.hbm_to_vmem [thread:$0]  %s11, 1024, %s484, [#allocation17], 64, 64, 4
        $region48: #{tpu_custom_call.1} parent=11 // pred_fallthru
          _
        // Predicated region
        $region49: #{tpu_custom_call.1} parent=11 // pred_check
          %p490 = pneg %p338
        $region50: #{tpu_custom_call.1} parent=11 // pred_check_branch
          %492 = sbr.rel (%p490) target = $region52
        $region51: #{tpu_custom_call.1} parent=11 // pred_region
          %s494 = ssub.s32 8192, 8192
          %495 = vsyncadd [#allocation17], %s494
          %s496 = sshll.u32 [#allocation18], 4
          %s497 = int_to_ptr.vmem [resolvable:$true] %s496
          %502 = dma.hbm_to_vmem [thread:$0]  %s12, 8192, %s497, [#allocation17], 64, 64, 4
        $region52: #{tpu_custom_call.1} parent=11 // pred_fallthru
          _
      $region12: #{tpu_custom_call.1} parent=5 // pred_fallthru
        _
      %p503 = scmp.lt.s32.totalorder %s36, 2
      // Predicated region
      $region53: #{tpu_custom_call.1} parent=5 // pred_check
        %p504 = pneg %p503
      $region54: #{tpu_custom_call.1} parent=5 // pred_check_branch
        %506 = sbr.rel (%p504) target = $region56
      $region55: #{tpu_custom_call.1} parent=5 // pred_region
        // Predicated region
        $region57: #{tpu_custom_call.1} parent=55 // pred_check
          %p507 = pneg %p70
        $region58: #{tpu_custom_call.1} parent=55 // pred_check_branch
          %509 = sbr.rel (%p507) target = $region60
        $region59: #{tpu_custom_call.1} parent=55 // pred_region
          %s510 = sand.u32 %s60, 1
          %s511 = scalar_lea.sflag [#allocation5], %s510
          %s512 = sand.u32 %s60, 1
          %s513 = smul.addr %s512, 4
          %s514 = scalar_lea.vmem [#allocation4], %s513
          %s516 = ssub.s32 64, 64
          %517 = vsyncadd %s511, %s516
          %s518 = sadd.s32 %s44, %s43
          %s519 = smul.addr %s518, 64
          %s520 = scalar_lea.hbm %s0, %s519
          %s522 = sshll.u32 %s514, 4
          %s523 = int_to_ptr.vmem [resolvable:$true] %s522
          %525 = dma.hbm_to_vmem [thread:$0]  %s520, 64, %s523, %s511
        $region60: #{tpu_custom_call.1} parent=55 // pred_fallthru
          _
        // Predicated region
        $region61: #{tpu_custom_call.1} parent=55 // pred_check
          %p526 = pneg %p96
        $region62: #{tpu_custom_call.1} parent=55 // pred_check_branch
          %528 = sbr.rel (%p526) target = $region64
        $region63: #{tpu_custom_call.1} parent=55 // pred_region
          %s529 = sand.u32 %s36, 1
          %s530 = scalar_lea.sflag [#allocation8], %s529
          %s531 = sand.u32 %s86, 1
          %s532 = smul.addr %s531, 4
          %s533 = scalar_lea.vmem [#allocation7], %s532
          %s535 = ssub.s32 64, 64
          %536 = vsyncadd %s530, %s535
          %s537 = smul.addr %s43, 64
          %s538 = scalar_lea.hbm %s1, %s537
          %s540 = sshll.u32 %s533, 4
          %s541 = int_to_ptr.vmem [resolvable:$true] %s540
          %543 = dma.hbm_to_vmem [thread:$0]  %s538, 64, %s541, %s530
        $region64: #{tpu_custom_call.1} parent=55 // pred_fallthru
          _
        // Predicated region
        $region65: #{tpu_custom_call.1} parent=55 // pred_check
          %p544 = pneg %p122
        $region66: #{tpu_custom_call.1} parent=55 // pred_check_branch
          %546 = sbr.rel (%p544) target = $region68
        $region67: #{tpu_custom_call.1} parent=55 // pred_region
          %p547 = scmp.lt.s32.totalorder %s43, 1
          %s548 = scalar_select %p547, %s43, 1
          %s549 = scalar_lea.vmem %s2, %s548
        $region68: #{tpu_custom_call.1} parent=55 // pred_fallthru
          _
      $region56: #{tpu_custom_call.1} parent=5 // pred_fallthru
        _
      %p550 = scmp.le.s32.totalorder 1, %s36
      %p551 = scmp.lt.s32.totalorder %s36, 3
      %p552 = pnand %p550, %p551
      %p553 = pneg %p552
      // Predicated region
      $region69: #{tpu_custom_call.1} parent=5 // pred_check
        _
      $region70: #{tpu_custom_call.1} parent=5 // pred_check_branch
        %555 = sbr.rel (%p552) target = $region72
      $region71: #{tpu_custom_call.1} parent=5 // pred_region
        %s556 = ssub.s32 %s36, 1
        %s557 = sand.u32 %s63, 1
        %s558 = scalar_lea.sflag [#allocation5], %s557
        %s559 = sand.u32 %s63, 1
        %s560 = smul.addr %s559, 4
        %s561 = scalar_lea.vmem [#allocation4], %s560
        // Predicated region
        $region73: #{tpu_custom_call.1} parent=71 // pred_check
          %p562 = pneg %p76
        $region74: #{tpu_custom_call.1} parent=71 // pred_check_branch
          %564 = sbr.rel (%p562) target = $region76
        $region75: #{tpu_custom_call.1} parent=71 // pred_region
          %565 = dma.done %s558, 64
        $region76: #{tpu_custom_call.1} parent=71 // pred_fallthru
          _
        %s566 = sand.u32 %s41, 1
        %s567 = scalar_lea.sflag [#allocation8], %s566
        %s568 = sand.u32 %s89, 1
        %s569 = smul.addr %s568, 4
        %s570 = scalar_lea.vmem [#allocation7], %s569
        // Predicated region
        $region77: #{tpu_custom_call.1} parent=71 // pred_check
          %p571 = pneg %p102
        $region78: #{tpu_custom_call.1} parent=71 // pred_check_branch
          %573 = sbr.rel (%p571) target = $region80
        $region79: #{tpu_custom_call.1} parent=71 // pred_region
          %574 = dma.done %s567, 64
        $region80: #{tpu_custom_call.1} parent=71 // pred_fallthru
          _
        // Predicated region
        $region81: #{tpu_custom_call.1} parent=71 // pred_check
          %p575 = pneg %p149
        $region82: #{tpu_custom_call.1} parent=71 // pred_check_branch
          %577 = sbr.rel (%p575) target = $region84
        $region83: #{tpu_custom_call.1} parent=71 // pred_region
          %578 = dma.done [#allocation8], 256
        $region84: #{tpu_custom_call.1} parent=71 // pred_fallthru
          _
        // Predicated region
        $region85: #{tpu_custom_call.1} parent=71 // pred_check
          %p579 = pneg %p170
        $region86: #{tpu_custom_call.1} parent=71 // pred_check_branch
          %581 = sbr.rel (%p579) target = $region88
        $region87: #{tpu_custom_call.1} parent=71 // pred_region
          %582 = dma.done [#allocation11], 16
        $region88: #{tpu_custom_call.1} parent=71 // pred_fallthru
          _
        // Predicated region
        $region89: #{tpu_custom_call.1} parent=71 // pred_check
          %p583 = pneg %p212
        $region90: #{tpu_custom_call.1} parent=71 // pred_check_branch
          %585 = sbr.rel (%p583) target = $region92
        $region91: #{tpu_custom_call.1} parent=71 // pred_region
          %586 = dma.done [#allocation11], 16
        $region92: #{tpu_custom_call.1} parent=71 // pred_fallthru
          _
        // Predicated region
        $region93: #{tpu_custom_call.1} parent=71 // pred_check
          %p587 = pneg %p233
        $region94: #{tpu_custom_call.1} parent=71 // pred_check_branch
          %589 = sbr.rel (%p587) target = $region96
        $region95: #{tpu_custom_call.1} parent=71 // pred_region
          %590 = dma.done [#allocation14], 256
        $region96: #{tpu_custom_call.1} parent=71 // pred_fallthru
          _
        // Predicated region
        $region97: #{tpu_custom_call.1} parent=71 // pred_check
          %p591 = pneg %p254
        $region98: #{tpu_custom_call.1} parent=71 // pred_check_branch
          %593 = sbr.rel (%p591) target = $region100
        $region99: #{tpu_custom_call.1} parent=71 // pred_region
          %594 = dma.done [#allocation14], 16
        $region100: #{tpu_custom_call.1} parent=71 // pred_fallthru
          _
        // Predicated region
        $region101: #{tpu_custom_call.1} parent=71 // pred_check
          %p595 = pneg %p317
        $region102: #{tpu_custom_call.1} parent=71 // pred_check_branch
          %597 = sbr.rel (%p595) target = $region104
        $region103: #{tpu_custom_call.1} parent=71 // pred_region
          %598 = dma.done [#allocation17], 1024
        $region104: #{tpu_custom_call.1} parent=71 // pred_fallthru
          _
        // Predicated region
        $region105: #{tpu_custom_call.1} parent=71 // pred_check
          %p599 = pneg %p338
        $region106: #{tpu_custom_call.1} parent=71 // pred_check_branch
          %601 = sbr.rel (%p599) target = $region108
        $region107: #{tpu_custom_call.1} parent=71 // pred_region
          %602 = dma.done [#allocation17], 8192
        $region108: #{tpu_custom_call.1} parent=71 // pred_fallthru
          _
        %s603 = sand.u32 %s63, 1
        %s604 = scalar_lea.sflag [#allocation5], %s603
        %s605 = sand.u32 %s63, 1
        %s606 = smul.addr %s605, 4
        %s607 = scalar_lea.vmem [#allocation4], %s606
        %p608 = pneg %p76
        %p609 = pneg %p73
        %s610 = sand.u32 %s41, 1
        %s611 = scalar_lea.sflag [#allocation8], %s610
        %s612 = sand.u32 %s89, 1
        %s613 = smul.addr %s612, 4
        %s614 = scalar_lea.vmem [#allocation7], %s613
        %p615 = pneg %p102
        %p616 = pneg %p99
        %p617 = scmp.lt.s32.totalorder %s45, 1
        %s618 = scalar_select %p617, %s45, 1
        %s619 = scalar_lea.vmem %s2, %s618
        %p620 = pneg %p128
        %p621 = pneg %p125
        %p622 = pneg %p149
        %p623 = pneg %p146
        %p624 = pneg %p170
        %p625 = pneg %p167
        %p626 = pneg %p191
        %p627 = pneg %p188
        %p628 = pneg %p212
        %p629 = pneg %p209
        %p630 = pneg %p233
        %p631 = pneg %p230
        %p632 = pneg %p254
        %p633 = pneg %p251
        %p634 = pneg %p275
        %p635 = pneg %p272
        %p636 = pneg %p296
        %p637 = pneg %p293
        %p638 = pneg %p317
        %p639 = pneg %p314
        %p640 = pneg %p338
        %p641 = pneg %p335
        %p642 = pneg %p366
        %p643 = pneg %p363
        %s644 = sand.u32 %s353, 1
        %s645 = scalar_lea.sflag [#allocation6], %s644
        %s646 = sand.u32 %s353, 1
        %s647 = smul.addr %s646, 8
        %s648 = scalar_lea.vmem [#allocation19], %s647
        %p649 = pneg %p394
        %p650 = pneg %p391
        %s651 = sand.u32 %s381, 1
        %s652 = scalar_lea.sflag [#allocation21], %s651
        %s653 = sand.u32 %s381, 1
        %s654 = smul.addr %s653, 8
        %s655 = scalar_lea.vmem [#allocation20], %s654
        %p656 = scmp.lt.s32.totalorder %s45, 1
        %s657 = scalar_select %p656, %s45, 1
        %s658 = scalar_lea.vmem %s2, %s657
        %p660 = scmp.eq.s32.totalorder %s46, 0
        // Predicated region
        $region109: #{tpu_custom_call.1} parent=71 // pred_check
          %p661 = pneg %p660
        $region110: #{tpu_custom_call.1} parent=71 // pred_check_branch
          %663 = sbr.rel (%p661) target = $region112
        $region111: #{tpu_custom_call.1} parent=71 // pred_region
          %v664 = vld [vmem:[%s570] sm:$0xf]
          %v665 = vld [vmem:[%s5] sm:$0xf]
          %v666 = vld [vmem:[%s5 + $0x4] sm:$0xf]
          %v667 = vld [vmem:[%s5 + $0x8] sm:$0xf]
          %v668 = vld [vmem:[%s5 + $0xc] sm:$0xf]
          %v669 = vld [vmem:[#allocation12] sm:$0x1]
          %v671 = vlaneseq
          %v672 = vshrl.u32 %v671, 7
          %v673 = vsub.s32 0, %v672
          %v674 = vrot.slane %v669, %v673
          %v680 = vunpack.c.l.b16 %v665
          %v681 = vunpack.c.l.b16 %v666
          %v682 = vunpack.c.l.b16 %v667
          %v683 = vunpack.c.l.b16 %v668
          %v684 = vpack.c.b16 %v681, %v680
          %v685 = vpack.c.b16 %v683, %v682
          %vm688 = vcmask 261120
          %v690 = vsel %vm688, %v664, 0
          %692 = vmatprep.subr.bf16.mxu0 0
          %693 = vmatpush1.bf16.msra.mxu0 %v684
          %694 = vmatprep.subr.bf16.mxu0 0
          %695 = vmatpush1.bf16.msra.mxu0 %v685
          %696 = vmatprep.subr.bf16.mxu0 0
          %697 = vmatpush1.bf16.msra.mxu0 0
          %698 = vmatprep.subr.bf16.mxu0 0
          %699 = vmatpush1.bf16.msra.mxu0 0
          %700 = vmatprep.subr.bf16.mxu0 0
          %701 = vmatpush1.bf16.msra.mxu0 0
          %702 = vmatprep.subr.bf16.mxu0 0
          %703 = vmatpush1.bf16.msra.mxu0 0
          %704 = vmatprep.subr.bf16.mxu0 0
          %705 = vmatpush1.bf16.msra.mxu0 0
          %706 = vmatprep.subr.bf16.mxu0 0
          %707 = vmatpush1.bf16.msra.mxu0 0
          %708 = vmatprep.subr.bf16.mxu0 0
          %709 = vmatpush1.bf16.msra.mxu0 0
          %710 = vmatprep.subr.bf16.mxu0 0
          %711 = vmatpush1.bf16.msra.mxu0 0
          %712 = vmatprep.subr.bf16.mxu0 0
          %713 = vmatpush1.bf16.msra.mxu0 0
          %714 = vmatprep.subr.bf16.mxu0 0
          %715 = vmatpush1.bf16.msra.mxu0 0
          %716 = vmatprep.subr.bf16.mxu0 0
          %717 = vmatpush1.bf16.msra.mxu0 0
          %718 = vmatprep.subr.bf16.mxu0 0
          %719 = vmatpush1.bf16.msra.mxu0 0
          %720 = vmatprep.subr.bf16.mxu0 0
          %721 = vmatpush1.bf16.msra.mxu0 0
          %722 = vmatprep.subr.bf16.mxu0 0
          %723 = vmatpush1.bf16.msra.mxu0 0
          %724 = vmatprep.mubr.bf16.mxu0 0
          %725 = vmatmul.mubr.bf16.gmra.mrb[0].mxu0 %v690
          %v726 = vpop.f32.mrb[0].mxu0
          %v727 = vadd.f32 %v674, %v726
          %v728 = vpop.f32.mrb[0].mxu0
          %v729 = vpop.f32.mrb[0].mxu0
          %v730 = vpop.f32.mrb[0].mxu0
          %731 = vdwg.mxu0
          %vm732 = vcmp.gt.f32.partialorder %v727, 0.0
          %v733 = vmul.f32 %v727, 0.1
          %v734 = vsel %vm732, %v727, %v733
          %v735 = vld [vmem:[%s9] sm:$0xf]
          %v736 = vld [vmem:[%s9 + $0x4] sm:$0xf]
          %v737 = vld [vmem:[%s9 + $0x8] sm:$0xf]
          %v738 = vld [vmem:[%s9 + $0xc] sm:$0xf]
          %v739 = vld [vmem:[%s10] sm:$0x1]
          %v741 = vlaneseq
          %v742 = vshrl.u32 %v741, 7
          %v743 = vsub.s32 0, %v742
          %v744 = vrot.slane %v739, %v743
          %v750 = vunpack.c.l.b16 %v735
          %v751 = vunpack.c.l.b16 %v736
          %v752 = vunpack.c.l.b16 %v737
          %v753 = vunpack.c.l.b16 %v738
          %v754 = vpack.c.b16 %v751, %v750
          %v755 = vpack.c.b16 %v753, %v752
          %758 = vmatprep.subr.bf16.mxu0 0
          %759 = vmatpush1.bf16.msra.mxu0 %v754
          %760 = vmatprep.subr.bf16.mxu0 0
          %761 = vmatpush1.bf16.msra.mxu0 %v755
          %762 = vmatprep.subr.bf16.mxu0 0
          %763 = vmatpush1.bf16.msra.mxu0 0
          %764 = vmatprep.subr.bf16.mxu0 0
          %765 = vmatpush1.bf16.msra.mxu0 0
          %766 = vmatprep.subr.bf16.mxu0 0
          %767 = vmatpush1.bf16.msra.mxu0 0
          %768 = vmatprep.subr.bf16.mxu0 0
          %769 = vmatpush1.bf16.msra.mxu0 0
          %770 = vmatprep.subr.bf16.mxu0 0
          %771 = vmatpush1.bf16.msra.mxu0 0
          %772 = vmatprep.subr.bf16.mxu0 0
          %773 = vmatpush1.bf16.msra.mxu0 0
          %774 = vmatprep.subr.bf16.mxu0 0
          %775 = vmatpush1.bf16.msra.mxu0 0
          %776 = vmatprep.subr.bf16.mxu0 0
          %777 = vmatpush1.bf16.msra.mxu0 0
          %778 = vmatprep.subr.bf16.mxu0 0
          %779 = vmatpush1.bf16.msra.mxu0 0
          %780 = vmatprep.subr.bf16.mxu0 0
          %781 = vmatpush1.bf16.msra.mxu0 0
          %782 = vmatprep.subr.bf16.mxu0 0
          %783 = vmatpush1.bf16.msra.mxu0 0
          %784 = vmatprep.subr.bf16.mxu0 0
          %785 = vmatpush1.bf16.msra.mxu0 0
          %786 = vmatprep.subr.bf16.mxu0 0
          %787 = vmatpush1.bf16.msra.mxu0 0
          %788 = vmatprep.subr.bf16.mxu0 0
          %789 = vmatpush1.bf16.msra.mxu0 0
          %790 = vmatprep.mubr.bf16.mxu0 0
          %791 = vmatmul.mubr.bf16.gmra.mrb[0].mxu0 %v690
          %v792 = vpop.f32.mrb[0].mxu0
          %v793 = vadd.f32 %v744, %v792
          %v794 = vpop.f32.mrb[0].mxu0
          %v795 = vpop.f32.mrb[0].mxu0
          %v796 = vpop.f32.mrb[0].mxu0
          %797 = vdwg.mxu0
          %vm798 = vcmp.gt.f32.partialorder %v793, 0.0
          %v799 = vmul.f32 %v793, 0.1
          %v800 = vsel %vm798, %v793, %v799
          %801 = vxpose.xlu0.b32.start [1/16] %v734, 128
          %802 = vxpose.xlu0.b32.cont [2/16] 0.0, 128
          %803 = vxpose.xlu0.b32.cont [3/16] 0.0, 128
          %804 = vxpose.xlu0.b32.cont [4/16] 0.0, 128
          %805 = vxpose.xlu0.b32.cont [5/16] 0.0, 128
          %806 = vxpose.xlu0.b32.cont [6/16] 0.0, 128
          %807 = vxpose.xlu0.b32.cont [7/16] 0.0, 128
          %808 = vxpose.xlu0.b32.cont [8/16] 0.0, 128
          %809 = vxpose.xlu0.b32.cont [9/16] 0.0, 128
          %810 = vxpose.xlu0.b32.cont [10/16] 0.0, 128
          %811 = vxpose.xlu0.b32.cont [11/16] 0.0, 128
          %812 = vxpose.xlu0.b32.cont [12/16] 0.0, 128
          %813 = vxpose.xlu0.b32.cont [13/16] 0.0, 128
          %814 = vxpose.xlu0.b32.cont [14/16] 0.0, 128
          %815 = vxpose.xlu0.b32.cont [15/16] 0.0, 128
          %816 = vxpose.xlu0.b32.end [16/16] 0.0, 128
          %v817 = vpop.trf.xlu0
          %v818 = vpop.trf.xlu0
          %v819 = vpop.trf.xlu0
          %v820 = vpop.trf.xlu0
          %v821 = vpop.trf.xlu0
          %v822 = vpop.trf.xlu0
          %v823 = vpop.trf.xlu0
          %v824 = vpop.trf.xlu0
          %v825 = vpop.trf.xlu0
          %v826 = vpop.trf.xlu0
          %v827 = vpop.trf.xlu0
          %v828 = vpop.trf.xlu0
          %v829 = vpop.trf.xlu0
          %v830 = vpop.trf.xlu0
          %v831 = vpop.trf.xlu0
          %v832 = vpop.trf.xlu0
          %v833 = vpack.c.bf16 %v818, %v817
          %v834 = vpack.c.bf16 %v820, %v819
          %v835 = vpack.c.bf16 %v822, %v821
          %v836 = vpack.c.bf16 %v824, %v823
          %v837 = vpack.c.bf16 %v826, %v825
          %v838 = vpack.c.bf16 %v828, %v827
          %v839 = vpack.c.bf16 %v830, %v829
          %v840 = vpack.c.bf16 %v832, %v831
          %841 = vxpose.xlu0.b32.start [1/16] %v800, 128
          %842 = vxpose.xlu0.b32.cont [2/16] 0.0, 128
          %843 = vxpose.xlu0.b32.cont [3/16] 0.0, 128
          %844 = vxpose.xlu0.b32.cont [4/16] 0.0, 128
          %845 = vxpose.xlu0.b32.cont [5/16] 0.0, 128
          %846 = vxpose.xlu0.b32.cont [6/16] 0.0, 128
          %847 = vxpose.xlu0.b32.cont [7/16] 0.0, 128
          %848 = vxpose.xlu0.b32.cont [8/16] 0.0, 128
          %849 = vxpose.xlu0.b32.cont [9/16] 0.0, 128
          %850 = vxpose.xlu0.b32.cont [10/16] 0.0, 128
          %851 = vxpose.xlu0.b32.cont [11/16] 0.0, 128
          %852 = vxpose.xlu0.b32.cont [12/16] 0.0, 128
          %853 = vxpose.xlu0.b32.cont [13/16] 0.0, 128
          %854 = vxpose.xlu0.b32.cont [14/16] 0.0, 128
          %855 = vxpose.xlu0.b32.cont [15/16] 0.0, 128
          %856 = vxpose.xlu0.b32.end [16/16] 0.0, 128
          %v857 = vpop.trf.xlu0
          %v858 = vpop.trf.xlu0
          %v859 = vpop.trf.xlu0
          %v860 = vpop.trf.xlu0
          %v861 = vpop.trf.xlu0
          %v862 = vpop.trf.xlu0
          %v863 = vpop.trf.xlu0
          %v864 = vpop.trf.xlu0
          %v865 = vpop.trf.xlu0
          %v866 = vpop.trf.xlu0
          %v867 = vpop.trf.xlu0
          %v868 = vpop.trf.xlu0
          %v869 = vpop.trf.xlu0
          %v870 = vpop.trf.xlu0
          %v871 = vpop.trf.xlu0
          %v872 = vpop.trf.xlu0
          %v873 = vpack.c.bf16 %v858, %v857
          %v874 = vpack.c.bf16 %v860, %v859
          %v875 = vpack.c.bf16 %v862, %v861
          %v876 = vpack.c.bf16 %v864, %v863
          %v877 = vpack.c.bf16 %v866, %v865
          %v878 = vpack.c.bf16 %v868, %v867
          %v879 = vpack.c.bf16 %v870, %v869
          %v880 = vpack.c.bf16 %v872, %v871
          %v881 = vld [vmem:[#allocation16] sm:$0xf]
          %v882 = vld [vmem:[#allocation16 + $0x4] sm:$0xf]
          %v883 = vld [vmem:[#allocation16 + $0x8] sm:$0xf]
          %v884 = vld [vmem:[#allocation16 + $0xc] sm:$0xf]
          %v885 = vld [vmem:[#allocation16 + $0x10] sm:$0xf]
          %v886 = vld [vmem:[#allocation16 + $0x14] sm:$0xf]
          %v887 = vld [vmem:[#allocation16 + $0x18] sm:$0xf]
          %v888 = vld [vmem:[#allocation16 + $0x1c] sm:$0xf]
          %v889 = vld [vmem:[#allocation16 + $0x20] sm:$0xf]
          %v890 = vld [vmem:[#allocation16 + $0x24] sm:$0xf]
          %v891 = vld [vmem:[#allocation16 + $0x28] sm:$0xf]
          %v892 = vld [vmem:[#allocation16 + $0x2c] sm:$0xf]
          %v893 = vld [vmem:[#allocation16 + $0x30] sm:$0xf]
          %v894 = vld [vmem:[#allocation16 + $0x34] sm:$0xf]
          %v895 = vld [vmem:[#allocation16 + $0x38] sm:$0xf]
          %v896 = vld [vmem:[#allocation16 + $0x3c] sm:$0xf]
          %v913 = vunpack.c.l.b16 %v881
          %v914 = vunpack.c.l.b16 %v882
          %v915 = vunpack.c.l.b16 %v883
          %v916 = vunpack.c.l.b16 %v884
          %v917 = vunpack.c.l.b16 %v885
          %v918 = vunpack.c.l.b16 %v886
          %v919 = vunpack.c.l.b16 %v887
          %v920 = vunpack.c.l.b16 %v888
          %v921 = vunpack.c.l.b16 %v889
          %v922 = vunpack.c.l.b16 %v890
          %v923 = vunpack.c.l.b16 %v891
          %v924 = vunpack.c.l.b16 %v892
          %v925 = vunpack.c.l.b16 %v893
          %v926 = vunpack.c.l.b16 %v894
          %v927 = vunpack.c.l.b16 %v895
          %v928 = vunpack.c.l.b16 %v896
          %v929 = vpack.c.b16 %v914, %v913
          %v930 = vpack.c.b16 %v916, %v915
          %v931 = vpack.c.b16 %v918, %v917
          %v932 = vpack.c.b16 %v920, %v919
          %v933 = vpack.c.b16 %v922, %v921
          %v934 = vpack.c.b16 %v924, %v923
          %v935 = vpack.c.b16 %v926, %v925
          %v936 = vpack.c.b16 %v928, %v927
          %945 = vmatprep.subr.bf16.mxu0 0
          %946 = vmatpush1.bf16.msra.mxu0 %v833
          %947 = vmatprep.subr.bf16.mxu0 0
          %948 = vmatpush1.bf16.msra.mxu0 %v834
          %949 = vmatprep.subr.bf16.mxu0 0
          %950 = vmatpush1.bf16.msra.mxu0 %v835
          %951 = vmatprep.subr.bf16.mxu0 0
          %952 = vmatpush1.bf16.msra.mxu0 %v836
          %953 = vmatprep.subr.bf16.mxu0 0
          %954 = vmatpush1.bf16.msra.mxu0 %v837
          %955 = vmatprep.subr.bf16.mxu0 0
          %956 = vmatpush1.bf16.msra.mxu0 %v838
          %957 = vmatprep.subr.bf16.mxu0 0
          %958 = vmatpush1.bf16.msra.mxu0 %v839
          %959 = vmatprep.subr.bf16.mxu0 0
          %960 = vmatpush1.bf16.msra.mxu0 %v840
          %961 = vmatprep.subr.bf16.mxu0 0
          %962 = vmatpush1.bf16.msra.mxu0 0
          %963 = vmatprep.subr.bf16.mxu0 0
          %964 = vmatpush1.bf16.msra.mxu0 0
          %965 = vmatprep.subr.bf16.mxu0 0
          %966 = vmatpush1.bf16.msra.mxu0 0
          %967 = vmatprep.subr.bf16.mxu0 0
          %968 = vmatpush1.bf16.msra.mxu0 0
          %969 = vmatprep.subr.bf16.mxu0 0
          %970 = vmatpush1.bf16.msra.mxu0 0
          %971 = vmatprep.subr.bf16.mxu0 0
          %972 = vmatpush1.bf16.msra.mxu0 0
          %973 = vmatprep.subr.bf16.mxu0 0
          %974 = vmatpush1.bf16.msra.mxu0 0
          %975 = vmatprep.subr.bf16.mxu0 0
          %976 = vmatpush1.bf16.msra.mxu0 0
          %977 = vmatprep.mubr.bf16.mxu0 0
          %978 = vmatmul.mubr.bf16.gmra.mrb[0].mxu0 %v929
          %v979 = vpop.f32.mrb[0].mxu0
          %v980 = vadd.f32 0.0, %v979
          %v981 = vpop.f32.mrb[0].mxu0
          %v982 = vpop.f32.mrb[0].mxu0
          %v983 = vadd.f32 0.0, %v982
          %v984 = vpop.f32.mrb[0].mxu0
          %985 = vmatprep.mubr.bf16.mxu0 0
          %986 = vmatmul.mubr.bf16.gmra.mrb[0].mxu0 %v930
          %v987 = vpop.f32.mrb[0].mxu0
          %v988 = vadd.f32 0.0, %v987
          %v989 = vpop.f32.mrb[0].mxu0
          %v990 = vpop.f32.mrb[0].mxu0
          %v991 = vadd.f32 0.0, %v990
          %v992 = vpop.f32.mrb[0].mxu0
          %993 = vmatprep.mubr.bf16.mxu0 0
          %994 = vmatmul.mubr.bf16.gmra.mrb[0].mxu0 %v931
          %v995 = vpop.f32.mrb[0].mxu0
          %v996 = vadd.f32 0.0, %v995
          %v997 = vpop.f32.mrb[0].mxu0
          %v998 = vpop.f32.mrb[0].mxu0
          %v999 = vadd.f32 0.0, %v998
          %v1000 = vpop.f32.mrb[0].mxu0
          %1001 = vmatprep.mubr.bf16.mxu0 0
          %1002 = vmatmul.mubr.bf16.gmra.mrb[0].mxu0 %v932
          %v1003 = vpop.f32.mrb[0].mxu0
          %v1004 = vadd.f32 0.0, %v1003
          %v1005 = vpop.f32.mrb[0].mxu0
          %v1006 = vpop.f32.mrb[0].mxu0
          %v1007 = vadd.f32 0.0, %v1006
          %v1008 = vpop.f32.mrb[0].mxu0
          %1009 = vmatprep.mubr.bf16.mxu0 0
          %1010 = vmatmul.mubr.bf16.gmra.mrb[0].mxu0 %v933
          %v1011 = vpop.f32.mrb[0].mxu0
          %v1012 = vadd.f32 0.0, %v1011
          %v1013 = vpop.f32.mrb[0].mxu0
          %v1014 = vpop.f32.mrb[0].mxu0
          %v1015 = vadd.f32 0.0, %v1014
          %v1016 = vpop.f32.mrb[0].mxu0
          %1017 = vmatprep.mubr.bf16.mxu0 0
          %1018 = vmatmul.mubr.bf16.gmra.mrb[0].mxu0 %v934
          %v1019 = vpop.f32.mrb[0].mxu0
          %v1020 = vadd.f32 0.0, %v1019
          %v1021 = vpop.f32.mrb[0].mxu0
          %v1022 = vpop.f32.mrb[0].mxu0
          %v1023 = vadd.f32 0.0, %v1022
          %v1024 = vpop.f32.mrb[0].mxu0
          %1025 = vmatprep.mubr.bf16.mxu0 0
          %1026 = vmatmul.mubr.bf16.gmra.mrb[0].mxu0 %v935
          %v1027 = vpop.f32.mrb[0].mxu0
          %v1028 = vadd.f32 0.0, %v1027
          %v1029 = vpop.f32.mrb[0].mxu0
          %v1030 = vpop.f32.mrb[0].mxu0
          %v1031 = vadd.f32 0.0, %v1030
          %v1032 = vpop.f32.mrb[0].mxu0
          %1033 = vmatprep.mubr.bf16.mxu0 0
          %1034 = vmatmul.mubr.bf16.gmra.mrb[0].mxu0 %v936
          %v1035 = vpop.f32.mrb[0].mxu0
          %v1036 = vadd.f32 0.0, %v1035
          %v1037 = vpop.f32.mrb[0].mxu0
          %v1038 = vpop.f32.mrb[0].mxu0
          %v1039 = vadd.f32 0.0, %v1038
          %v1040 = vpop.f32.mrb[0].mxu0
          %1041 = vdwg.mxu0
          %v1042 = vpack.c.bf16 %v983, %v980
          %v1043 = vpack.c.bf16 %v991, %v988
          %v1044 = vpack.c.bf16 %v999, %v996
          %v1045 = vpack.c.bf16 %v1007, %v1004
          %v1046 = vpack.c.bf16 %v1015, %v1012
          %v1047 = vpack.c.bf16 %v1023, %v1020
          %v1048 = vpack.c.bf16 %v1031, %v1028
          %v1049 = vpack.c.bf16 %v1039, %v1036
          %vm1050 = vcmask 64512
          %1051 = vst.msk [vmem:[#allocation2] sm:$0xff] %vm1050, %v1042
          %1052 = vst.msk [vmem:[#allocation2 + $0x8] sm:$0xff] %vm1050, %v1043
          %1053 = vst.msk [vmem:[#allocation2 + $0x10] sm:$0xff] %vm1050, %v1044
          %1054 = vst.msk [vmem:[#allocation2 + $0x18] sm:$0xff] %vm1050, %v1045
          %1055 = vst.msk [vmem:[#allocation2 + $0x20] sm:$0xff] %vm1050, %v1046
          %1056 = vst.msk [vmem:[#allocation2 + $0x28] sm:$0xff] %vm1050, %v1047
          %1057 = vst.msk [vmem:[#allocation2 + $0x30] sm:$0xff] %vm1050, %v1048
          %1058 = vst.msk [vmem:[#allocation2 + $0x38] sm:$0xff] %vm1050, %v1049
          %v1059 = vld [vmem:[#allocation18] sm:$0xf]
          %v1060 = vld [vmem:[#allocation18 + $0x4] sm:$0xf]
          %v1061 = vld [vmem:[#allocation18 + $0x8] sm:$0xf]
          %v1062 = vld [vmem:[#allocation18 + $0xc] sm:$0xf]
          %v1063 = vld [vmem:[#allocation18 + $0x10] sm:$0xf]
          %v1064 = vld [vmem:[#allocation18 + $0x14] sm:$0xf]
          %v1065 = vld [vmem:[#allocation18 + $0x18] sm:$0xf]
          %v1066 = vld [vmem:[#allocation18 + $0x1c] sm:$0xf]
          %v1067 = vld [vmem:[#allocation18 + $0x20] sm:$0xf]
          %v1068 = vld [vmem:[#allocation18 + $0x24] sm:$0xf]
          %v1069 = vld [vmem:[#allocation18 + $0x28] sm:$0xf]
          %v1070 = vld [vmem:[#allocation18 + $0x2c] sm:$0xf]
          %v1071 = vld [vmem:[#allocation18 + $0x30] sm:$0xf]
          %v1072 = vld [vmem:[#allocation18 + $0x34] sm:$0xf]
          %v1073 = vld [vmem:[#allocation18 + $0x38] sm:$0xf]
          %v1074 = vld [vmem:[#allocation18 + $0x3c] sm:$0xf]
          %v1091 = vunpack.c.l.b16 %v1059
          %v1092 = vunpack.c.l.b16 %v1060
          %v1093 = vunpack.c.l.b16 %v1061
          %v1094 = vunpack.c.l.b16 %v1062
          %v1095 = vunpack.c.l.b16 %v1063
          %v1096 = vunpack.c.l.b16 %v1064
          %v1097 = vunpack.c.l.b16 %v1065
          %v1098 = vunpack.c.l.b16 %v1066
          %v1099 = vunpack.c.l.b16 %v1067
          %v1100 = vunpack.c.l.b16 %v1068
          %v1101 = vunpack.c.l.b16 %v1069
          %v1102 = vunpack.c.l.b16 %v1070
          %v1103 = vunpack.c.l.b16 %v1071
          %v1104 = vunpack.c.l.b16 %v1072
          %v1105 = vunpack.c.l.b16 %v1073
          %v1106 = vunpack.c.l.b16 %v1074
          %v1107 = vpack.c.b16 %v1092, %v1091
          %v1108 = vpack.c.b16 %v1094, %v1093
          %v1109 = vpack.c.b16 %v1096, %v1095
          %v1110 = vpack.c.b16 %v1098, %v1097
          %v1111 = vpack.c.b16 %v1100, %v1099
          %v1112 = vpack.c.b16 %v1102, %v1101
          %v1113 = vpack.c.b16 %v1104, %v1103
          %v1114 = vpack.c.b16 %v1106, %v1105
          %1123 = vmatprep.subr.bf16.mxu0 0
          %1124 = vmatpush1.bf16.msra.mxu0 %v873
          %1125 = vmatprep.subr.bf16.mxu0 0
          %1126 = vmatpush1.bf16.msra.mxu0 %v874
          %1127 = vmatprep.subr.bf16.mxu0 0
          %1128 = vmatpush1.bf16.msra.mxu0 %v875
          %1129 = vmatprep.subr.bf16.mxu0 0
          %1130 = vmatpush1.bf16.msra.mxu0 %v876
          %1131 = vmatprep.subr.bf16.mxu0 0
          %1132 = vmatpush1.bf16.msra.mxu0 %v877
          %1133 = vmatprep.subr.bf16.mxu0 0
          %1134 = vmatpush1.bf16.msra.mxu0 %v878
          %1135 = vmatprep.subr.bf16.mxu0 0
          %1136 = vmatpush1.bf16.msra.mxu0 %v879
          %1137 = vmatprep.subr.bf16.mxu0 0
          %1138 = vmatpush1.bf16.msra.mxu0 %v880
          %1139 = vmatprep.subr.bf16.mxu0 0
          %1140 = vmatpush1.bf16.msra.mxu0 0
          %1141 = vmatprep.subr.bf16.mxu0 0
          %1142 = vmatpush1.bf16.msra.mxu0 0
          %1143 = vmatprep.subr.bf16.mxu0 0
          %1144 = vmatpush1.bf16.msra.mxu0 0
          %1145 = vmatprep.subr.bf16.mxu0 0
          %1146 = vmatpush1.bf16.msra.mxu0 0
          %1147 = vmatprep.subr.bf16.mxu0 0
          %1148 = vmatpush1.bf16.msra.mxu0 0
          %1149 = vmatprep.subr.bf16.mxu0 0
          %1150 = vmatpush1.bf16.msra.mxu0 0
          %1151 = vmatprep.subr.bf16.mxu0 0
          %1152 = vmatpush1.bf16.msra.mxu0 0
          %1153 = vmatprep.subr.bf16.mxu0 0
          %1154 = vmatpush1.bf16.msra.mxu0 0
          %1155 = vmatprep.mubr.bf16.mxu0 0
          %1156 = vmatmul.mubr.bf16.gmra.mrb[0].mxu0 %v1107
          %v1157 = vpop.f32.mrb[0].mxu0
          %v1158 = vadd.f32 0.0, %v1157
          %v1159 = vpop.f32.mrb[0].mxu0
          %v1160 = vpop.f32.mrb[0].mxu0
          %v1161 = vadd.f32 0.0, %v1160
          %v1162 = vpop.f32.mrb[0].mxu0
          %1163 = vmatprep.mubr.bf16.mxu0 0
          %1164 = vmatmul.mubr.bf16.gmra.mrb[0].mxu0 %v1108
          %v1165 = vpop.f32.mrb[0].mxu0
          %v1166 = vadd.f32 0.0, %v1165
          %v1167 = vpop.f32.mrb[0].mxu0
          %v1168 = vpop.f32.mrb[0].mxu0
          %v1169 = vadd.f32 0.0, %v1168
          %v1170 = vpop.f32.mrb[0].mxu0
          %1171 = vmatprep.mubr.bf16.mxu0 0
          %1172 = vmatmul.mubr.bf16.gmra.mrb[0].mxu0 %v1109
          %v1173 = vpop.f32.mrb[0].mxu0
          %v1174 = vadd.f32 0.0, %v1173
          %v1175 = vpop.f32.mrb[0].mxu0
          %v1176 = vpop.f32.mrb[0].mxu0
          %v1177 = vadd.f32 0.0, %v1176
          %v1178 = vpop.f32.mrb[0].mxu0
          %1179 = vmatprep.mubr.bf16.mxu0 0
          %1180 = vmatmul.mubr.bf16.gmra.mrb[0].mxu0 %v1110
          %v1181 = vpop.f32.mrb[0].mxu0
          %v1182 = vadd.f32 0.0, %v1181
          %v1183 = vpop.f32.mrb[0].mxu0
          %v1184 = vpop.f32.mrb[0].mxu0
          %v1185 = vadd.f32 0.0, %v1184
          %v1186 = vpop.f32.mrb[0].mxu0
          %1187 = vmatprep.mubr.bf16.mxu0 0
          %1188 = vmatmul.mubr.bf16.gmra.mrb[0].mxu0 %v1111
          %v1189 = vpop.f32.mrb[0].mxu0
          %v1190 = vadd.f32 0.0, %v1189
          %v1191 = vpop.f32.mrb[0].mxu0
          %v1192 = vpop.f32.mrb[0].mxu0
          %v1193 = vadd.f32 0.0, %v1192
          %v1194 = vpop.f32.mrb[0].mxu0
          %1195 = vmatprep.mubr.bf16.mxu0 0
          %1196 = vmatmul.mubr.bf16.gmra.mrb[0].mxu0 %v1112
          %v1197 = vpop.f32.mrb[0].mxu0
          %v1198 = vadd.f32 0.0, %v1197
          %v1199 = vpop.f32.mrb[0].mxu0
          %v1200 = vpop.f32.mrb[0].mxu0
          %v1201 = vadd.f32 0.0, %v1200
          %v1202 = vpop.f32.mrb[0].mxu0
          %1203 = vmatprep.mubr.bf16.mxu0 0
          %1204 = vmatmul.mubr.bf16.gmra.mrb[0].mxu0 %v1113
          %v1205 = vpop.f32.mrb[0].mxu0
          %v1206 = vadd.f32 0.0, %v1205
          %v1207 = vpop.f32.mrb[0].mxu0
          %v1208 = vpop.f32.mrb[0].mxu0
          %v1209 = vadd.f32 0.0, %v1208
          %v1210 = vpop.f32.mrb[0].mxu0
          %1211 = vmatprep.mubr.bf16.mxu0 0
          %1212 = vmatmul.mubr.bf16.gmra.mrb[0].mxu0 %v1114
          %v1213 = vpop.f32.mrb[0].mxu0
          %v1214 = vadd.f32 0.0, %v1213
          %v1215 = vpop.f32.mrb[0].mxu0
          %v1216 = vpop.f32.mrb[0].mxu0
          %v1217 = vadd.f32 0.0, %v1216
          %v1218 = vpop.f32.mrb[0].mxu0
          %1219 = vdwg.mxu0
          %v1220 = vpack.c.bf16 %v1161, %v1158
          %v1221 = vpack.c.bf16 %v1169, %v1166
          %v1222 = vpack.c.bf16 %v1177, %v1174
          %v1223 = vpack.c.bf16 %v1185, %v1182
          %v1224 = vpack.c.bf16 %v1193, %v1190
          %v1225 = vpack.c.bf16 %v1201, %v1198
          %v1226 = vpack.c.bf16 %v1209, %v1206
          %v1227 = vpack.c.bf16 %v1217, %v1214
          %1228 = vst.msk [vmem:[#allocation3] sm:$0xff] %vm1050, %v1220
          %1229 = vst.msk [vmem:[#allocation3 + $0x8] sm:$0xff] %vm1050, %v1221
          %1230 = vst.msk [vmem:[#allocation3 + $0x10] sm:$0xff] %vm1050, %v1222
          %1231 = vst.msk [vmem:[#allocation3 + $0x18] sm:$0xff] %vm1050, %v1223
          %1232 = vst.msk [vmem:[#allocation3 + $0x20] sm:$0xff] %vm1050, %v1224
          %1233 = vst.msk [vmem:[#allocation3 + $0x28] sm:$0xff] %vm1050, %v1225
          %1234 = vst.msk [vmem:[#allocation3 + $0x30] sm:$0xff] %vm1050, %v1226
          %1235 = vst.msk [vmem:[#allocation3 + $0x38] sm:$0xff] %vm1050, %v1227
          %s1236 = scalar_lea.vmem [#allocation18], 64
          %v1237 = vld [vmem:[%s1236] sm:$0xf]
          %v1238 = vld [vmem:[%s1236 + $0x4] sm:$0xf]
          %v1239 = vld [vmem:[%s1236 + $0x8] sm:$0xf]
          %v1240 = vld [vmem:[%s1236 + $0xc] sm:$0xf]
          %v1241 = vld [vmem:[%s1236 + $0x10] sm:$0xf]
          %v1242 = vld [vmem:[%s1236 + $0x14] sm:$0xf]
          %v1243 = vld [vmem:[%s1236 + $0x18] sm:$0xf]
          %v1244 = vld [vmem:[%s1236 + $0x1c] sm:$0xf]
          %v1245 = vld [vmem:[%s1236 + $0x20] sm:$0xf]
          %v1246 = vld [vmem:[%s1236 + $0x24] sm:$0xf]
          %v1247 = vld [vmem:[%s1236 + $0x28] sm:$0xf]
          %v1248 = vld [vmem:[%s1236 + $0x2c] sm:$0xf]
          %v1249 = vld [vmem:[%s1236 + $0x30] sm:$0xf]
          %v1250 = vld [vmem:[%s1236 + $0x34] sm:$0xf]
          %v1251 = vld [vmem:[%s1236 + $0x38] sm:$0xf]
          %v1252 = vld [vmem:[%s1236 + $0x3c] sm:$0xf]
          %v1269 = vunpack.c.l.b16 %v1237
          %v1270 = vunpack.c.l.b16 %v1238
          %v1271 = vunpack.c.l.b16 %v1239
          %v1272 = vunpack.c.l.b16 %v1240
          %v1273 = vunpack.c.l.b16 %v1241
          %v1274 = vunpack.c.l.b16 %v1242
          %v1275 = vunpack.c.l.b16 %v1243
          %v1276 = vunpack.c.l.b16 %v1244
          %v1277 = vunpack.c.l.b16 %v1245
          %v1278 = vunpack.c.l.b16 %v1246
          %v1279 = vunpack.c.l.b16 %v1247
          %v1280 = vunpack.c.l.b16 %v1248
          %v1281 = vunpack.c.l.b16 %v1249
          %v1282 = vunpack.c.l.b16 %v1250
          %v1283 = vunpack.c.l.b16 %v1251
          %v1284 = vunpack.c.l.b16 %v1252
          %v1285 = vpack.c.b16 %v1270, %v1269
          %v1286 = vpack.c.b16 %v1272, %v1271
          %v1287 = vpack.c.b16 %v1274, %v1273
          %v1288 = vpack.c.b16 %v1276, %v1275
          %v1289 = vpack.c.b16 %v1278, %v1277
          %v1290 = vpack.c.b16 %v1280, %v1279
          %v1291 = vpack.c.b16 %v1282, %v1281
          %v1292 = vpack.c.b16 %v1284, %v1283
          %1301 = vmatprep.subr.bf16.mxu0 0
          %1302 = vmatpush1.bf16.msra.mxu0 %v873
          %1303 = vmatprep.subr.bf16.mxu0 0
          %1304 = vmatpush1.bf16.msra.mxu0 %v874
          %1305 = vmatprep.subr.bf16.mxu0 0
          %1306 = vmatpush1.bf16.msra.mxu0 %v875
          %1307 = vmatprep.subr.bf16.mxu0 0
          %1308 = vmatpush1.bf16.msra.mxu0 %v876
          %1309 = vmatprep.subr.bf16.mxu0 0
          %1310 = vmatpush1.bf16.msra.mxu0 %v877
          %1311 = vmatprep.subr.bf16.mxu0 0
          %1312 = vmatpush1.bf16.msra.mxu0 %v878
          %1313 = vmatprep.subr.bf16.mxu0 0
          %1314 = vmatpush1.bf16.msra.mxu0 %v879
          %1315 = vmatprep.subr.bf16.mxu0 0
          %1316 = vmatpush1.bf16.msra.mxu0 %v880
          %1317 = vmatprep.subr.bf16.mxu0 0
          %1318 = vmatpush1.bf16.msra.mxu0 0
          %1319 = vmatprep.subr.bf16.mxu0 0
          %1320 = vmatpush1.bf16.msra.mxu0 0
          %1321 = vmatprep.subr.bf16.mxu0 0
          %1322 = vmatpush1.bf16.msra.mxu0 0
          %1323 = vmatprep.subr.bf16.mxu0 0
          %1324 = vmatpush1.bf16.msra.mxu0 0
          %1325 = vmatprep.subr.bf16.mxu0 0
          %1326 = vmatpush1.bf16.msra.mxu0 0
          %1327 = vmatprep.subr.bf16.mxu0 0
          %1328 = vmatpush1.bf16.msra.mxu0 0
          %1329 = vmatprep.subr.bf16.mxu0 0
          %1330 = vmatpush1.bf16.msra.mxu0 0
          %1331 = vmatprep.subr.bf16.mxu0 0
          %1332 = vmatpush1.bf16.msra.mxu0 0
          %1333 = vmatprep.mubr.bf16.mxu0 0
          %1334 = vmatmul.mubr.bf16.gmra.mrb[0].mxu0 %v1285
          %v1335 = vpop.f32.mrb[0].mxu0
          %v1336 = vadd.f32 0.0, %v1335
          %v1337 = vpop.f32.mrb[0].mxu0
          %v1338 = vpop.f32.mrb[0].mxu0
          %v1339 = vadd.f32 0.0, %v1338
          %v1340 = vpop.f32.mrb[0].mxu0
          %1341 = vmatprep.mubr.bf16.mxu0 0
          %1342 = vmatmul.mubr.bf16.gmra.mrb[0].mxu0 %v1286
          %v1343 = vpop.f32.mrb[0].mxu0
          %v1344 = vadd.f32 0.0, %v1343
          %v1345 = vpop.f32.mrb[0].mxu0
          %v1346 = vpop.f32.mrb[0].mxu0
          %v1347 = vadd.f32 0.0, %v1346
          %v1348 = vpop.f32.mrb[0].mxu0
          %1349 = vmatprep.mubr.bf16.mxu0 0
          %1350 = vmatmul.mubr.bf16.gmra.mrb[0].mxu0 %v1287
          %v1351 = vpop.f32.mrb[0].mxu0
          %v1352 = vadd.f32 0.0, %v1351
          %v1353 = vpop.f32.mrb[0].mxu0
          %v1354 = vpop.f32.mrb[0].mxu0
          %v1355 = vadd.f32 0.0, %v1354
          %v1356 = vpop.f32.mrb[0].mxu0
          %1357 = vmatprep.mubr.bf16.mxu0 0
          %1358 = vmatmul.mubr.bf16.gmra.mrb[0].mxu0 %v1288
          %v1359 = vpop.f32.mrb[0].mxu0
          %v1360 = vadd.f32 0.0, %v1359
          %v1361 = vpop.f32.mrb[0].mxu0
          %v1362 = vpop.f32.mrb[0].mxu0
          %v1363 = vadd.f32 0.0, %v1362
          %v1364 = vpop.f32.mrb[0].mxu0
          %1365 = vmatprep.mubr.bf16.mxu0 0
          %1366 = vmatmul.mubr.bf16.gmra.mrb[0].mxu0 %v1289
          %v1367 = vpop.f32.mrb[0].mxu0
          %v1368 = vadd.f32 0.0, %v1367
          %v1369 = vpop.f32.mrb[0].mxu0
          %v1370 = vpop.f32.mrb[0].mxu0
          %v1371 = vadd.f32 0.0, %v1370
          %v1372 = vpop.f32.mrb[0].mxu0
          %1373 = vmatprep.mubr.bf16.mxu0 0
          %1374 = vmatmul.mubr.bf16.gmra.mrb[0].mxu0 %v1290
          %v1375 = vpop.f32.mrb[0].mxu0
          %v1376 = vadd.f32 0.0, %v1375
          %v1377 = vpop.f32.mrb[0].mxu0
          %v1378 = vpop.f32.mrb[0].mxu0
          %v1379 = vadd.f32 0.0, %v1378
          %v1380 = vpop.f32.mrb[0].mxu0
          %1381 = vmatprep.mubr.bf16.mxu0 0
          %1382 = vmatmul.mubr.bf16.gmra.mrb[0].mxu0 %v1291
          %v1383 = vpop.f32.mrb[0].mxu0
          %v1384 = vadd.f32 0.0, %v1383
          %v1385 = vpop.f32.mrb[0].mxu0
          %v1386 = vpop.f32.mrb[0].mxu0
          %v1387 = vadd.f32 0.0, %v1386
          %v1388 = vpop.f32.mrb[0].mxu0
          %1389 = vmatprep.mubr.bf16.mxu0 0
          %1390 = vmatmul.mubr.bf16.gmra.mrb[0].mxu0 %v1292
          %v1391 = vpop.f32.mrb[0].mxu0
          %v1392 = vadd.f32 0.0, %v1391
          %v1393 = vpop.f32.mrb[0].mxu0
          %v1394 = vpop.f32.mrb[0].mxu0
          %v1395 = vadd.f32 0.0, %v1394
          %v1396 = vpop.f32.mrb[0].mxu0
          %1397 = vdwg.mxu0
          %v1398 = vpack.c.bf16 %v1339, %v1336
          %v1399 = vpack.c.bf16 %v1347, %v1344
          %v1400 = vpack.c.bf16 %v1355, %v1352
          %v1401 = vpack.c.bf16 %v1363, %v1360
          %v1402 = vpack.c.bf16 %v1371, %v1368
          %v1403 = vpack.c.bf16 %v1379, %v1376
          %v1404 = vpack.c.bf16 %v1387, %v1384
          %v1405 = vpack.c.bf16 %v1395, %v1392
          %1414 = vrot.lane.b32.xlu0 %v1398, 8
          %v1415 = vpop.permute.xlu0 %1414
          %1416 = vrot.lane.b32.xlu0 %v1399, 8
          %v1417 = vpop.permute.xlu0 %1416
          %1418 = vrot.lane.b32.xlu0 %v1400, 8
          %v1419 = vpop.permute.xlu0 %1418
          %1420 = vrot.lane.b32.xlu0 %v1401, 8
          %v1421 = vpop.permute.xlu0 %1420
          %1422 = vrot.lane.b32.xlu0 %v1402, 8
          %v1423 = vpop.permute.xlu0 %1422
          %1424 = vrot.lane.b32.xlu0 %v1403, 8
          %v1425 = vpop.permute.xlu0 %1424
          %1426 = vrot.lane.b32.xlu0 %v1404, 8
          %v1427 = vpop.permute.xlu0 %1426
          %1428 = vrot.lane.b32.xlu0 %v1405, 8
          %v1429 = vpop.permute.xlu0 %1428
          %vm1438 = vcmask 130112
          %1439 = vst.msk [vmem:[#allocation3] sm:$0xff] %vm1438, %v1415
          %1440 = vst.msk [vmem:[#allocation3 + $0x8] sm:$0xff] %vm1438, %v1417
          %1441 = vst.msk [vmem:[#allocation3 + $0x10] sm:$0xff] %vm1438, %v1419
          %1442 = vst.msk [vmem:[#allocation3 + $0x18] sm:$0xff] %vm1438, %v1421
          %1443 = vst.msk [vmem:[#allocation3 + $0x20] sm:$0xff] %vm1438, %v1423
          %1444 = vst.msk [vmem:[#allocation3 + $0x28] sm:$0xff] %vm1438, %v1425
          %1445 = vst.msk [vmem:[#allocation3 + $0x30] sm:$0xff] %vm1438, %v1427
          %1446 = vst.msk [vmem:[#allocation3 + $0x38] sm:$0xff] %vm1438, %v1429
          %s1447 = scalar_lea.vmem [#allocation18], 128
          %v1448 = vld [vmem:[%s1447] sm:$0xf]
          %v1449 = vld [vmem:[%s1447 + $0x4] sm:$0xf]
          %v1450 = vld [vmem:[%s1447 + $0x8] sm:$0xf]
          %v1451 = vld [vmem:[%s1447 + $0xc] sm:$0xf]
          %v1452 = vld [vmem:[%s1447 + $0x10] sm:$0xf]
          %v1453 = vld [vmem:[%s1447 + $0x14] sm:$0xf]
          %v1454 = vld [vmem:[%s1447 + $0x18] sm:$0xf]
          %v1455 = vld [vmem:[%s1447 + $0x1c] sm:$0xf]
          %v1456 = vld [vmem:[%s1447 + $0x20] sm:$0xf]
          %v1457 = vld [vmem:[%s1447 + $0x24] sm:$0xf]
          %v1458 = vld [vmem:[%s1447 + $0x28] sm:$0xf]
          %v1459 = vld [vmem:[%s1447 + $0x2c] sm:$0xf]
          %v1460 = vld [vmem:[%s1447 + $0x30] sm:$0xf]
          %v1461 = vld [vmem:[%s1447 + $0x34] sm:$0xf]
          %v1462 = vld [vmem:[%s1447 + $0x38] sm:$0xf]
          %v1463 = vld [vmem:[%s1447 + $0x3c] sm:$0xf]
          %v1480 = vunpack.c.l.b16 %v1448
          %v1481 = vunpack.c.l.b16 %v1449
          %v1482 = vunpack.c.l.b16 %v1450
          %v1483 = vunpack.c.l.b16 %v1451
          %v1484 = vunpack.c.l.b16 %v1452
          %v1485 = vunpack.c.l.b16 %v1453
          %v1486 = vunpack.c.l.b16 %v1454
          %v1487 = vunpack.c.l.b16 %v1455
          %v1488 = vunpack.c.l.b16 %v1456
          %v1489 = vunpack.c.l.b16 %v1457
          %v1490 = vunpack.c.l.b16 %v1458
          %v1491 = vunpack.c.l.b16 %v1459
          %v1492 = vunpack.c.l.b16 %v1460
          %v1493 = vunpack.c.l.b16 %v1461
          %v1494 = vunpack.c.l.b16 %v1462
          %v1495 = vunpack.c.l.b16 %v1463
          %v1496 = vpack.c.b16 %v1481, %v1480
          %v1497 = vpack.c.b16 %v1483, %v1482
          %v1498 = vpack.c.b16 %v1485, %v1484
          %v1499 = vpack.c.b16 %v1487, %v1486
          %v1500 = vpack.c.b16 %v1489, %v1488
          %v1501 = vpack.c.b16 %v1491, %v1490
          %v1502 = vpack.c.b16 %v1493, %v1492
          %v1503 = vpack.c.b16 %v1495, %v1494
          %1512 = vmatprep.subr.bf16.mxu0 0
          %1513 = vmatpush1.bf16.msra.mxu0 %v873
          %1514 = vmatprep.subr.bf16.mxu0 0
          %1515 = vmatpush1.bf16.msra.mxu0 %v874
          %1516 = vmatprep.subr.bf16.mxu0 0
          %1517 = vmatpush1.bf16.msra.mxu0 %v875
          %1518 = vmatprep.subr.bf16.mxu0 0
          %1519 = vmatpush1.bf16.msra.mxu0 %v876
          %1520 = vmatprep.subr.bf16.mxu0 0
          %1521 = vmatpush1.bf16.msra.mxu0 %v877
          %1522 = vmatprep.subr.bf16.mxu0 0
          %1523 = vmatpush1.bf16.msra.mxu0 %v878
          %1524 = vmatprep.subr.bf16.mxu0 0
          %1525 = vmatpush1.bf16.msra.mxu0 %v879
          %1526 = vmatprep.subr.bf16.mxu0 0
          %1527 = vmatpush1.bf16.msra.mxu0 %v880
          %1528 = vmatprep.subr.bf16.mxu0 0
          %1529 = vmatpush1.bf16.msra.mxu0 0
          %1530 = vmatprep.subr.bf16.mxu0 0
          %1531 = vmatpush1.bf16.msra.mxu0 0
          %1532 = vmatprep.subr.bf16.mxu0 0
          %1533 = vmatpush1.bf16.msra.mxu0 0
          %1534 = vmatprep.subr.bf16.mxu0 0
          %1535 = vmatpush1.bf16.msra.mxu0 0
          %1536 = vmatprep.subr.bf16.mxu0 0
          %1537 = vmatpush1.bf16.msra.mxu0 0
          %1538 = vmatprep.subr.bf16.mxu0 0
          %1539 = vmatpush1.bf16.msra.mxu0 0
          %1540 = vmatprep.subr.bf16.mxu0 0
          %1541 = vmatpush1.bf16.msra.mxu0 0
          %1542 = vmatprep.subr.bf16.mxu0 0
          %1543 = vmatpush1.bf16.msra.mxu0 0
          %1544 = vmatprep.mubr.bf16.mxu0 0
          %1545 = vmatmul.mubr.bf16.gmra.mrb[0].mxu0 %v1496
          %v1546 = vpop.f32.mrb[0].mxu0
          %v1547 = vadd.f32 0.0, %v1546
          %v1548 = vpop.f32.mrb[0].mxu0
          %v1549 = vpop.f32.mrb[0].mxu0
          %v1550 = vadd.f32 0.0, %v1549
          %v1551 = vpop.f32.mrb[0].mxu0
          %1552 = vmatprep.mubr.bf16.mxu0 0
          %1553 = vmatmul.mubr.bf16.gmra.mrb[0].mxu0 %v1497
          %v1554 = vpop.f32.mrb[0].mxu0
          %v1555 = vadd.f32 0.0, %v1554
          %v1556 = vpop.f32.mrb[0].mxu0
          %v1557 = vpop.f32.mrb[0].mxu0
          %v1558 = vadd.f32 0.0, %v1557
          %v1559 = vpop.f32.mrb[0].mxu0
          %1560 = vmatprep.mubr.bf16.mxu0 0
          %1561 = vmatmul.mubr.bf16.gmra.mrb[0].mxu0 %v1498
          %v1562 = vpop.f32.mrb[0].mxu0
          %v1563 = vadd.f32 0.0, %v1562
          %v1564 = vpop.f32.mrb[0].mxu0
          %v1565 = vpop.f32.mrb[0].mxu0
          %v1566 = vadd.f32 0.0, %v1565
          %v1567 = vpop.f32.mrb[0].mxu0
          %1568 = vmatprep.mubr.bf16.mxu0 0
          %1569 = vmatmul.mubr.bf16.gmra.mrb[0].mxu0 %v1499
          %v1570 = vpop.f32.mrb[0].mxu0
          %v1571 = vadd.f32 0.0, %v1570
          %v1572 = vpop.f32.mrb[0].mxu0
          %v1573 = vpop.f32.mrb[0].mxu0
          %v1574 = vadd.f32 0.0, %v1573
          %v1575 = vpop.f32.mrb[0].mxu0
          %1576 = vmatprep.mubr.bf16.mxu0 0
          %1577 = vmatmul.mubr.bf16.gmra.mrb[0].mxu0 %v1500
          %v1578 = vpop.f32.mrb[0].mxu0
          %v1579 = vadd.f32 0.0, %v1578
          %v1580 = vpop.f32.mrb[0].mxu0
          %v1581 = vpop.f32.mrb[0].mxu0
          %v1582 = vadd.f32 0.0, %v1581
          %v1583 = vpop.f32.mrb[0].mxu0
          %1584 = vmatprep.mubr.bf16.mxu0 0
          %1585 = vmatmul.mubr.bf16.gmra.mrb[0].mxu0 %v1501
          %v1586 = vpop.f32.mrb[0].mxu0
          %v1587 = vadd.f32 0.0, %v1586
          %v1588 = vpop.f32.mrb[0].mxu0
          %v1589 = vpop.f32.mrb[0].mxu0
          %v1590 = vadd.f32 0.0, %v1589
          %v1591 = vpop.f32.mrb[0].mxu0
          %1592 = vmatprep.mubr.bf16.mxu0 0
          %1593 = vmatmul.mubr.bf16.gmra.mrb[0].mxu0 %v1502
          %v1594 = vpop.f32.mrb[0].mxu0
          %v1595 = vadd.f32 0.0, %v1594
          %v1596 = vpop.f32.mrb[0].mxu0
          %v1597 = vpop.f32.mrb[0].mxu0
          %v1598 = vadd.f32 0.0, %v1597
          %v1599 = vpop.f32.mrb[0].mxu0
          %1600 = vmatprep.mubr.bf16.mxu0 0
          %1601 = vmatmul.mubr.bf16.gmra.mrb[0].mxu0 %v1503
          %v1602 = vpop.f32.mrb[0].mxu0
          %v1603 = vadd.f32 0.0, %v1602
          %v1604 = vpop.f32.mrb[0].mxu0
          %v1605 = vpop.f32.mrb[0].mxu0
          %v1606 = vadd.f32 0.0, %v1605
          %v1607 = vpop.f32.mrb[0].mxu0
          %1608 = vdwg.mxu0
          %v1609 = vpack.c.bf16 %v1550, %v1547
          %v1610 = vpack.c.bf16 %v1558, %v1555
          %v1611 = vpack.c.bf16 %v1566, %v1563
          %v1612 = vpack.c.bf16 %v1574, %v1571
          %v1613 = vpack.c.bf16 %v1582, %v1579
          %v1614 = vpack.c.bf16 %v1590, %v1587
          %v1615 = vpack.c.bf16 %v1598, %v1595
          %v1616 = vpack.c.bf16 %v1606, %v1603
          %1625 = vrot.lane.b32.xlu0 %v1609, 16
          %v1626 = vpop.permute.xlu0 %1625
          %1627 = vrot.lane.b32.xlu0 %v1610, 16
          %v1628 = vpop.permute.xlu0 %1627
          %1629 = vrot.lane.b32.xlu0 %v1611, 16
          %v1630 = vpop.permute.xlu0 %1629
          %1631 = vrot.lane.b32.xlu0 %v1612, 16
          %v1632 = vpop.permute.xlu0 %1631
          %1633 = vrot.lane.b32.xlu0 %v1613, 16
          %v1634 = vpop.permute.xlu0 %1633
          %1635 = vrot.lane.b32.xlu0 %v1614, 16
          %v1636 = vpop.permute.xlu0 %1635
          %1637 = vrot.lane.b32.xlu0 %v1615, 16
          %v1638 = vpop.permute.xlu0 %1637
          %1639 = vrot.lane.b32.xlu0 %v1616, 16
          %v1640 = vpop.permute.xlu0 %1639
          %vm1649 = vcmask 195712
          %1650 = vst.msk [vmem:[#allocation3] sm:$0xff] %vm1649, %v1626
          %1651 = vst.msk [vmem:[#allocation3 + $0x8] sm:$0xff] %vm1649, %v1628
          %1652 = vst.msk [vmem:[#allocation3 + $0x10] sm:$0xff] %vm1649, %v1630
          %1653 = vst.msk [vmem:[#allocation3 + $0x18] sm:$0xff] %vm1649, %v1632
          %1654 = vst.msk [vmem:[#allocation3 + $0x20] sm:$0xff] %vm1649, %v1634
          %1655 = vst.msk [vmem:[#allocation3 + $0x28] sm:$0xff] %vm1649, %v1636
          %1656 = vst.msk [vmem:[#allocation3 + $0x30] sm:$0xff] %vm1649, %v1638
          %1657 = vst.msk [vmem:[#allocation3 + $0x38] sm:$0xff] %vm1649, %v1640
          %s1658 = scalar_lea.vmem [#allocation18], 192
          %v1659 = vld [vmem:[%s1658] sm:$0xf]
          %v1660 = vld [vmem:[%s1658 + $0x4] sm:$0xf]
          %v1661 = vld [vmem:[%s1658 + $0x8] sm:$0xf]
          %v1662 = vld [vmem:[%s1658 + $0xc] sm:$0xf]
          %v1663 = vld [vmem:[%s1658 + $0x10] sm:$0xf]
          %v1664 = vld [vmem:[%s1658 + $0x14] sm:$0xf]
          %v1665 = vld [vmem:[%s1658 + $0x18] sm:$0xf]
          %v1666 = vld [vmem:[%s1658 + $0x1c] sm:$0xf]
          %v1667 = vld [vmem:[%s1658 + $0x20] sm:$0xf]
          %v1668 = vld [vmem:[%s1658 + $0x24] sm:$0xf]
          %v1669 = vld [vmem:[%s1658 + $0x28] sm:$0xf]
          %v1670 = vld [vmem:[%s1658 + $0x2c] sm:$0xf]
          %v1671 = vld [vmem:[%s1658 + $0x30] sm:$0xf]
          %v1672 = vld [vmem:[%s1658 + $0x34] sm:$0xf]
          %v1673 = vld [vmem:[%s1658 + $0x38] sm:$0xf]
          %v1674 = vld [vmem:[%s1658 + $0x3c] sm:$0xf]
          %v1691 = vunpack.c.l.b16 %v1659
          %v1692 = vunpack.c.l.b16 %v1660
          %v1693 = vunpack.c.l.b16 %v1661
          %v1694 = vunpack.c.l.b16 %v1662
          %v1695 = vunpack.c.l.b16 %v1663
          %v1696 = vunpack.c.l.b16 %v1664
          %v1697 = vunpack.c.l.b16 %v1665
          %v1698 = vunpack.c.l.b16 %v1666
          %v1699 = vunpack.c.l.b16 %v1667
          %v1700 = vunpack.c.l.b16 %v1668
          %v1701 = vunpack.c.l.b16 %v1669
          %v1702 = vunpack.c.l.b16 %v1670
          %v1703 = vunpack.c.l.b16 %v1671
          %v1704 = vunpack.c.l.b16 %v1672
          %v1705 = vunpack.c.l.b16 %v1673
          %v1706 = vunpack.c.l.b16 %v1674
          %v1707 = vpack.c.b16 %v1692, %v1691
          %v1708 = vpack.c.b16 %v1694, %v1693
          %v1709 = vpack.c.b16 %v1696, %v1695
          %v1710 = vpack.c.b16 %v1698, %v1697
          %v1711 = vpack.c.b16 %v1700, %v1699
          %v1712 = vpack.c.b16 %v1702, %v1701
          %v1713 = vpack.c.b16 %v1704, %v1703
          %v1714 = vpack.c.b16 %v1706, %v1705
          %1723 = vmatprep.subr.bf16.mxu0 0
          %1724 = vmatpush1.bf16.msra.mxu0 %v873
          %1725 = vmatprep.subr.bf16.mxu0 0
          %1726 = vmatpush1.bf16.msra.mxu0 %v874
          %1727 = vmatprep.subr.bf16.mxu0 0
          %1728 = vmatpush1.bf16.msra.mxu0 %v875
          %1729 = vmatprep.subr.bf16.mxu0 0
          %1730 = vmatpush1.bf16.msra.mxu0 %v876
          %1731 = vmatprep.subr.bf16.mxu0 0
          %1732 = vmatpush1.bf16.msra.mxu0 %v877
          %1733 = vmatprep.subr.bf16.mxu0 0
          %1734 = vmatpush1.bf16.msra.mxu0 %v878
          %1735 = vmatprep.subr.bf16.mxu0 0
          %1736 = vmatpush1.bf16.msra.mxu0 %v879
          %1737 = vmatprep.subr.bf16.mxu0 0
          %1738 = vmatpush1.bf16.msra.mxu0 %v880
          %1739 = vmatprep.subr.bf16.mxu0 0
          %1740 = vmatpush1.bf16.msra.mxu0 0
          %1741 = vmatprep.subr.bf16.mxu0 0
          %1742 = vmatpush1.bf16.msra.mxu0 0
          %1743 = vmatprep.subr.bf16.mxu0 0
          %1744 = vmatpush1.bf16.msra.mxu0 0
          %1745 = vmatprep.subr.bf16.mxu0 0
          %1746 = vmatpush1.bf16.msra.mxu0 0
          %1747 = vmatprep.subr.bf16.mxu0 0
          %1748 = vmatpush1.bf16.msra.mxu0 0
          %1749 = vmatprep.subr.bf16.mxu0 0
          %1750 = vmatpush1.bf16.msra.mxu0 0
          %1751 = vmatprep.subr.bf16.mxu0 0
          %1752 = vmatpush1.bf16.msra.mxu0 0
          %1753 = vmatprep.subr.bf16.mxu0 0
          %1754 = vmatpush1.bf16.msra.mxu0 0
          %1755 = vmatprep.mubr.bf16.mxu0 0
          %1756 = vmatmul.mubr.bf16.gmra.mrb[0].mxu0 %v1707
          %v1757 = vpop.f32.mrb[0].mxu0
          %v1758 = vadd.f32 0.0, %v1757
          %v1759 = vpop.f32.mrb[0].mxu0
          %v1760 = vpop.f32.mrb[0].mxu0
          %v1761 = vadd.f32 0.0, %v1760
          %v1762 = vpop.f32.mrb[0].mxu0
          %1763 = vmatprep.mubr.bf16.mxu0 0
          %1764 = vmatmul.mubr.bf16.gmra.mrb[0].mxu0 %v1708
          %v1765 = vpop.f32.mrb[0].mxu0
          %v1766 = vadd.f32 0.0, %v1765
          %v1767 = vpop.f32.mrb[0].mxu0
          %v1768 = vpop.f32.mrb[0].mxu0
          %v1769 = vadd.f32 0.0, %v1768
          %v1770 = vpop.f32.mrb[0].mxu0
          %1771 = vmatprep.mubr.bf16.mxu0 0
          %1772 = vmatmul.mubr.bf16.gmra.mrb[0].mxu0 %v1709
          %v1773 = vpop.f32.mrb[0].mxu0
          %v1774 = vadd.f32 0.0, %v1773
          %v1775 = vpop.f32.mrb[0].mxu0
          %v1776 = vpop.f32.mrb[0].mxu0
          %v1777 = vadd.f32 0.0, %v1776
          %v1778 = vpop.f32.mrb[0].mxu0
          %1779 = vmatprep.mubr.bf16.mxu0 0
          %1780 = vmatmul.mubr.bf16.gmra.mrb[0].mxu0 %v1710
          %v1781 = vpop.f32.mrb[0].mxu0
          %v1782 = vadd.f32 0.0, %v1781
          %v1783 = vpop.f32.mrb[0].mxu0
          %v1784 = vpop.f32.mrb[0].mxu0
          %v1785 = vadd.f32 0.0, %v1784
          %v1786 = vpop.f32.mrb[0].mxu0
          %1787 = vmatprep.mubr.bf16.mxu0 0
          %1788 = vmatmul.mubr.bf16.gmra.mrb[0].mxu0 %v1711
          %v1789 = vpop.f32.mrb[0].mxu0
          %v1790 = vadd.f32 0.0, %v1789
          %v1791 = vpop.f32.mrb[0].mxu0
          %v1792 = vpop.f32.mrb[0].mxu0
          %v1793 = vadd.f32 0.0, %v1792
          %v1794 = vpop.f32.mrb[0].mxu0
          %1795 = vmatprep.mubr.bf16.mxu0 0
          %1796 = vmatmul.mubr.bf16.gmra.mrb[0].mxu0 %v1712
          %v1797 = vpop.f32.mrb[0].mxu0
          %v1798 = vadd.f32 0.0, %v1797
          %v1799 = vpop.f32.mrb[0].mxu0
          %v1800 = vpop.f32.mrb[0].mxu0
          %v1801 = vadd.f32 0.0, %v1800
          %v1802 = vpop.f32.mrb[0].mxu0
          %1803 = vmatprep.mubr.bf16.mxu0 0
          %1804 = vmatmul.mubr.bf16.gmra.mrb[0].mxu0 %v1713
          %v1805 = vpop.f32.mrb[0].mxu0
          %v1806 = vadd.f32 0.0, %v1805
          %v1807 = vpop.f32.mrb[0].mxu0
          %v1808 = vpop.f32.mrb[0].mxu0
          %v1809 = vadd.f32 0.0, %v1808
          %v1810 = vpop.f32.mrb[0].mxu0
          %1811 = vmatprep.mubr.bf16.mxu0 0
          %1812 = vmatmul.mubr.bf16.gmra.mrb[0].mxu0 %v1714
          %v1813 = vpop.f32.mrb[0].mxu0
          %v1814 = vadd.f32 0.0, %v1813
          %v1815 = vpop.f32.mrb[0].mxu0
          %v1816 = vpop.f32.mrb[0].mxu0
          %v1817 = vadd.f32 0.0, %v1816
          %v1818 = vpop.f32.mrb[0].mxu0
          %1819 = vdwg.mxu0
          %v1820 = vpack.c.bf16 %v1761, %v1758
          %v1821 = vpack.c.bf16 %v1769, %v1766
          %v1822 = vpack.c.bf16 %v1777, %v1774
          %v1823 = vpack.c.bf16 %v1785, %v1782
          %v1824 = vpack.c.bf16 %v1793, %v1790
          %v1825 = vpack.c.bf16 %v1801, %v1798
          %v1826 = vpack.c.bf16 %v1809, %v1806
          %v1827 = vpack.c.bf16 %v1817, %v1814
          %1836 = vrot.lane.b32.xlu0 %v1820, 24
          %v1837 = vpop.permute.xlu0 %1836
          %1838 = vrot.lane.b32.xlu0 %v1821, 24
          %v1839 = vpop.permute.xlu0 %1838
          %1840 = vrot.lane.b32.xlu0 %v1822, 24
          %v1841 = vpop.permute.xlu0 %1840
          %1842 = vrot.lane.b32.xlu0 %v1823, 24
          %v1843 = vpop.permute.xlu0 %1842
          %1844 = vrot.lane.b32.xlu0 %v1824, 24
          %v1845 = vpop.permute.xlu0 %1844
          %1846 = vrot.lane.b32.xlu0 %v1825, 24
          %v1847 = vpop.permute.xlu0 %1846
          %1848 = vrot.lane.b32.xlu0 %v1826, 24
          %v1849 = vpop.permute.xlu0 %1848
          %1850 = vrot.lane.b32.xlu0 %v1827, 24
          %v1851 = vpop.permute.xlu0 %1850
          %vm1860 = vcmask 261312
          %1861 = vst.msk [vmem:[#allocation3] sm:$0xff] %vm1860, %v1837
          %1862 = vst.msk [vmem:[#allocation3 + $0x8] sm:$0xff] %vm1860, %v1839
          %1863 = vst.msk [vmem:[#allocation3 + $0x10] sm:$0xff] %vm1860, %v1841
          %1864 = vst.msk [vmem:[#allocation3 + $0x18] sm:$0xff] %vm1860, %v1843
          %1865 = vst.msk [vmem:[#allocation3 + $0x20] sm:$0xff] %vm1860, %v1845
          %1866 = vst.msk [vmem:[#allocation3 + $0x28] sm:$0xff] %vm1860, %v1847
          %1867 = vst.msk [vmem:[#allocation3 + $0x30] sm:$0xff] %vm1860, %v1849
          %1868 = vst.msk [vmem:[#allocation3 + $0x38] sm:$0xff] %vm1860, %v1851
          %s1869 = scalar_lea.vmem [#allocation18], 256
          %v1870 = vld [vmem:[%s1869] sm:$0xf]
          %v1871 = vld [vmem:[%s1869 + $0x4] sm:$0xf]
          %v1872 = vld [vmem:[%s1869 + $0x8] sm:$0xf]
          %v1873 = vld [vmem:[%s1869 + $0xc] sm:$0xf]
          %v1874 = vld [vmem:[%s1869 + $0x10] sm:$0xf]
          %v1875 = vld [vmem:[%s1869 + $0x14] sm:$0xf]
          %v1876 = vld [vmem:[%s1869 + $0x18] sm:$0xf]
          %v1877 = vld [vmem:[%s1869 + $0x1c] sm:$0xf]
          %v1878 = vld [vmem:[%s1869 + $0x20] sm:$0xf]
          %v1879 = vld [vmem:[%s1869 + $0x24] sm:$0xf]
          %v1880 = vld [vmem:[%s1869 + $0x28] sm:$0xf]
          %v1881 = vld [vmem:[%s1869 + $0x2c] sm:$0xf]
          %v1882 = vld [vmem:[%s1869 + $0x30] sm:$0xf]
          %v1883 = vld [vmem:[%s1869 + $0x34] sm:$0xf]
          %v1884 = vld [vmem:[%s1869 + $0x38] sm:$0xf]
          %v1885 = vld [vmem:[%s1869 + $0x3c] sm:$0xf]
          %v1902 = vunpack.c.l.b16 %v1870
          %v1903 = vunpack.c.l.b16 %v1871
          %v1904 = vunpack.c.l.b16 %v1872
          %v1905 = vunpack.c.l.b16 %v1873
          %v1906 = vunpack.c.l.b16 %v1874
          %v1907 = vunpack.c.l.b16 %v1875
          %v1908 = vunpack.c.l.b16 %v1876
          %v1909 = vunpack.c.l.b16 %v1877
          %v1910 = vunpack.c.l.b16 %v1878
          %v1911 = vunpack.c.l.b16 %v1879
          %v1912 = vunpack.c.l.b16 %v1880
          %v1913 = vunpack.c.l.b16 %v1881
          %v1914 = vunpack.c.l.b16 %v1882
          %v1915 = vunpack.c.l.b16 %v1883
          %v1916 = vunpack.c.l.b16 %v1884
          %v1917 = vunpack.c.l.b16 %v1885
          %v1918 = vpack.c.b16 %v1903, %v1902
          %v1919 = vpack.c.b16 %v1905, %v1904
          %v1920 = vpack.c.b16 %v1907, %v1906
          %v1921 = vpack.c.b16 %v1909, %v1908
          %v1922 = vpack.c.b16 %v1911, %v1910
          %v1923 = vpack.c.b16 %v1913, %v1912
          %v1924 = vpack.c.b16 %v1915, %v1914
          %v1925 = vpack.c.b16 %v1917, %v1916
          %1934 = vmatprep.subr.bf16.mxu0 0
          %1935 = vmatpush1.bf16.msra.mxu0 %v873
          %1936 = vmatprep.subr.bf16.mxu0 0
          %1937 = vmatpush1.bf16.msra.mxu0 %v874
          %1938 = vmatprep.subr.bf16.mxu0 0
          %1939 = vmatpush1.bf16.msra.mxu0 %v875
          %1940 = vmatprep.subr.bf16.mxu0 0
          %1941 = vmatpush1.bf16.msra.mxu0 %v876
          %1942 = vmatprep.subr.bf16.mxu0 0
          %1943 = vmatpush1.bf16.msra.mxu0 %v877
          %1944 = vmatprep.subr.bf16.mxu0 0
          %1945 = vmatpush1.bf16.msra.mxu0 %v878
          %1946 = vmatprep.subr.bf16.mxu0 0
          %1947 = vmatpush1.bf16.msra.mxu0 %v879
          %1948 = vmatprep.subr.bf16.mxu0 0
          %1949 = vmatpush1.bf16.msra.mxu0 %v880
          %1950 = vmatprep.subr.bf16.mxu0 0
          %1951 = vmatpush1.bf16.msra.mxu0 0
          %1952 = vmatprep.subr.bf16.mxu0 0
          %1953 = vmatpush1.bf16.msra.mxu0 0
          %1954 = vmatprep.subr.bf16.mxu0 0
          %1955 = vmatpush1.bf16.msra.mxu0 0
          %1956 = vmatprep.subr.bf16.mxu0 0
          %1957 = vmatpush1.bf16.msra.mxu0 0
          %1958 = vmatprep.subr.bf16.mxu0 0
          %1959 = vmatpush1.bf16.msra.mxu0 0
          %1960 = vmatprep.subr.bf16.mxu0 0
          %1961 = vmatpush1.bf16.msra.mxu0 0
          %1962 = vmatprep.subr.bf16.mxu0 0
          %1963 = vmatpush1.bf16.msra.mxu0 0
          %1964 = vmatprep.subr.bf16.mxu0 0
          %1965 = vmatpush1.bf16.msra.mxu0 0
          %1966 = vmatprep.mubr.bf16.mxu0 0
          %1967 = vmatmul.mubr.bf16.gmra.mrb[0].mxu0 %v1918
          %v1968 = vpop.f32.mrb[0].mxu0
          %v1969 = vadd.f32 0.0, %v1968
          %v1970 = vpop.f32.mrb[0].mxu0
          %v1971 = vpop.f32.mrb[0].mxu0
          %v1972 = vadd.f32 0.0, %v1971
          %v1973 = vpop.f32.mrb[0].mxu0
          %1974 = vmatprep.mubr.bf16.mxu0 0
          %1975 = vmatmul.mubr.bf16.gmra.mrb[0].mxu0 %v1919
          %v1976 = vpop.f32.mrb[0].mxu0
          %v1977 = vadd.f32 0.0, %v1976
          %v1978 = vpop.f32.mrb[0].mxu0
          %v1979 = vpop.f32.mrb[0].mxu0
          %v1980 = vadd.f32 0.0, %v1979
          %v1981 = vpop.f32.mrb[0].mxu0
          %1982 = vmatprep.mubr.bf16.mxu0 0
          %1983 = vmatmul.mubr.bf16.gmra.mrb[0].mxu0 %v1920
          %v1984 = vpop.f32.mrb[0].mxu0
          %v1985 = vadd.f32 0.0, %v1984
          %v1986 = vpop.f32.mrb[0].mxu0
          %v1987 = vpop.f32.mrb[0].mxu0
          %v1988 = vadd.f32 0.0, %v1987
          %v1989 = vpop.f32.mrb[0].mxu0
          %1990 = vmatprep.mubr.bf16.mxu0 0
          %1991 = vmatmul.mubr.bf16.gmra.mrb[0].mxu0 %v1921
          %v1992 = vpop.f32.mrb[0].mxu0
          %v1993 = vadd.f32 0.0, %v1992
          %v1994 = vpop.f32.mrb[0].mxu0
          %v1995 = vpop.f32.mrb[0].mxu0
          %v1996 = vadd.f32 0.0, %v1995
          %v1997 = vpop.f32.mrb[0].mxu0
          %1998 = vmatprep.mubr.bf16.mxu0 0
          %1999 = vmatmul.mubr.bf16.gmra.mrb[0].mxu0 %v1922
          %v2000 = vpop.f32.mrb[0].mxu0
          %v2001 = vadd.f32 0.0, %v2000
          %v2002 = vpop.f32.mrb[0].mxu0
          %v2003 = vpop.f32.mrb[0].mxu0
          %v2004 = vadd.f32 0.0, %v2003
          %v2005 = vpop.f32.mrb[0].mxu0
          %2006 = vmatprep.mubr.bf16.mxu0 0
          %2007 = vmatmul.mubr.bf16.gmra.mrb[0].mxu0 %v1923
          %v2008 = vpop.f32.mrb[0].mxu0
          %v2009 = vadd.f32 0.0, %v2008
          %v2010 = vpop.f32.mrb[0].mxu0
          %v2011 = vpop.f32.mrb[0].mxu0
          %v2012 = vadd.f32 0.0, %v2011
          %v2013 = vpop.f32.mrb[0].mxu0
          %2014 = vmatprep.mubr.bf16.mxu0 0
          %2015 = vmatmul.mubr.bf16.gmra.mrb[0].mxu0 %v1924
          %v2016 = vpop.f32.mrb[0].mxu0
          %v2017 = vadd.f32 0.0, %v2016
          %v2018 = vpop.f32.mrb[0].mxu0
          %v2019 = vpop.f32.mrb[0].mxu0
          %v2020 = vadd.f32 0.0, %v2019
          %v2021 = vpop.f32.mrb[0].mxu0
          %2022 = vmatprep.mubr.bf16.mxu0 0
          %2023 = vmatmul.mubr.bf16.gmra.mrb[0].mxu0 %v1925
          %v2024 = vpop.f32.mrb[0].mxu0
          %v2025 = vadd.f32 0.0, %v2024
          %v2026 = vpop.f32.mrb[0].mxu0
          %v2027 = vpop.f32.mrb[0].mxu0
          %v2028 = vadd.f32 0.0, %v2027
          %v2029 = vpop.f32.mrb[0].mxu0
          %2030 = vdwg.mxu0
          %v2031 = vpack.c.bf16 %v1972, %v1969
          %v2032 = vpack.c.bf16 %v1980, %v1977
          %v2033 = vpack.c.bf16 %v1988, %v1985
          %v2034 = vpack.c.bf16 %v1996, %v1993
          %v2035 = vpack.c.bf16 %v2004, %v2001
          %v2036 = vpack.c.bf16 %v2012, %v2009
          %v2037 = vpack.c.bf16 %v2020, %v2017
          %v2038 = vpack.c.bf16 %v2028, %v2025
          %2047 = vrot.lane.b32.xlu0 %v2031, 32
          %v2048 = vpop.permute.xlu0 %2047
          %2049 = vrot.lane.b32.xlu0 %v2032, 32
          %v2050 = vpop.permute.xlu0 %2049
          %2051 = vrot.lane.b32.xlu0 %v2033, 32
          %v2052 = vpop.permute.xlu0 %2051
          %2053 = vrot.lane.b32.xlu0 %v2034, 32
          %v2054 = vpop.permute.xlu0 %2053
          %2055 = vrot.lane.b32.xlu0 %v2035, 32
          %v2056 = vpop.permute.xlu0 %2055
          %2057 = vrot.lane.b32.xlu0 %v2036, 32
          %v2058 = vpop.permute.xlu0 %2057
          %2059 = vrot.lane.b32.xlu0 %v2037, 32
          %v2060 = vpop.permute.xlu0 %2059
          %2061 = vrot.lane.b32.xlu0 %v2038, 32
          %v2062 = vpop.permute.xlu0 %2061
          %vm2071 = vcmask 326912
          %2072 = vst.msk [vmem:[#allocation3] sm:$0xff] %vm2071, %v2048
          %2073 = vst.msk [vmem:[#allocation3 + $0x8] sm:$0xff] %vm2071, %v2050
          %2074 = vst.msk [vmem:[#allocation3 + $0x10] sm:$0xff] %vm2071, %v2052
          %2075 = vst.msk [vmem:[#allocation3 + $0x18] sm:$0xff] %vm2071, %v2054
          %2076 = vst.msk [vmem:[#allocation3 + $0x20] sm:$0xff] %vm2071, %v2056
          %2077 = vst.msk [vmem:[#allocation3 + $0x28] sm:$0xff] %vm2071, %v2058
          %2078 = vst.msk [vmem:[#allocation3 + $0x30] sm:$0xff] %vm2071, %v2060
          %2079 = vst.msk [vmem:[#allocation3 + $0x38] sm:$0xff] %vm2071, %v2062
          %s2080 = scalar_lea.vmem [#allocation18], 320
          %v2081 = vld [vmem:[%s2080] sm:$0xf]
          %v2082 = vld [vmem:[%s2080 + $0x4] sm:$0xf]
          %v2083 = vld [vmem:[%s2080 + $0x8] sm:$0xf]
          %v2084 = vld [vmem:[%s2080 + $0xc] sm:$0xf]
          %v2085 = vld [vmem:[%s2080 + $0x10] sm:$0xf]
          %v2086 = vld [vmem:[%s2080 + $0x14] sm:$0xf]
          %v2087 = vld [vmem:[%s2080 + $0x18] sm:$0xf]
          %v2088 = vld [vmem:[%s2080 + $0x1c] sm:$0xf]
          %v2089 = vld [vmem:[%s2080 + $0x20] sm:$0xf]
          %v2090 = vld [vmem:[%s2080 + $0x24] sm:$0xf]
          %v2091 = vld [vmem:[%s2080 + $0x28] sm:$0xf]
          %v2092 = vld [vmem:[%s2080 + $0x2c] sm:$0xf]
          %v2093 = vld [vmem:[%s2080 + $0x30] sm:$0xf]
          %v2094 = vld [vmem:[%s2080 + $0x34] sm:$0xf]
          %v2095 = vld [vmem:[%s2080 + $0x38] sm:$0xf]
          %v2096 = vld [vmem:[%s2080 + $0x3c] sm:$0xf]
          %v2113 = vunpack.c.l.b16 %v2081
          %v2114 = vunpack.c.l.b16 %v2082
          %v2115 = vunpack.c.l.b16 %v2083
          %v2116 = vunpack.c.l.b16 %v2084
          %v2117 = vunpack.c.l.b16 %v2085
          %v2118 = vunpack.c.l.b16 %v2086
          %v2119 = vunpack.c.l.b16 %v2087
          %v2120 = vunpack.c.l.b16 %v2088
          %v2121 = vunpack.c.l.b16 %v2089
          %v2122 = vunpack.c.l.b16 %v2090
          %v2123 = vunpack.c.l.b16 %v2091
          %v2124 = vunpack.c.l.b16 %v2092
          %v2125 = vunpack.c.l.b16 %v2093
          %v2126 = vunpack.c.l.b16 %v2094
          %v2127 = vunpack.c.l.b16 %v2095
          %v2128 = vunpack.c.l.b16 %v2096
          %v2129 = vpack.c.b16 %v2114, %v2113
          %v2130 = vpack.c.b16 %v2116, %v2115
          %v2131 = vpack.c.b16 %v2118, %v2117
          %v2132 = vpack.c.b16 %v2120, %v2119
          %v2133 = vpack.c.b16 %v2122, %v2121
          %v2134 = vpack.c.b16 %v2124, %v2123
          %v2135 = vpack.c.b16 %v2126, %v2125
          %v2136 = vpack.c.b16 %v2128, %v2127
          %2145 = vmatprep.subr.bf16.mxu0 0
          %2146 = vmatpush1.bf16.msra.mxu0 %v873
          %2147 = vmatprep.subr.bf16.mxu0 0
          %2148 = vmatpush1.bf16.msra.mxu0 %v874
          %2149 = vmatprep.subr.bf16.mxu0 0
          %2150 = vmatpush1.bf16.msra.mxu0 %v875
          %2151 = vmatprep.subr.bf16.mxu0 0
          %2152 = vmatpush1.bf16.msra.mxu0 %v876
          %2153 = vmatprep.subr.bf16.mxu0 0
          %2154 = vmatpush1.bf16.msra.mxu0 %v877
          %2155 = vmatprep.subr.bf16.mxu0 0
          %2156 = vmatpush1.bf16.msra.mxu0 %v878
          %2157 = vmatprep.subr.bf16.mxu0 0
          %2158 = vmatpush1.bf16.msra.mxu0 %v879
          %2159 = vmatprep.subr.bf16.mxu0 0
          %2160 = vmatpush1.bf16.msra.mxu0 %v880
          %2161 = vmatprep.subr.bf16.mxu0 0
          %2162 = vmatpush1.bf16.msra.mxu0 0
          %2163 = vmatprep.subr.bf16.mxu0 0
          %2164 = vmatpush1.bf16.msra.mxu0 0
          %2165 = vmatprep.subr.bf16.mxu0 0
          %2166 = vmatpush1.bf16.msra.mxu0 0
          %2167 = vmatprep.subr.bf16.mxu0 0
          %2168 = vmatpush1.bf16.msra.mxu0 0
          %2169 = vmatprep.subr.bf16.mxu0 0
          %2170 = vmatpush1.bf16.msra.mxu0 0
          %2171 = vmatprep.subr.bf16.mxu0 0
          %2172 = vmatpush1.bf16.msra.mxu0 0
          %2173 = vmatprep.subr.bf16.mxu0 0
          %2174 = vmatpush1.bf16.msra.mxu0 0
          %2175 = vmatprep.subr.bf16.mxu0 0
          %2176 = vmatpush1.bf16.msra.mxu0 0
          %2177 = vmatprep.mubr.bf16.mxu0 0
          %2178 = vmatmul.mubr.bf16.gmra.mrb[0].mxu0 %v2129
          %v2179 = vpop.f32.mrb[0].mxu0
          %v2180 = vadd.f32 0.0, %v2179
          %v2181 = vpop.f32.mrb[0].mxu0
          %v2182 = vpop.f32.mrb[0].mxu0
          %v2183 = vadd.f32 0.0, %v2182
          %v2184 = vpop.f32.mrb[0].mxu0
          %2185 = vmatprep.mubr.bf16.mxu0 0
          %2186 = vmatmul.mubr.bf16.gmra.mrb[0].mxu0 %v2130
          %v2187 = vpop.f32.mrb[0].mxu0
          %v2188 = vadd.f32 0.0, %v2187
          %v2189 = vpop.f32.mrb[0].mxu0
          %v2190 = vpop.f32.mrb[0].mxu0
          %v2191 = vadd.f32 0.0, %v2190
          %v2192 = vpop.f32.mrb[0].mxu0
          %2193 = vmatprep.mubr.bf16.mxu0 0
          %2194 = vmatmul.mubr.bf16.gmra.mrb[0].mxu0 %v2131
          %v2195 = vpop.f32.mrb[0].mxu0
          %v2196 = vadd.f32 0.0, %v2195
          %v2197 = vpop.f32.mrb[0].mxu0
          %v2198 = vpop.f32.mrb[0].mxu0
          %v2199 = vadd.f32 0.0, %v2198
          %v2200 = vpop.f32.mrb[0].mxu0
          %2201 = vmatprep.mubr.bf16.mxu0 0
          %2202 = vmatmul.mubr.bf16.gmra.mrb[0].mxu0 %v2132
          %v2203 = vpop.f32.mrb[0].mxu0
          %v2204 = vadd.f32 0.0, %v2203
          %v2205 = vpop.f32.mrb[0].mxu0
          %v2206 = vpop.f32.mrb[0].mxu0
          %v2207 = vadd.f32 0.0, %v2206
          %v2208 = vpop.f32.mrb[0].mxu0
          %2209 = vmatprep.mubr.bf16.mxu0 0
          %2210 = vmatmul.mubr.bf16.gmra.mrb[0].mxu0 %v2133
          %v2211 = vpop.f32.mrb[0].mxu0
          %v2212 = vadd.f32 0.0, %v2211
          %v2213 = vpop.f32.mrb[0].mxu0
          %v2214 = vpop.f32.mrb[0].mxu0
          %v2215 = vadd.f32 0.0, %v2214
          %v2216 = vpop.f32.mrb[0].mxu0
          %2217 = vmatprep.mubr.bf16.mxu0 0
          %2218 = vmatmul.mubr.bf16.gmra.mrb[0].mxu0 %v2134
          %v2219 = vpop.f32.mrb[0].mxu0
          %v2220 = vadd.f32 0.0, %v2219
          %v2221 = vpop.f32.mrb[0].mxu0
          %v2222 = vpop.f32.mrb[0].mxu0
          %v2223 = vadd.f32 0.0, %v2222
          %v2224 = vpop.f32.mrb[0].mxu0
          %2225 = vmatprep.mubr.bf16.mxu0 0
          %2226 = vmatmul.mubr.bf16.gmra.mrb[0].mxu0 %v2135
          %v2227 = vpop.f32.mrb[0].mxu0
          %v2228 = vadd.f32 0.0, %v2227
          %v2229 = vpop.f32.mrb[0].mxu0
          %v2230 = vpop.f32.mrb[0].mxu0
          %v2231 = vadd.f32 0.0, %v2230
          %v2232 = vpop.f32.mrb[0].mxu0
          %2233 = vmatprep.mubr.bf16.mxu0 0
          %2234 = vmatmul.mubr.bf16.gmra.mrb[0].mxu0 %v2136
          %v2235 = vpop.f32.mrb[0].mxu0
          %v2236 = vadd.f32 0.0, %v2235
          %v2237 = vpop.f32.mrb[0].mxu0
          %v2238 = vpop.f32.mrb[0].mxu0
          %v2239 = vadd.f32 0.0, %v2238
          %v2240 = vpop.f32.mrb[0].mxu0
          %2241 = vdwg.mxu0
          %v2242 = vpack.c.bf16 %v2183, %v2180
          %v2243 = vpack.c.bf16 %v2191, %v2188
          %v2244 = vpack.c.bf16 %v2199, %v2196
          %v2245 = vpack.c.bf16 %v2207, %v2204
          %v2246 = vpack.c.bf16 %v2215, %v2212
          %v2247 = vpack.c.bf16 %v2223, %v2220
          %v2248 = vpack.c.bf16 %v2231, %v2228
          %v2249 = vpack.c.bf16 %v2239, %v2236
          %2258 = vrot.lane.b32.xlu0 %v2242, 40
          %v2259 = vpop.permute.xlu0 %2258
          %2260 = vrot.lane.b32.xlu0 %v2243, 40
          %v2261 = vpop.permute.xlu0 %2260
          %2262 = vrot.lane.b32.xlu0 %v2244, 40
          %v2263 = vpop.permute.xlu0 %2262
          %2264 = vrot.lane.b32.xlu0 %v2245, 40
          %v2265 = vpop.permute.xlu0 %2264
          %2266 = vrot.lane.b32.xlu0 %v2246, 40
          %v2267 = vpop.permute.xlu0 %2266
          %2268 = vrot.lane.b32.xlu0 %v2247, 40
          %v2269 = vpop.permute.xlu0 %2268
          %2270 = vrot.lane.b32.xlu0 %v2248, 40
          %v2271 = vpop.permute.xlu0 %2270
          %2272 = vrot.lane.b32.xlu0 %v2249, 40
          %v2273 = vpop.permute.xlu0 %2272
          %vm2282 = vcmask 392512
          %2283 = vst.msk [vmem:[#allocation3] sm:$0xff] %vm2282, %v2259
          %2284 = vst.msk [vmem:[#allocation3 + $0x8] sm:$0xff] %vm2282, %v2261
          %2285 = vst.msk [vmem:[#allocation3 + $0x10] sm:$0xff] %vm2282, %v2263
          %2286 = vst.msk [vmem:[#allocation3 + $0x18] sm:$0xff] %vm2282, %v2265
          %2287 = vst.msk [vmem:[#allocation3 + $0x20] sm:$0xff] %vm2282, %v2267
          %2288 = vst.msk [vmem:[#allocation3 + $0x28] sm:$0xff] %vm2282, %v2269
          %2289 = vst.msk [vmem:[#allocation3 + $0x30] sm:$0xff] %vm2282, %v2271
          %2290 = vst.msk [vmem:[#allocation3 + $0x38] sm:$0xff] %vm2282, %v2273
          %s2291 = scalar_lea.vmem [#allocation18], 384
          %v2292 = vld [vmem:[%s2291] sm:$0xf]
          %v2293 = vld [vmem:[%s2291 + $0x4] sm:$0xf]
          %v2294 = vld [vmem:[%s2291 + $0x8] sm:$0xf]
          %v2295 = vld [vmem:[%s2291 + $0xc] sm:$0xf]
          %v2296 = vld [vmem:[%s2291 + $0x10] sm:$0xf]
          %v2297 = vld [vmem:[%s2291 + $0x14] sm:$0xf]
          %v2298 = vld [vmem:[%s2291 + $0x18] sm:$0xf]
          %v2299 = vld [vmem:[%s2291 + $0x1c] sm:$0xf]
          %v2300 = vld [vmem:[%s2291 + $0x20] sm:$0xf]
          %v2301 = vld [vmem:[%s2291 + $0x24] sm:$0xf]
          %v2302 = vld [vmem:[%s2291 + $0x28] sm:$0xf]
          %v2303 = vld [vmem:[%s2291 + $0x2c] sm:$0xf]
          %v2304 = vld [vmem:[%s2291 + $0x30] sm:$0xf]
          %v2305 = vld [vmem:[%s2291 + $0x34] sm:$0xf]
          %v2306 = vld [vmem:[%s2291 + $0x38] sm:$0xf]
          %v2307 = vld [vmem:[%s2291 + $0x3c] sm:$0xf]
          %v2324 = vunpack.c.l.b16 %v2292
          %v2325 = vunpack.c.l.b16 %v2293
          %v2326 = vunpack.c.l.b16 %v2294
          %v2327 = vunpack.c.l.b16 %v2295
          %v2328 = vunpack.c.l.b16 %v2296
          %v2329 = vunpack.c.l.b16 %v2297
          %v2330 = vunpack.c.l.b16 %v2298
          %v2331 = vunpack.c.l.b16 %v2299
          %v2332 = vunpack.c.l.b16 %v2300
          %v2333 = vunpack.c.l.b16 %v2301
          %v2334 = vunpack.c.l.b16 %v2302
          %v2335 = vunpack.c.l.b16 %v2303
          %v2336 = vunpack.c.l.b16 %v2304
          %v2337 = vunpack.c.l.b16 %v2305
          %v2338 = vunpack.c.l.b16 %v2306
          %v2339 = vunpack.c.l.b16 %v2307
          %v2340 = vpack.c.b16 %v2325, %v2324
          %v2341 = vpack.c.b16 %v2327, %v2326
          %v2342 = vpack.c.b16 %v2329, %v2328
          %v2343 = vpack.c.b16 %v2331, %v2330
          %v2344 = vpack.c.b16 %v2333, %v2332
          %v2345 = vpack.c.b16 %v2335, %v2334
          %v2346 = vpack.c.b16 %v2337, %v2336
          %v2347 = vpack.c.b16 %v2339, %v2338
          %2356 = vmatprep.subr.bf16.mxu0 0
          %2357 = vmatpush1.bf16.msra.mxu0 %v873
          %2358 = vmatprep.subr.bf16.mxu0 0
          %2359 = vmatpush1.bf16.msra.mxu0 %v874
          %2360 = vmatprep.subr.bf16.mxu0 0
          %2361 = vmatpush1.bf16.msra.mxu0 %v875
          %2362 = vmatprep.subr.bf16.mxu0 0
          %2363 = vmatpush1.bf16.msra.mxu0 %v876
          %2364 = vmatprep.subr.bf16.mxu0 0
          %2365 = vmatpush1.bf16.msra.mxu0 %v877
          %2366 = vmatprep.subr.bf16.mxu0 0
          %2367 = vmatpush1.bf16.msra.mxu0 %v878
          %2368 = vmatprep.subr.bf16.mxu0 0
          %2369 = vmatpush1.bf16.msra.mxu0 %v879
          %2370 = vmatprep.subr.bf16.mxu0 0
          %2371 = vmatpush1.bf16.msra.mxu0 %v880
          %2372 = vmatprep.subr.bf16.mxu0 0
          %2373 = vmatpush1.bf16.msra.mxu0 0
          %2374 = vmatprep.subr.bf16.mxu0 0
          %2375 = vmatpush1.bf16.msra.mxu0 0
          %2376 = vmatprep.subr.bf16.mxu0 0
          %2377 = vmatpush1.bf16.msra.mxu0 0
          %2378 = vmatprep.subr.bf16.mxu0 0
          %2379 = vmatpush1.bf16.msra.mxu0 0
          %2380 = vmatprep.subr.bf16.mxu0 0
          %2381 = vmatpush1.bf16.msra.mxu0 0
          %2382 = vmatprep.subr.bf16.mxu0 0
          %2383 = vmatpush1.bf16.msra.mxu0 0
          %2384 = vmatprep.subr.bf16.mxu0 0
          %2385 = vmatpush1.bf16.msra.mxu0 0
          %2386 = vmatprep.subr.bf16.mxu0 0
          %2387 = vmatpush1.bf16.msra.mxu0 0
          %2388 = vmatprep.mubr.bf16.mxu0 0
          %2389 = vmatmul.mubr.bf16.gmra.mrb[0].mxu0 %v2340
          %v2390 = vpop.f32.mrb[0].mxu0
          %v2391 = vadd.f32 0.0, %v2390
          %v2392 = vpop.f32.mrb[0].mxu0
          %v2393 = vpop.f32.mrb[0].mxu0
          %v2394 = vadd.f32 0.0, %v2393
          %v2395 = vpop.f32.mrb[0].mxu0
          %2396 = vmatprep.mubr.bf16.mxu0 0
          %2397 = vmatmul.mubr.bf16.gmra.mrb[0].mxu0 %v2341
          %v2398 = vpop.f32.mrb[0].mxu0
          %v2399 = vadd.f32 0.0, %v2398
          %v2400 = vpop.f32.mrb[0].mxu0
          %v2401 = vpop.f32.mrb[0].mxu0
          %v2402 = vadd.f32 0.0, %v2401
          %v2403 = vpop.f32.mrb[0].mxu0
          %2404 = vmatprep.mubr.bf16.mxu0 0
          %2405 = vmatmul.mubr.bf16.gmra.mrb[0].mxu0 %v2342
          %v2406 = vpop.f32.mrb[0].mxu0
          %v2407 = vadd.f32 0.0, %v2406
          %v2408 = vpop.f32.mrb[0].mxu0
          %v2409 = vpop.f32.mrb[0].mxu0
          %v2410 = vadd.f32 0.0, %v2409
          %v2411 = vpop.f32.mrb[0].mxu0
          %2412 = vmatprep.mubr.bf16.mxu0 0
          %2413 = vmatmul.mubr.bf16.gmra.mrb[0].mxu0 %v2343
          %v2414 = vpop.f32.mrb[0].mxu0
          %v2415 = vadd.f32 0.0, %v2414
          %v2416 = vpop.f32.mrb[0].mxu0
          %v2417 = vpop.f32.mrb[0].mxu0
          %v2418 = vadd.f32 0.0, %v2417
          %v2419 = vpop.f32.mrb[0].mxu0
          %2420 = vmatprep.mubr.bf16.mxu0 0
          %2421 = vmatmul.mubr.bf16.gmra.mrb[0].mxu0 %v2344
          %v2422 = vpop.f32.mrb[0].mxu0
          %v2423 = vadd.f32 0.0, %v2422
          %v2424 = vpop.f32.mrb[0].mxu0
          %v2425 = vpop.f32.mrb[0].mxu0
          %v2426 = vadd.f32 0.0, %v2425
          %v2427 = vpop.f32.mrb[0].mxu0
          %2428 = vmatprep.mubr.bf16.mxu0 0
          %2429 = vmatmul.mubr.bf16.gmra.mrb[0].mxu0 %v2345
          %v2430 = vpop.f32.mrb[0].mxu0
          %v2431 = vadd.f32 0.0, %v2430
          %v2432 = vpop.f32.mrb[0].mxu0
          %v2433 = vpop.f32.mrb[0].mxu0
          %v2434 = vadd.f32 0.0, %v2433
          %v2435 = vpop.f32.mrb[0].mxu0
          %2436 = vmatprep.mubr.bf16.mxu0 0
          %2437 = vmatmul.mubr.bf16.gmra.mrb[0].mxu0 %v2346
          %v2438 = vpop.f32.mrb[0].mxu0
          %v2439 = vadd.f32 0.0, %v2438
          %v2440 = vpop.f32.mrb[0].mxu0
          %v2441 = vpop.f32.mrb[0].mxu0
          %v2442 = vadd.f32 0.0, %v2441
          %v2443 = vpop.f32.mrb[0].mxu0
          %2444 = vmatprep.mubr.bf16.mxu0 0
          %2445 = vmatmul.mubr.bf16.gmra.mrb[0].mxu0 %v2347
          %v2446 = vpop.f32.mrb[0].mxu0
          %v2447 = vadd.f32 0.0, %v2446
          %v2448 = vpop.f32.mrb[0].mxu0
          %v2449 = vpop.f32.mrb[0].mxu0
          %v2450 = vadd.f32 0.0, %v2449
          %v2451 = vpop.f32.mrb[0].mxu0
          %2452 = vdwg.mxu0
          %v2453 = vpack.c.bf16 %v2394, %v2391
          %v2454 = vpack.c.bf16 %v2402, %v2399
          %v2455 = vpack.c.bf16 %v2410, %v2407
          %v2456 = vpack.c.bf16 %v2418, %v2415
          %v2457 = vpack.c.bf16 %v2426, %v2423
          %v2458 = vpack.c.bf16 %v2434, %v2431
          %v2459 = vpack.c.bf16 %v2442, %v2439
          %v2460 = vpack.c.bf16 %v2450, %v2447
          %2469 = vrot.lane.b32.xlu0 %v2453, 48
          %v2470 = vpop.permute.xlu0 %2469
          %2471 = vrot.lane.b32.xlu0 %v2454, 48
          %v2472 = vpop.permute.xlu0 %2471
          %2473 = vrot.lane.b32.xlu0 %v2455, 48
          %v2474 = vpop.permute.xlu0 %2473
          %2475 = vrot.lane.b32.xlu0 %v2456, 48
          %v2476 = vpop.permute.xlu0 %2475
          %2477 = vrot.lane.b32.xlu0 %v2457, 48
          %v2478 = vpop.permute.xlu0 %2477
          %2479 = vrot.lane.b32.xlu0 %v2458, 48
          %v2480 = vpop.permute.xlu0 %2479
          %2481 = vrot.lane.b32.xlu0 %v2459, 48
          %v2482 = vpop.permute.xlu0 %2481
          %2483 = vrot.lane.b32.xlu0 %v2460, 48
          %v2484 = vpop.permute.xlu0 %2483
          %vm2493 = vcmask 458112
          %2494 = vst.msk [vmem:[#allocation3] sm:$0xff] %vm2493, %v2470
          %2495 = vst.msk [vmem:[#allocation3 + $0x8] sm:$0xff] %vm2493, %v2472
          %2496 = vst.msk [vmem:[#allocation3 + $0x10] sm:$0xff] %vm2493, %v2474
          %2497 = vst.msk [vmem:[#allocation3 + $0x18] sm:$0xff] %vm2493, %v2476
          %2498 = vst.msk [vmem:[#allocation3 + $0x20] sm:$0xff] %vm2493, %v2478
          %2499 = vst.msk [vmem:[#allocation3 + $0x28] sm:$0xff] %vm2493, %v2480
          %2500 = vst.msk [vmem:[#allocation3 + $0x30] sm:$0xff] %vm2493, %v2482
          %2501 = vst.msk [vmem:[#allocation3 + $0x38] sm:$0xff] %vm2493, %v2484
          %s2502 = scalar_lea.vmem [#allocation18], 448
          %v2503 = vld [vmem:[%s2502] sm:$0xf]
          %v2504 = vld [vmem:[%s2502 + $0x4] sm:$0xf]
          %v2505 = vld [vmem:[%s2502 + $0x8] sm:$0xf]
          %v2506 = vld [vmem:[%s2502 + $0xc] sm:$0xf]
          %v2507 = vld [vmem:[%s2502 + $0x10] sm:$0xf]
          %v2508 = vld [vmem:[%s2502 + $0x14] sm:$0xf]
          %v2509 = vld [vmem:[%s2502 + $0x18] sm:$0xf]
          %v2510 = vld [vmem:[%s2502 + $0x1c] sm:$0xf]
          %v2511 = vld [vmem:[%s2502 + $0x20] sm:$0xf]
          %v2512 = vld [vmem:[%s2502 + $0x24] sm:$0xf]
          %v2513 = vld [vmem:[%s2502 + $0x28] sm:$0xf]
          %v2514 = vld [vmem:[%s2502 + $0x2c] sm:$0xf]
          %v2515 = vld [vmem:[%s2502 + $0x30] sm:$0xf]
          %v2516 = vld [vmem:[%s2502 + $0x34] sm:$0xf]
          %v2517 = vld [vmem:[%s2502 + $0x38] sm:$0xf]
          %v2518 = vld [vmem:[%s2502 + $0x3c] sm:$0xf]
          %v2535 = vunpack.c.l.b16 %v2503
          %v2536 = vunpack.c.l.b16 %v2504
          %v2537 = vunpack.c.l.b16 %v2505
          %v2538 = vunpack.c.l.b16 %v2506
          %v2539 = vunpack.c.l.b16 %v2507
          %v2540 = vunpack.c.l.b16 %v2508
          %v2541 = vunpack.c.l.b16 %v2509
          %v2542 = vunpack.c.l.b16 %v2510
          %v2543 = vunpack.c.l.b16 %v2511
          %v2544 = vunpack.c.l.b16 %v2512
          %v2545 = vunpack.c.l.b16 %v2513
          %v2546 = vunpack.c.l.b16 %v2514
          %v2547 = vunpack.c.l.b16 %v2515
          %v2548 = vunpack.c.l.b16 %v2516
          %v2549 = vunpack.c.l.b16 %v2517
          %v2550 = vunpack.c.l.b16 %v2518
          %v2551 = vpack.c.b16 %v2536, %v2535
          %v2552 = vpack.c.b16 %v2538, %v2537
          %v2553 = vpack.c.b16 %v2540, %v2539
          %v2554 = vpack.c.b16 %v2542, %v2541
          %v2555 = vpack.c.b16 %v2544, %v2543
          %v2556 = vpack.c.b16 %v2546, %v2545
          %v2557 = vpack.c.b16 %v2548, %v2547
          %v2558 = vpack.c.b16 %v2550, %v2549
          %2567 = vmatprep.subr.bf16.mxu0 0
          %2568 = vmatpush1.bf16.msra.mxu0 %v873
          %2569 = vmatprep.subr.bf16.mxu0 0
          %2570 = vmatpush1.bf16.msra.mxu0 %v874
          %2571 = vmatprep.subr.bf16.mxu0 0
          %2572 = vmatpush1.bf16.msra.mxu0 %v875
          %2573 = vmatprep.subr.bf16.mxu0 0
          %2574 = vmatpush1.bf16.msra.mxu0 %v876
          %2575 = vmatprep.subr.bf16.mxu0 0
          %2576 = vmatpush1.bf16.msra.mxu0 %v877
          %2577 = vmatprep.subr.bf16.mxu0 0
          %2578 = vmatpush1.bf16.msra.mxu0 %v878
          %2579 = vmatprep.subr.bf16.mxu0 0
          %2580 = vmatpush1.bf16.msra.mxu0 %v879
          %2581 = vmatprep.subr.bf16.mxu0 0
          %2582 = vmatpush1.bf16.msra.mxu0 %v880
          %2583 = vmatprep.subr.bf16.mxu0 0
          %2584 = vmatpush1.bf16.msra.mxu0 0
          %2585 = vmatprep.subr.bf16.mxu0 0
          %2586 = vmatpush1.bf16.msra.mxu0 0
          %2587 = vmatprep.subr.bf16.mxu0 0
          %2588 = vmatpush1.bf16.msra.mxu0 0
          %2589 = vmatprep.subr.bf16.mxu0 0
          %2590 = vmatpush1.bf16.msra.mxu0 0
          %2591 = vmatprep.subr.bf16.mxu0 0
          %2592 = vmatpush1.bf16.msra.mxu0 0
          %2593 = vmatprep.subr.bf16.mxu0 0
          %2594 = vmatpush1.bf16.msra.mxu0 0
          %2595 = vmatprep.subr.bf16.mxu0 0
          %2596 = vmatpush1.bf16.msra.mxu0 0
          %2597 = vmatprep.subr.bf16.mxu0 0
          %2598 = vmatpush1.bf16.msra.mxu0 0
          %2599 = vmatprep.mubr.bf16.mxu0 0
          %2600 = vmatmul.mubr.bf16.gmra.mrb[0].mxu0 %v2551
          %v2601 = vpop.f32.mrb[0].mxu0
          %v2602 = vadd.f32 0.0, %v2601
          %v2603 = vpop.f32.mrb[0].mxu0
          %v2604 = vpop.f32.mrb[0].mxu0
          %v2605 = vadd.f32 0.0, %v2604
          %v2606 = vpop.f32.mrb[0].mxu0
          %2607 = vmatprep.mubr.bf16.mxu0 0
          %2608 = vmatmul.mubr.bf16.gmra.mrb[0].mxu0 %v2552
          %v2609 = vpop.f32.mrb[0].mxu0
          %v2610 = vadd.f32 0.0, %v2609
          %v2611 = vpop.f32.mrb[0].mxu0
          %v2612 = vpop.f32.mrb[0].mxu0
          %v2613 = vadd.f32 0.0, %v2612
          %v2614 = vpop.f32.mrb[0].mxu0
          %2615 = vmatprep.mubr.bf16.mxu0 0
          %2616 = vmatmul.mubr.bf16.gmra.mrb[0].mxu0 %v2553
          %v2617 = vpop.f32.mrb[0].mxu0
          %v2618 = vadd.f32 0.0, %v2617
          %v2619 = vpop.f32.mrb[0].mxu0
          %v2620 = vpop.f32.mrb[0].mxu0
          %v2621 = vadd.f32 0.0, %v2620
          %v2622 = vpop.f32.mrb[0].mxu0
          %2623 = vmatprep.mubr.bf16.mxu0 0
          %2624 = vmatmul.mubr.bf16.gmra.mrb[0].mxu0 %v2554
          %v2625 = vpop.f32.mrb[0].mxu0
          %v2626 = vadd.f32 0.0, %v2625
          %v2627 = vpop.f32.mrb[0].mxu0
          %v2628 = vpop.f32.mrb[0].mxu0
          %v2629 = vadd.f32 0.0, %v2628
          %v2630 = vpop.f32.mrb[0].mxu0
          %2631 = vmatprep.mubr.bf16.mxu0 0
          %2632 = vmatmul.mubr.bf16.gmra.mrb[0].mxu0 %v2555
          %v2633 = vpop.f32.mrb[0].mxu0
          %v2634 = vadd.f32 0.0, %v2633
          %v2635 = vpop.f32.mrb[0].mxu0
          %v2636 = vpop.f32.mrb[0].mxu0
          %v2637 = vadd.f32 0.0, %v2636
          %v2638 = vpop.f32.mrb[0].mxu0
          %2639 = vmatprep.mubr.bf16.mxu0 0
          %2640 = vmatmul.mubr.bf16.gmra.mrb[0].mxu0 %v2556
          %v2641 = vpop.f32.mrb[0].mxu0
          %v2642 = vadd.f32 0.0, %v2641
          %v2643 = vpop.f32.mrb[0].mxu0
          %v2644 = vpop.f32.mrb[0].mxu0
          %v2645 = vadd.f32 0.0, %v2644
          %v2646 = vpop.f32.mrb[0].mxu0
          %2647 = vmatprep.mubr.bf16.mxu0 0
          %2648 = vmatmul.mubr.bf16.gmra.mrb[0].mxu0 %v2557
          %v2649 = vpop.f32.mrb[0].mxu0
          %v2650 = vadd.f32 0.0, %v2649
          %v2651 = vpop.f32.mrb[0].mxu0
          %v2652 = vpop.f32.mrb[0].mxu0
          %v2653 = vadd.f32 0.0, %v2652
          %v2654 = vpop.f32.mrb[0].mxu0
          %2655 = vmatprep.mubr.bf16.mxu0 0
          %2656 = vmatmul.mubr.bf16.gmra.mrb[0].mxu0 %v2558
          %v2657 = vpop.f32.mrb[0].mxu0
          %v2658 = vadd.f32 0.0, %v2657
          %v2659 = vpop.f32.mrb[0].mxu0
          %v2660 = vpop.f32.mrb[0].mxu0
          %v2661 = vadd.f32 0.0, %v2660
          %v2662 = vpop.f32.mrb[0].mxu0
          %2663 = vdwg.mxu0
          %v2664 = vpack.c.bf16 %v2605, %v2602
          %v2665 = vpack.c.bf16 %v2613, %v2610
          %v2666 = vpack.c.bf16 %v2621, %v2618
          %v2667 = vpack.c.bf16 %v2629, %v2626
          %v2668 = vpack.c.bf16 %v2637, %v2634
          %v2669 = vpack.c.bf16 %v2645, %v2642
          %v2670 = vpack.c.bf16 %v2653, %v2650
          %v2671 = vpack.c.bf16 %v2661, %v2658
          %2680 = vrot.lane.b32.xlu0 %v2664, 56
          %v2681 = vpop.permute.xlu0 %2680
          %2682 = vrot.lane.b32.xlu0 %v2665, 56
          %v2683 = vpop.permute.xlu0 %2682
          %2684 = vrot.lane.b32.xlu0 %v2666, 56
          %v2685 = vpop.permute.xlu0 %2684
          %2686 = vrot.lane.b32.xlu0 %v2667, 56
          %v2687 = vpop.permute.xlu0 %2686
          %2688 = vrot.lane.b32.xlu0 %v2668, 56
          %v2689 = vpop.permute.xlu0 %2688
          %2690 = vrot.lane.b32.xlu0 %v2669, 56
          %v2691 = vpop.permute.xlu0 %2690
          %2692 = vrot.lane.b32.xlu0 %v2670, 56
          %v2693 = vpop.permute.xlu0 %2692
          %2694 = vrot.lane.b32.xlu0 %v2671, 56
          %v2695 = vpop.permute.xlu0 %2694
          %vm2704 = vcmask 523712
          %2705 = vst.msk [vmem:[#allocation3] sm:$0xff] %vm2704, %v2681
          %2706 = vst.msk [vmem:[#allocation3 + $0x8] sm:$0xff] %vm2704, %v2683
          %2707 = vst.msk [vmem:[#allocation3 + $0x10] sm:$0xff] %vm2704, %v2685
          %2708 = vst.msk [vmem:[#allocation3 + $0x18] sm:$0xff] %vm2704, %v2687
          %2709 = vst.msk [vmem:[#allocation3 + $0x20] sm:$0xff] %vm2704, %v2689
          %2710 = vst.msk [vmem:[#allocation3 + $0x28] sm:$0xff] %vm2704, %v2691
          %2711 = vst.msk [vmem:[#allocation3 + $0x30] sm:$0xff] %vm2704, %v2693
          %2712 = vst.msk [vmem:[#allocation3 + $0x38] sm:$0xff] %vm2704, %v2695
        $region112: #{tpu_custom_call.1} parent=71 // pred_fallthru
          _
        %v2713 = vld [vmem:[%s561] sm:$0xf]
        %v2714 = vld [vmem:[#allocation9] sm:$0xf]
        %v2715 = vld [vmem:[#allocation9 + $0x4] sm:$0xf]
        %v2716 = vld [vmem:[#allocation9 + $0x8] sm:$0xf]
        %v2717 = vld [vmem:[#allocation9 + $0xc] sm:$0xf]
        %v2718 = vld [vmem:[#allocation10] sm:$0x1]
        %v2720 = vlaneseq
        %v2721 = vshrl.u32 %v2720, 7
        %v2722 = vsub.s32 0, %v2721
        %v2723 = vrot.slane %v2718, %v2722
        %v2729 = vunpack.c.l.b16 %v2714
        %v2730 = vunpack.c.l.b16 %v2715
        %v2731 = vunpack.c.l.b16 %v2716
        %v2732 = vunpack.c.l.b16 %v2717
        %v2733 = vpack.c.b16 %v2730, %v2729
        %v2734 = vpack.c.b16 %v2732, %v2731
        %vm2737 = vcmask 261120
        %v2739 = vsel %vm2737, %v2713, 0
        %2741 = vmatprep.subr.bf16.mxu0 0
        %2742 = vmatpush1.bf16.msra.mxu0 %v2733
        %2743 = vmatprep.subr.bf16.mxu0 0
        %2744 = vmatpush1.bf16.msra.mxu0 %v2734
        %2745 = vmatprep.subr.bf16.mxu0 0
        %2746 = vmatpush1.bf16.msra.mxu0 0
        %2747 = vmatprep.subr.bf16.mxu0 0
        %2748 = vmatpush1.bf16.msra.mxu0 0
        %2749 = vmatprep.subr.bf16.mxu0 0
        %2750 = vmatpush1.bf16.msra.mxu0 0
        %2751 = vmatprep.subr.bf16.mxu0 0
        %2752 = vmatpush1.bf16.msra.mxu0 0
        %2753 = vmatprep.subr.bf16.mxu0 0
        %2754 = vmatpush1.bf16.msra.mxu0 0
        %2755 = vmatprep.subr.bf16.mxu0 0
        %2756 = vmatpush1.bf16.msra.mxu0 0
        %2757 = vmatprep.subr.bf16.mxu0 0
        %2758 = vmatpush1.bf16.msra.mxu0 0
        %2759 = vmatprep.subr.bf16.mxu0 0
        %2760 = vmatpush1.bf16.msra.mxu0 0
        %2761 = vmatprep.subr.bf16.mxu0 0
        %2762 = vmatpush1.bf16.msra.mxu0 0
        %2763 = vmatprep.subr.bf16.mxu0 0
        %2764 = vmatpush1.bf16.msra.mxu0 0
        %2765 = vmatprep.subr.bf16.mxu0 0
        %2766 = vmatpush1.bf16.msra.mxu0 0
        %2767 = vmatprep.subr.bf16.mxu0 0
        %2768 = vmatpush1.bf16.msra.mxu0 0
        %2769 = vmatprep.subr.bf16.mxu0 0
        %2770 = vmatpush1.bf16.msra.mxu0 0
        %2771 = vmatprep.subr.bf16.mxu0 0
        %2772 = vmatpush1.bf16.msra.mxu0 0
        %2773 = vmatprep.mubr.bf16.mxu0 0
        %2774 = vmatmul.mubr.bf16.gmra.mrb[0].mxu0 %v2739
        %v2775 = vpop.f32.mrb[0].mxu0
        %v2776 = vadd.f32 %v2723, %v2775
        %v2777 = vpop.f32.mrb[0].mxu0
        %v2778 = vpop.f32.mrb[0].mxu0
        %v2779 = vpop.f32.mrb[0].mxu0
        %2780 = vdwg.mxu0
        %vm2781 = vcmp.gt.f32.partialorder %v2776, 0.0
        %v2782 = vmul.f32 %v2776, 0.1
        %v2783 = vsel %vm2781, %v2776, %v2782
        %v2784 = vpack.c.bf16 %v2783, %v2783
        %v2785 = vld [vmem:[#allocation13] sm:$0xf]
        %v2786 = vld [vmem:[#allocation13 + $0x4] sm:$0xf]
        %v2787 = vld [vmem:[#allocation13 + $0x8] sm:$0xf]
        %v2788 = vld [vmem:[#allocation13 + $0xc] sm:$0xf]
        %v2789 = vld [vmem:[#allocation15] sm:$0x1]
        %v2791 = vlaneseq
        %v2792 = vshrl.u32 %v2791, 7
        %v2793 = vsub.s32 0, %v2792
        %v2794 = vrot.slane %v2789, %v2793
        %v2800 = vunpack.c.l.b16 %v2785
        %v2801 = vunpack.c.l.b16 %v2786
        %v2802 = vunpack.c.l.b16 %v2787
        %v2803 = vunpack.c.l.b16 %v2788
        %v2804 = vpack.c.b16 %v2801, %v2800
        %v2805 = vpack.c.b16 %v2803, %v2802
        %2808 = vmatprep.subr.bf16.mxu0 0
        %2809 = vmatpush1.bf16.msra.mxu0 %v2804
        %2810 = vmatprep.subr.bf16.mxu0 0
        %2811 = vmatpush1.bf16.msra.mxu0 %v2805
        %2812 = vmatprep.subr.bf16.mxu0 0
        %2813 = vmatpush1.bf16.msra.mxu0 0
        %2814 = vmatprep.subr.bf16.mxu0 0
        %2815 = vmatpush1.bf16.msra.mxu0 0
        %2816 = vmatprep.subr.bf16.mxu0 0
        %2817 = vmatpush1.bf16.msra.mxu0 0
        %2818 = vmatprep.subr.bf16.mxu0 0
        %2819 = vmatpush1.bf16.msra.mxu0 0
        %2820 = vmatprep.subr.bf16.mxu0 0
        %2821 = vmatpush1.bf16.msra.mxu0 0
        %2822 = vmatprep.subr.bf16.mxu0 0
        %2823 = vmatpush1.bf16.msra.mxu0 0
        %2824 = vmatprep.subr.bf16.mxu0 0
        %2825 = vmatpush1.bf16.msra.mxu0 0
        %2826 = vmatprep.subr.bf16.mxu0 0
        %2827 = vmatpush1.bf16.msra.mxu0 0
        %2828 = vmatprep.subr.bf16.mxu0 0
        %2829 = vmatpush1.bf16.msra.mxu0 0
        %2830 = vmatprep.subr.bf16.mxu0 0
        %2831 = vmatpush1.bf16.msra.mxu0 0
        %2832 = vmatprep.subr.bf16.mxu0 0
        %2833 = vmatpush1.bf16.msra.mxu0 0
        %2834 = vmatprep.subr.bf16.mxu0 0
        %2835 = vmatpush1.bf16.msra.mxu0 0
        %2836 = vmatprep.subr.bf16.mxu0 0
        %2837 = vmatpush1.bf16.msra.mxu0 0
        %2838 = vmatprep.subr.bf16.mxu0 0
        %2839 = vmatpush1.bf16.msra.mxu0 0
        %2840 = vmatprep.mubr.bf16.mxu0 0
        %2841 = vmatmul.mubr.bf16.gmra.mrb[0].mxu0 %v2739
        %v2842 = vpop.f32.mrb[0].mxu0
        %v2843 = vadd.f32 %v2794, %v2842
        %v2844 = vpop.f32.mrb[0].mxu0
        %v2845 = vpop.f32.mrb[0].mxu0
        %v2846 = vpop.f32.mrb[0].mxu0
        %2847 = vdwg.mxu0
        %vm2848 = vcmp.gt.f32.partialorder %v2843, 0.0
        %v2849 = vmul.f32 %v2843, 0.1
        %v2850 = vsel %vm2848, %v2843, %v2849
        %v2851 = vpack.c.bf16 %v2850, %v2850
        %v2852 = vld [vmem:[#allocation2] sm:$0xff]
        %v2853 = vld [vmem:[#allocation2 + $0x8] sm:$0xff]
        %v2854 = vld [vmem:[#allocation2 + $0x10] sm:$0xff]
        %v2855 = vld [vmem:[#allocation2 + $0x18] sm:$0xff]
        %v2856 = vld [vmem:[#allocation2 + $0x20] sm:$0xff]
        %v2857 = vld [vmem:[#allocation2 + $0x28] sm:$0xff]
        %v2858 = vld [vmem:[#allocation2 + $0x30] sm:$0xff]
        %v2859 = vld [vmem:[#allocation2 + $0x38] sm:$0xff]
        %2860 = vmatprep.subr.bf16.mxu0 0
        %2861 = vmatpush1.bf16.msra.mxu0 %v2852
        %2862 = vmatprep.subr.bf16.mxu0 0
        %2863 = vmatpush1.bf16.msra.mxu0 %v2853
        %2864 = vmatprep.subr.bf16.mxu0 0
        %2865 = vmatpush1.bf16.msra.mxu0 %v2854
        %2866 = vmatprep.subr.bf16.mxu0 0
        %2867 = vmatpush1.bf16.msra.mxu0 %v2855
        %2868 = vmatprep.subr.bf16.mxu0 0
        %2869 = vmatpush1.bf16.msra.mxu0 %v2856
        %2870 = vmatprep.subr.bf16.mxu0 0
        %2871 = vmatpush1.bf16.msra.mxu0 %v2857
        %2872 = vmatprep.subr.bf16.mxu0 0
        %2873 = vmatpush1.bf16.msra.mxu0 %v2858
        %2874 = vmatprep.subr.bf16.mxu0 0
        %2875 = vmatpush1.bf16.msra.mxu0 %v2859
        %2876 = vmatprep.subr.bf16.mxu0 0
        %2877 = vmatpush1.bf16.msra.mxu0 0
        %2878 = vmatprep.subr.bf16.mxu0 0
        %2879 = vmatpush1.bf16.msra.mxu0 0
        %2880 = vmatprep.subr.bf16.mxu0 0
        %2881 = vmatpush1.bf16.msra.mxu0 0
        %2882 = vmatprep.subr.bf16.mxu0 0
        %2883 = vmatpush1.bf16.msra.mxu0 0
        %2884 = vmatprep.subr.bf16.mxu0 0
        %2885 = vmatpush1.bf16.msra.mxu0 0
        %2886 = vmatprep.subr.bf16.mxu0 0
        %2887 = vmatpush1.bf16.msra.mxu0 0
        %2888 = vmatprep.subr.bf16.mxu0 0
        %2889 = vmatpush1.bf16.msra.mxu0 0
        %2890 = vmatprep.subr.bf16.mxu0 0
        %2891 = vmatpush1.bf16.msra.mxu0 0
        %2892 = vmatprep.mubr.bf16.mxu0 0
        %2893 = vmatmul.mubr.bf16.gmra.mrb[0].mxu0 %v2784
        %v2894 = vpop.f32.mrb[0].mxu0
        %v2895 = vadd.f32 0.0, %v2894
        %v2896 = vpop.f32.mrb[0].mxu0
        %v2897 = vpop.f32.mrb[0].mxu0
        %v2898 = vpop.f32.mrb[0].mxu0
        %2899 = vdwg.mxu0
        %v2900 = vld [vmem:[%s658] sm:$0x1]
        %vm2901 = vcmp.gt.f32.partialorder %v2900, 0.0
        %v2902 = vsel %vm2901, 1, 0
        %v2903 = vlaneseq
        %v2904 = vshrl.u32 %v2903, 7
        %v2905 = vsub.s32 0, %v2904
        %v2906 = vrot.slane %v2902, %v2905
        %vm2907 = vcmp.eq.s32.totalorder %v2906, 1
        %v2908 = vsel %vm2907, %v2895, -inf
        %vm2909 = vcmask 64512
        %2910 = vst.msk [vmem:[%s648] sm:$0xff] %vm2909, %v2908
        %v2911 = vld [vmem:[#allocation3] sm:$0xff]
        %v2912 = vld [vmem:[#allocation3 + $0x8] sm:$0xff]
        %v2913 = vld [vmem:[#allocation3 + $0x10] sm:$0xff]
        %v2914 = vld [vmem:[#allocation3 + $0x18] sm:$0xff]
        %v2915 = vld [vmem:[#allocation3 + $0x20] sm:$0xff]
        %v2916 = vld [vmem:[#allocation3 + $0x28] sm:$0xff]
        %v2917 = vld [vmem:[#allocation3 + $0x30] sm:$0xff]
        %v2918 = vld [vmem:[#allocation3 + $0x38] sm:$0xff]
        %2919 = vmatprep.subr.bf16.mxu0 0
        %2920 = vmatpush1.bf16.msra.mxu0 %v2911
        %2921 = vmatprep.subr.bf16.mxu0 0
        %2922 = vmatpush1.bf16.msra.mxu0 %v2912
        %2923 = vmatprep.subr.bf16.mxu0 0
        %2924 = vmatpush1.bf16.msra.mxu0 %v2913
        %2925 = vmatprep.subr.bf16.mxu0 0
        %2926 = vmatpush1.bf16.msra.mxu0 %v2914
        %2927 = vmatprep.subr.bf16.mxu0 0
        %2928 = vmatpush1.bf16.msra.mxu0 %v2915
        %2929 = vmatprep.subr.bf16.mxu0 0
        %2930 = vmatpush1.bf16.msra.mxu0 %v2916
        %2931 = vmatprep.subr.bf16.mxu0 0
        %2932 = vmatpush1.bf16.msra.mxu0 %v2917
        %2933 = vmatprep.subr.bf16.mxu0 0
        %2934 = vmatpush1.bf16.msra.mxu0 %v2918
        %2935 = vmatprep.subr.bf16.mxu0 0
        %2936 = vmatpush1.bf16.msra.mxu0 0
        %2937 = vmatprep.subr.bf16.mxu0 0
        %2938 = vmatpush1.bf16.msra.mxu0 0
        %2939 = vmatprep.subr.bf16.mxu0 0
        %2940 = vmatpush1.bf16.msra.mxu0 0
        %2941 = vmatprep.subr.bf16.mxu0 0
        %2942 = vmatpush1.bf16.msra.mxu0 0
        %2943 = vmatprep.subr.bf16.mxu0 0
        %2944 = vmatpush1.bf16.msra.mxu0 0
        %2945 = vmatprep.subr.bf16.mxu0 0
        %2946 = vmatpush1.bf16.msra.mxu0 0
        %2947 = vmatprep.subr.bf16.mxu0 0
        %2948 = vmatpush1.bf16.msra.mxu0 0
        %2949 = vmatprep.subr.bf16.mxu0 0
        %2950 = vmatpush1.bf16.msra.mxu0 0
        %2951 = vmatprep.mubr.bf16.mxu0 0
        %2952 = vmatmul.mubr.bf16.gmra.mrb[0].mxu0 %v2851
        %v2953 = vpop.f32.mrb[0].mxu0
        %v2954 = vadd.f32 0.0, %v2953
        %v2955 = vpop.f32.mrb[0].mxu0
        %v2956 = vpop.f32.mrb[0].mxu0
        %v2957 = vpop.f32.mrb[0].mxu0
        %2958 = vdwg.mxu0
        %vm2959 = vcmask 523264
        %2960 = vst.msk [vmem:[%s655] sm:$0xff] %vm2959, %v2954
        %s2961 = sand.u32 %s353, 1
        %s2962 = scalar_lea.sflag [#allocation6], %s2961
        %s2963 = sand.u32 %s353, 1
        %s2964 = smul.addr %s2963, 8
        %s2965 = scalar_lea.vmem [#allocation19], %s2964
        %s2966 = sand.u32 %s381, 1
        %s2967 = scalar_lea.sflag [#allocation21], %s2966
        %s2968 = sand.u32 %s381, 1
        %s2969 = smul.addr %s2968, 8
        %s2970 = scalar_lea.vmem [#allocation20], %s2969
        // Predicated region
        $region113: #{tpu_custom_call.1} parent=71 // pred_check
          %p2971 = pneg %p363
        $region114: #{tpu_custom_call.1} parent=71 // pred_check_branch
          %2973 = sbr.rel (%p2971) target = $region116
        $region115: #{tpu_custom_call.1} parent=71 // pred_region
          %s2975 = ssub.s32 128, 128
          %2976 = vsyncadd %s2962, %s2975
          %s2977 = sadd.s32 %s46, %s45
          %s2978 = smul.addr %s2977, 128
          %s2979 = scalar_lea.hbm %s13, %s2978
          %s2981 = sshll.u32 %s2965, 4
          %s2982 = int_to_ptr.vmem [resolvable:$true] %s2981
          %2984 = dma.vmem_to_hbm [thread:$0]  %s2982, 128, %s2979, %s2962
        $region116: #{tpu_custom_call.1} parent=71 // pred_fallthru
          _
        // Predicated region
        $region117: #{tpu_custom_call.1} parent=71 // pred_check
          %p2985 = pneg %p391
        $region118: #{tpu_custom_call.1} parent=71 // pred_check_branch
          %2987 = sbr.rel (%p2985) target = $region120
        $region119: #{tpu_custom_call.1} parent=71 // pred_region
          %s2989 = ssub.s32 128, 128
          %2990 = vsyncadd %s2967, %s2989
          %s2991 = sadd.s32 %s46, %s45
          %s2992 = smul.addr %s2991, 128
          %s2993 = scalar_lea.hbm %s14, %s2992
          %s2995 = sshll.u32 %s2970, 4
          %s2996 = int_to_ptr.vmem [resolvable:$true] %s2995
          %2998 = dma.vmem_to_hbm [thread:$0]  %s2996, 128, %s2993, %s2967
        $region120: #{tpu_custom_call.1} parent=71 // pred_fallthru
          _
      $region72: #{tpu_custom_call.1} parent=5 // pred_fallthru
        _
      %p2999 = scmp.le.s32.totalorder 2, %s36
      // Predicated region
      $region121: #{tpu_custom_call.1} parent=5 // pred_check
        %p3000 = pneg %p2999
      $region122: #{tpu_custom_call.1} parent=5 // pred_check_branch
        %3002 = sbr.rel (%p3000) target = $region124
      $region123: #{tpu_custom_call.1} parent=5 // pred_region
        %s3003 = ssub.s32 %s36, 2
        // Predicated region
        $region125: #{tpu_custom_call.1} parent=123 // pred_check
          %p3004 = pneg %p369
        $region126: #{tpu_custom_call.1} parent=123 // pred_check_branch
          %3006 = sbr.rel (%p3004) target = $region128
        $region127: #{tpu_custom_call.1} parent=123 // pred_region
          %s3007 = sand.u32 %s354, 1
          %s3008 = scalar_lea.sflag [#allocation6], %s3007
          %s3009 = sand.u32 %s354, 1
          %s3010 = smul.addr %s3009, 8
          %s3011 = scalar_lea.vmem [#allocation19], %s3010
          %3012 = dma.done %s3008, 128
        $region128: #{tpu_custom_call.1} parent=123 // pred_fallthru
          _
        // Predicated region
        $region129: #{tpu_custom_call.1} parent=123 // pred_check
          %p3013 = pneg %p397
        $region130: #{tpu_custom_call.1} parent=123 // pred_check_branch
          %3015 = sbr.rel (%p3013) target = $region132
        $region131: #{tpu_custom_call.1} parent=123 // pred_region
          %s3016 = sand.u32 %s382, 1
          %s3017 = scalar_lea.sflag [#allocation21], %s3016
          %s3018 = sand.u32 %s382, 1
          %s3019 = smul.addr %s3018, 8
          %s3020 = scalar_lea.vmem [#allocation20], %s3019
          %3021 = dma.done %s3017, 128
        $region132: #{tpu_custom_call.1} parent=123 // pred_fallthru
          _
      $region124: #{tpu_custom_call.1} parent=5 // pred_fallthru
        _
    $region6: #{tpu_custom_call.1} parent=1 // loop_footer
      %s40 = sadd.s32 1, %s36
    $region7: #{tpu_custom_call.1} parent=1 // loop_footer_branch
      %35 = sbr.rel target = $region3
    $region8: #{tpu_custom_call.1} parent=1 // loop_exit
      _
    %3022 = vsyncpa [#allocation5], 1
    %s3023 = scalar_lea.sflag [#allocation5], 1
    %3024 = vsyncpa %s3023, 1
    %3025 = vsyncpa [#allocation8], 1
    %s3026 = scalar_lea.sflag [#allocation8], 1
    %3027 = vsyncpa %s3026, 1
    %3028 = vsyncpa [#allocation11], 1
    %3029 = vsyncpa [#allocation14], 1
    %3030 = vsyncpa [#allocation17], 1
    %3031 = vsyncpa [#allocation6], 1
    %s3032 = scalar_lea.sflag [#allocation6], 1
    %3033 = vsyncpa %s3032, 1
    %3034 = vsyncpa [#allocation21], 1
    %s3035 = scalar_lea.sflag [#allocation21], 1
    %3036 = vsyncpa %s3035, 1

</llo_original>
